<compile_context>
chip_gen: v5e
topology: v5e:2x2
jax: 0.10.0
libtpu: 0.0.40
codegen_flags: <defaults>
</compile_context>

<pallas_src>
import functools
import numpy as np

import jax
import jax.numpy as jnp
from jax.experimental import pallas as pl
from jax.experimental.pallas import tpu as pltpu

# ---- hyperparameters (stand-ins for pytorch_disco `hyp`) -------------------
FEAT3D_DIM = 32             # hyp.feat3d_dim
FEAT3D_SMOOTH_COEFF = 0.01  # hyp.feat3d_smooth_coeff
CHANS = 32                  # encoder3D.Net3D_NOBN default `chans`
LEAKY_SLOPE = 0.01          # nn.LeakyReLU() default negative_slope

VMEM_LIMIT = 32 * 1024 * 1024   # safe scoped-VMEM limit on v5e/v6e/v7x


def _round_up(x, m):
    return ((x + m - 1) // m) * m


# ----------------------------- Pallas kernels -------------------------------
def _matmul_bias_kernel(x_ref, w_ref, b_ref, o_ref, acc_ref, *, negative_slope):
    """K-tiled (im2col patches @ weight) on the MXU with an f32 VMEM
    accumulator; bias (+ LeakyReLU) fused at the K-finalize step."""
    @pl.when(pl.program_id(1) == 0)
    def _():
        acc_ref[...] = jnp.zeros_like(acc_ref)

    acc_ref[...] += jnp.dot(x_ref[...], w_ref[...],
                            preferred_element_type=jnp.float32)

    @pl.when(pl.program_id(1) == pl.num_programs(1) - 1)
    def _():
        acc = acc_ref[...] + b_ref[...]
        if negative_slope is not None:
            acc = jnp.where(acc >= 0.0, acc, negative_slope * acc)
        o_ref[...] = acc.astype(o_ref.dtype)


def pallas_matmul_bias(x, w, b, negative_slope=None, out_dtype=jnp.bfloat16):
    """(M,K) @ (K,N) + b, M/K tiled, bf16 MXU operands, f32 accumulation."""
    M, K = x.shape
    K2, N = w.shape
    assert K == K2 and N <= 512

    tm = min(512, _round_up(M, 8))      # M tile, multiple of 8 sublanes
    kp = _round_up(K, 128)              # K padded to 128 lanes
    tk = min(512, kp)                   # K tile, multiple of 128
    Mp = _round_up(M, tm)
    Kp = _round_up(kp, tk)

    x = x.astype(jnp.bfloat16)
    w = w.astype(jnp.bfloat16)
    if (Mp, Kp) != (M, K):
        x = jnp.pad(x, ((0, Mp - M), (0, Kp - K)))
    if Kp != K:
        w = jnp.pad(w, ((0, Kp - K), (0, 0)))

    kern = functools.partial(_matmul_bias_kernel, negative_slope=negative_slope)
    out = pl.pallas_call(
        kern,
        out_shape=jax.ShapeDtypeStruct((Mp, N), out_dtype),
        grid=(Mp // tm, Kp // tk),
        in_specs=[pl.BlockSpec((tm, tk), lambda i, k: (i, k)),
                  pl.BlockSpec((tk, N), lambda i, k: (k, 0)),   # weight resident over M
                  pl.BlockSpec((1, N), lambda i, k: (0, 0))],   # bias
        out_specs=pl.BlockSpec((tm, N), lambda i, k: (i, 0)),
        scratch_shapes=[pltpu.VMEM((tm, N), jnp.float32)],
        compiler_params=pltpu.CompilerParams(
            dimension_semantics=("parallel", "arbitrary"),
            vmem_limit_bytes=VMEM_LIMIT),
    )(x, w, b.reshape(1, N).astype(jnp.float32))
    if Mp != M:
        out = out[:M]
    return out


def _smooth_l2norm_kernel(x_ref, halo_ref, o_ref, ssum_ref, *, dblk):
    """gradient3d(absolute=True) partial sums + channel-wise L2 normalize.

    Tiled over (B, D-blocks).  The dz term across the block boundary uses the
    one-plane halo input (masked out on the last D block, where gradient3d
    zero-pads), so every valid diff is counted exactly once."""
    b = pl.program_id(0)
    di = pl.program_id(1)
    x = x_ref[...]              # (1, dblk, H, W, C) float32
    halo = halo_ref[...]        # (1, 1,    H, W, C) float32

    s = jnp.float32(0.0)
    if dblk > 1:
        s = s + jnp.sum(jnp.abs(x[:, 1:] - x[:, :-1]))              # dz (intra)
    s = s + jnp.sum(jnp.abs(x[:, :, 1:] - x[:, :, :-1]))            # dy
    s = s + jnp.sum(jnp.abs(x[:, :, :, 1:] - x[:, :, :, :-1]))      # dx
    not_last = (di != pl.num_programs(1) - 1).astype(jnp.float32)
    s = s + not_last * jnp.sum(jnp.abs(halo[:, 0] - x[:, -1]))      # dz (cross)

    @pl.when((b == 0) & (di == 0))
    def _():
        ssum_ref[0, 0] = jnp.float32(0.0)
    ssum_ref[0, 0] = ssum_ref[0, 0] + s

    # l2_normalize over channel dim (torch.nn.functional.normalize, eps=1e-12)
    norm = jnp.sqrt(jnp.sum(x * x, axis=-1, keepdims=True))
    o_ref[...] = x / jnp.maximum(norm, 1e-12)


def pallas_smooth_and_l2norm(x, coeff):
    B, D, H, W, C = x.shape
    # largest divisor of D that is <= 8 -> D-block size
    dblk = max(d for d in range(1, min(D, 8) + 1) if D % d == 0)
    nD = D // dblk
    kern = functools.partial(_smooth_l2norm_kernel, dblk=dblk)
    feat_n, ssum = pl.pallas_call(
        kern,
        out_shape=(jax.ShapeDtypeStruct((B, D, H, W, C), jnp.float32),
                   jax.ShapeDtypeStruct((1, 1), jnp.float32)),
        grid=(B, nD),
        in_specs=[
            pl.BlockSpec((1, dblk, H, W, C),
                         lambda b, di: (b, di, 0, 0, 0)),
            # one-plane halo: first plane of the next D block (clamped in
            # bounds for the last block, whose contribution is masked).
            pl.BlockSpec((1, 1, H, W, C),
                         lambda b, di: (b, jnp.minimum((di + 1) * dblk, D - 1),
                                        0, 0, 0)),
        ],
        out_specs=(pl.BlockSpec((1, dblk, H, W, C),
                                lambda b, di: (b, di, 0, 0, 0)),
                   pl.BlockSpec((1, 1), lambda b, di: (0, 0),
                                memory_space=pltpu.MemorySpace.SMEM)),
        compiler_params=pltpu.CompilerParams(
            dimension_semantics=("arbitrary", "arbitrary"),
            vmem_limit_bytes=VMEM_LIMIT),
    )(x, x)
    # gradient3d zero-pads the trailing slice along each axis, so mean over the
    # full (B,C,D,H,W) volume == sum(|valid diffs|) / total element count.
    denom = float(B * C * D * H * W)
    total_loss = coeff * ssum[0, 0] / denom     # add_loss(total=0, loss, coeff)
    return feat_n, total_loss


# ------------------------------ glue (JAX) -----------------------------------
def _im2col_3d(x, k, stride):
    """x: (B, Dp, Hp, Wp, C) already padded -> (B*Do*Ho*Wo, k^3*C)."""
    # TODO(synk): assemble patches inside the Pallas kernel (DMA a padded x
    # tile) instead of materializing the k^3-expanded matrix in HBM via XLA.
    B, Dp, Hp, Wp, C = x.shape
    Do = (Dp - k) // stride + 1
    Ho = (Hp - k) // stride + 1
    Wo = (Wp - k) // stride + 1
    cols = []
    for kz in range(k):
        for ky in range(k):
            for kx in range(k):
                cols.append(x[:, kz:kz + stride * Do:stride,
                              ky:ky + stride * Ho:stride,
                              kx:kx + stride * Wo:stride, :])
    p = jnp.stack(cols, axis=4)                      # (B, Do, Ho, Wo, k^3, C)
    return p.reshape(B * Do * Ho * Wo, k * k * k * C), (B, Do, Ho, Wo)


def conv3d(x, w_mat, b, k, stride, pad, negative_slope, out_dtype=jnp.bfloat16):
    if pad > 0:
        x = jnp.pad(x, ((0, 0), (pad, pad), (pad, pad), (pad, pad), (0, 0)))
    patches, (B, Do, Ho, Wo) = _im2col_3d(x, k, stride)
    out = pallas_matmul_bias(patches, w_mat, b, negative_slope, out_dtype)
    return out.reshape(B, Do, Ho, Wo, -1)


def conv_transpose3d_subpixel(x, w_phases, b, negative_slope):
    """ConvTranspose3d(k=4, s=2, p=1) via sub-pixel decomposition: 8 output
    parity phases, each a 2x2x2-tap stride-1 conv on the un-dilated input,
    results interleaved.  Avoids the 87.5%-zeros dilated im2col entirely."""
    B, D, H, W, Cin = x.shape
    cout = w_phases[0].shape[1]
    xp = jnp.pad(x, ((0, 0), (1, 1), (1, 1), (1, 1), (0, 0)))
    outs = []
    idx = 0
    for pz in (0, 1):
        for py in (0, 1):
            for px in (0, 1):
                xs = xp[:, pz:pz + D + 1, py:py + H + 1, px:px + W + 1, :]
                patches, _ = _im2col_3d(xs, k=2, stride=1)       # (B*D*H*W, 8*Cin)
                o = pallas_matmul_bias(patches, w_phases[idx], b,
                                       negative_slope=negative_slope,
                                       out_dtype=jnp.bfloat16)
                outs.append(o.reshape(B, D, H, W, cout))
                idx += 1
    # interleave: out[:, 2q+pz, 2r+py, 2s+px] = outs[(pz,py,px)][:, q, r, s]
    o = jnp.stack(outs, axis=0).reshape(2, 2, 2, B, D, H, W, cout)
    o = jnp.transpose(o, (3, 4, 0, 5, 1, 6, 2, 7))   # (B, D,2, H,2, W,2, C)
    return o.reshape(B, 2 * D, 2 * H, 2 * W, cout)


# --------------------------- parameter init ----------------------------------
def _init_conv3d(key, cin, cout, k):
    fan_in = cin * k * k * k
    bound = 1.0 / np.sqrt(fan_in)
    kw, kb = jax.random.split(key)
    w = jax.random.uniform(kw, (cout, cin, k, k, k), jnp.float32, -bound, bound)
    b = jax.random.uniform(kb, (cout,), jnp.float32, -bound, bound)
    # im2col ordering: row index = ((kz*k + ky)*k + kx)*cin + cin_idx
    w_mat = jnp.transpose(w, (2, 3, 4, 1, 0)).reshape(k * k * k * cin, cout)
    return w_mat, b


def _init_convT3d_subpixel(key, cin, cout, k=4):
    """ConvTranspose3d(k=4,s=2,p=1) weights, pre-sliced into the 8 sub-pixel
    phase matrices.  For output parity p and tap j in {0,1} (per dim), the
    contributing kernel index is 3 - 2*j - p (derived from o = 2*i - 1 + t)."""
    fan_in = cout * k * k * k     # torch fan_in convention for ConvTranspose3d
    bound = 1.0 / np.sqrt(fan_in)
    kw, kb = jax.random.split(key)
    w = jax.random.uniform(kw, (cin, cout, k, k, k), jnp.float32, -bound, bound)
    b = jax.random.uniform(kb, (cout,), jnp.float32, -bound, bound)
    phase_mats = []
    for pz in (0, 1):
        for py in (0, 1):
            for px in (0, 1):
                taps = []
                for jz in (0, 1):
                    for jy in (0, 1):
                        for jx in (0, 1):
                            taps.append(w[:, :, 3 - 2 * jz - pz,
                                          3 - 2 * jy - py,
                                          3 - 2 * jx - px])     # (cin, cout)
                # im2col row order: tap*cin + cin_idx
                phase_mats.append(jnp.stack(taps, axis=0).reshape(8 * cin, cout))
    return phase_mats, b


def init_featnet_params(key, in_dim, pred_dim=FEAT3D_DIM, chans=CHANS):
    down_in = [in_dim, chans, 2 * chans]
    down_out = [chans, 2 * chans, 4 * chans]
    up_in = [4 * chans, 6 * chans]
    up_out = [4 * chans, 2 * chans]
    keys = jax.random.split(key, len(down_in) + len(up_in) + 1)
    params = {"down": [], "up": []}
    ki = 0
    for cin, cout in zip(down_in, down_out):
        params["down"].append(_init_conv3d(keys[ki], cin, cout, 4)); ki += 1
    for cin, cout in zip(up_in, up_out):
        params["up"].append(_init_convT3d_subpixel(keys[ki], cin, cout, 4)); ki += 1
    params["final"] = _init_conv3d(keys[ki], 3 * chans, pred_dim, 1)
    return params


# ------------------------------ forward --------------------------------------
def featnet_forward(params, feat_ncdhw):
    # NCDHW -> channels-last; bf16 activations feed the MXU (f32 accumulation).
    x = jnp.transpose(feat_ncdhw, (0, 2, 3, 4, 1)).astype(jnp.bfloat16)

    # Net3D_NOBN U-Net
    skips = []
    for (w, b) in params["down"]:
        x = conv3d(x, w, b, k=4, stride=2, pad=1, negative_slope=LEAKY_SLOPE)
        skips.append(x)
    skips.pop()  # innermost activation is not used as a skip connection
    for (w_phases, b) in params["up"]:
        x = conv_transpose3d_subpixel(x, w_phases, b, negative_slope=LEAKY_SLOPE)
        # TODO(synk): fuse this skip-concat into the consuming matmul (split
        # the weight along K) to avoid the full-volume HBM round-trip.
        x = jnp.concatenate([x, skips.pop()], axis=-1)
    w, b = params["final"]
    x = conv3d(x, w, b, k=1, stride=1, pad=0, negative_slope=None,
               out_dtype=jnp.float32)

    # smoothness loss + channel-wise l2 normalization (tiled Pallas kernel)
    feat_n, total_loss = pallas_smooth_and_l2norm(x, FEAT3D_SMOOTH_COEFF)

    feat_out = jnp.transpose(feat_n, (0, 4, 1, 2, 3))   # back to NCDHW
    return feat_out, total_loss


if __name__ == "__main__":
    key = jax.random.PRNGKey(0)
    k_in, k_par = jax.random.split(key)

    # small shapes: B=2, C=in_dim=4, D=H=W=8  (output feat: (2, 32, 4, 4, 4))
    B, C, D, H, W = 2, 4, 8, 8, 8
    feat = jax.random.normal(k_in, (B, C, D, H, W), jnp.float32)
    params = init_featnet_params(k_par, in_dim=C)

    fwd = jax.jit(featnet_forward)
    out_feat, total_loss = fwd(params, feat)
    jax.block_until_ready((out_feat, total_loss))

    assert out_feat.shape == (B, FEAT3D_DIM, D // 2, H // 2, W // 2)
    assert total_loss.shape == ()
    print("KERNEL_OK")
</pallas_src>

<mosaic_0001>
module attributes {stable_mosaic.version = 11 : i64} {
  func.func @_matmul_bias_kernel(%arg0: i32, %arg1: i32, %arg2: memref<128x256xbf16, #tpu.memory_space<vmem>>, %arg3: memref<256x32xbf16, #tpu.memory_space<vmem>>, %arg4: memref<1x32xf32, #tpu.memory_space<vmem>>, %arg5: memref<128x32xbf16, #tpu.memory_space<vmem>>, %arg6: memref<128x32xf32, #tpu.memory_space<vmem>>) attributes {dimension_semantics = [#tpu.dimension_semantics<parallel>, #tpu.dimension_semantics<arbitrary>], iteration_bounds = array<i64: 1, 1>, scalar_prefetch = 0 : i64, scratch_operands = 1 : i64, tpu.core_type = #tpu.core_type<tc>, window_params = [{transform_indices = @transform_0, window_bounds = array<i64: 128, 256>}, {transform_indices = @transform_1, window_bounds = array<i64: 256, 32>}, {pipeline_mode = #tpu.pipeline_mode<synchronous>, transform_indices = @transform_2, window_bounds = array<i64: 1, 32>}, {transform_indices = @transform_3, window_bounds = array<i64: 128, 32>}]} {
    %c0_i32 = arith.constant 0 : i32
    %0 = arith.cmpi eq, %arg1, %c0_i32 : i32
    %1 = arith.extui %0 : i1 to i32
    %c0_i32_0 = arith.constant 0 : i32
    %2 = arith.cmpi ne, %1, %c0_i32_0 : i32
    scf.if %2 {
      %cst_10 = arith.constant 0.000000e+00 : f32
      %12 = vector.broadcast %cst_10 : f32 to vector<128x32xf32>
      %c0_11 = arith.constant 0 : index
      %c0_12 = arith.constant 0 : index
      %13 = vector.load %arg6[%c0_11, %c0_12] : memref<128x32xf32, #tpu.memory_space<vmem>>, vector<128x32xf32>
      tpu.vector_store %arg6[%c0_11, %c0_12], %12 {strides = array<i32>} : memref<128x32xf32, #tpu.memory_space<vmem>>, vector<128x32xf32>,
    } else {
    }
    %c0 = arith.constant 0 : index
    %c0_1 = arith.constant 0 : index
    %3 = vector.load %arg6[%c0, %c0_1] : memref<128x32xf32, #tpu.memory_space<vmem>>, vector<128x32xf32>
    %c0_2 = arith.constant 0 : index
    %c0_3 = arith.constant 0 : index
    %4 = vector.load %arg2[%c0_2, %c0_3] : memref<128x256xbf16, #tpu.memory_space<vmem>>, vector<128x256xbf16>
    %c0_4 = arith.constant 0 : index
    %c0_5 = arith.constant 0 : index
    %5 = vector.load %arg3[%c0_4, %c0_5] : memref<256x32xbf16, #tpu.memory_space<vmem>>, vector<256x32xbf16>
    %cst = arith.constant dense<0.000000e+00> : vector<128x32xf32>
    %6 = tpu.matmul %4, %5, %cst {dimension_numbers = #tpu.dot_dimension_numbers<[1], [0], [0], [1], [0, 0, 1, 1], [], []>} : vector<128x256xbf16>, vector<256x32xbf16>, vector<128x32xf32> -> vector<128x32xf32>
    %7 = arith.addf %3, %6 : vector<128x32xf32>
    %c0_6 = arith.constant 0 : index
    %c0_7 = arith.constant 0 : index
    %8 = vector.load %arg6[%c0_6, %c0_7] : memref<128x32xf32, #tpu.memory_space<vmem>>, vector<128x32xf32>
    tpu.vector_store %arg6[%c0_6, %c0_7], %7 {strides = array<i32>} : memref<128x32xf32, #tpu.memory_space<vmem>>, vector<128x32xf32>,
    %c0_i32_8 = arith.constant 0 : i32
    %9 = arith.cmpi eq, %arg1, %c0_i32_8 : i32
    %10 = arith.extui %9 : i1 to i32
    %c0_i32_9 = arith.constant 0 : i32
    %11 = arith.cmpi ne, %10, %c0_i32_9 : i32
    scf.if %11 {
      %c0_10 = arith.constant 0 : index
      %c0_11 = arith.constant 0 : index
      %12 = vector.load %arg6[%c0_10, %c0_11] : memref<128x32xf32, #tpu.memory_space<vmem>>, vector<128x32xf32>
      %c0_12 = arith.constant 0 : index
      %c0_13 = arith.constant 0 : index
      %13 = vector.load %arg4[%c0_12, %c0_13] : memref<1x32xf32, #tpu.memory_space<vmem>>, vector<1x32xf32>
      %14 = vector.broadcast %13 : vector<1x32xf32> to vector<128x32xf32>
      %15 = arith.addf %12, %14 : vector<128x32xf32>
      %cst_14 = arith.constant 0.000000e+00 : f32
      %16 = vector.broadcast %cst_14 : f32 to vector<128x32xf32>
      %17 = arith.cmpf oge, %15, %16 : vector<128x32xf32>
      %cst_15 = arith.constant 0.00999999977 : f32
      %18 = vector.broadcast %cst_15 : f32 to vector<128x32xf32>
      %19 = arith.mulf %18, %15 : vector<128x32xf32>
      %20 = arith.select %17, %15, %19 : vector<128x32xi1>, vector<128x32xf32>
      %21 = arith.truncf %20 : vector<128x32xf32> to vector<128x32xbf16>
      %c0_16 = arith.constant 0 : index
      %c0_17 = arith.constant 0 : index
      %22 = vector.load %arg5[%c0_16, %c0_17] : memref<128x32xbf16, #tpu.memory_space<vmem>>, vector<128x32xbf16>
      tpu.vector_store %arg5[%c0_16, %c0_17], %21 {strides = array<i32>} : memref<128x32xbf16, #tpu.memory_space<vmem>>, vector<128x32xbf16>,
    } else {
    }
    return
  }
  func.func @transform_0(%arg0: i32, %arg1: i32) -> (i32, i32) {
    %c0_i32 = arith.constant 0 : i32
    return %arg0, %arg1 : i32, i32
  }
  func.func @transform_1(%arg0: i32, %arg1: i32) -> (i32, i32) {
    %c0_i32 = arith.constant 0 : i32
    %c0_i32_0 = arith.constant 0 : i32
    return %arg1, %c0_i32 : i32, i32
  }
  func.func @transform_2(%arg0: i32, %arg1: i32) -> (i32, i32) {
    %c0_i32 = arith.constant 0 : i32
    %c0_i32_0 = arith.constant 0 : i32
    %c0_i32_1 = arith.constant 0 : i32
    return %c0_i32, %c0_i32_0 : i32, i32
  }
  func.func @transform_3(%arg0: i32, %arg1: i32) -> (i32, i32) {
    %c0_i32 = arith.constant 0 : i32
    %c0_i32_0 = arith.constant 0 : i32
    return %arg0, %c0_i32 : i32, i32
  }
}

module attributes {stable_mosaic.version = 11 : i64} {
  func.func @_matmul_bias_kernel(%arg0: i32, %arg1: i32, %arg2: memref<16x512xbf16, #tpu.memory_space<vmem>>, %arg3: memref<512x64xbf16, #tpu.memory_space<vmem>>, %arg4: memref<1x64xf32, #tpu.memory_space<vmem>>, %arg5: memref<16x64xbf16, #tpu.memory_space<vmem>>, %arg6: memref<16x64xf32, #tpu.memory_space<vmem>>) attributes {dimension_semantics = [#tpu.dimension_semantics<parallel>, #tpu.dimension_semantics<arbitrary>], iteration_bounds = array<i64: 1, 4>, scalar_prefetch = 0 : i64, scratch_operands = 1 : i64, tpu.core_type = #tpu.core_type<tc>, window_params = [{transform_indices = @transform_0, window_bounds = array<i64: 16, 512>}, {transform_indices = @transform_1, window_bounds = array<i64: 512, 64>}, {pipeline_mode = #tpu.pipeline_mode<synchronous>, transform_indices = @transform_2, window_bounds = array<i64: 1, 64>}, {transform_indices = @transform_3, window_bounds = array<i64: 16, 64>}]} {
    %c0_i32 = arith.constant 0 : i32
    %0 = arith.cmpi eq, %arg1, %c0_i32 : i32
    %1 = arith.extui %0 : i1 to i32
    %c0_i32_0 = arith.constant 0 : i32
    %2 = arith.cmpi ne, %1, %c0_i32_0 : i32
    scf.if %2 {
      %cst_9 = arith.constant 0.000000e+00 : f32
      %12 = vector.broadcast %cst_9 : f32 to vector<16x64xf32>
      %c0_10 = arith.constant 0 : index
      %c0_11 = arith.constant 0 : index
      %13 = vector.load %arg6[%c0_10, %c0_11] : memref<16x64xf32, #tpu.memory_space<vmem>>, vector<16x64xf32>
      tpu.vector_store %arg6[%c0_10, %c0_11], %12 {strides = array<i32>} : memref<16x64xf32, #tpu.memory_space<vmem>>, vector<16x64xf32>,
    } else {
    }
    %c0 = arith.constant 0 : index
    %c0_1 = arith.constant 0 : index
    %3 = vector.load %arg6[%c0, %c0_1] : memref<16x64xf32, #tpu.memory_space<vmem>>, vector<16x64xf32>
    %c0_2 = arith.constant 0 : index
    %c0_3 = arith.constant 0 : index
    %4 = vector.load %arg2[%c0_2, %c0_3] : memref<16x512xbf16, #tpu.memory_space<vmem>>, vector<16x512xbf16>
    %c0_4 = arith.constant 0 : index
    %c0_5 = arith.constant 0 : index
    %5 = vector.load %arg3[%c0_4, %c0_5] : memref<512x64xbf16, #tpu.memory_space<vmem>>, vector<512x64xbf16>
    %cst = arith.constant dense<0.000000e+00> : vector<16x64xf32>
    %6 = tpu.matmul %4, %5, %cst {dimension_numbers = #tpu.dot_dimension_numbers<[1], [0], [0], [1], [0, 0, 1, 1], [], []>} : vector<16x512xbf16>, vector<512x64xbf16>, vector<16x64xf32> -> vector<16x64xf32>
    %7 = arith.addf %3, %6 : vector<16x64xf32>
    %c0_6 = arith.constant 0 : index
    %c0_7 = arith.constant 0 : index
    %8 = vector.load %arg6[%c0_6, %c0_7] : memref<16x64xf32, #tpu.memory_space<vmem>>, vector<16x64xf32>
    tpu.vector_store %arg6[%c0_6, %c0_7], %7 {strides = array<i32>} : memref<16x64xf32, #tpu.memory_space<vmem>>, vector<16x64xf32>,
    %c3_i32 = arith.constant 3 : i32
    %9 = arith.cmpi eq, %arg1, %c3_i32 : i32
    %10 = arith.extui %9 : i1 to i32
    %c0_i32_8 = arith.constant 0 : i32
    %11 = arith.cmpi ne, %10, %c0_i32_8 : i32
    scf.if %11 {
      %c0_9 = arith.constant 0 : index
      %c0_10 = arith.constant 0 : index
      %12 = vector.load %arg6[%c0_9, %c0_10] : memref<16x64xf32, #tpu.memory_space<vmem>>, vector<16x64xf32>
      %c0_11 = arith.constant 0 : index
      %c0_12 = arith.constant 0 : index
      %13 = vector.load %arg4[%c0_11, %c0_12] : memref<1x64xf32, #tpu.memory_space<vmem>>, vector<1x64xf32>
      %14 = vector.broadcast %13 : vector<1x64xf32> to vector<16x64xf32>
      %15 = arith.addf %12, %14 : vector<16x64xf32>
      %cst_13 = arith.constant 0.000000e+00 : f32
      %16 = vector.broadcast %cst_13 : f32 to vector<16x64xf32>
      %17 = arith.cmpf oge, %15, %16 : vector<16x64xf32>
      %cst_14 = arith.constant 0.00999999977 : f32
      %18 = vector.broadcast %cst_14 : f32 to vector<16x64xf32>
      %19 = arith.mulf %18, %15 : vector<16x64xf32>
      %20 = arith.select %17, %15, %19 : vector<16x64xi1>, vector<16x64xf32>
      %21 = arith.truncf %20 : vector<16x64xf32> to vector<16x64xbf16>
      %c0_15 = arith.constant 0 : index
      %c0_16 = arith.constant 0 : index
      %22 = vector.load %arg5[%c0_15, %c0_16] : memref<16x64xbf16, #tpu.memory_space<vmem>>, vector<16x64xbf16>
      tpu.vector_store %arg5[%c0_15, %c0_16], %21 {strides = array<i32>} : memref<16x64xbf16, #tpu.memory_space<vmem>>, vector<16x64xbf16>,
    } else {
    }
    return
  }
  func.func @transform_0(%arg0: i32, %arg1: i32) -> (i32, i32) {
    %c0_i32 = arith.constant 0 : i32
    return %arg0, %arg1 : i32, i32
  }
  func.func @transform_1(%arg0: i32, %arg1: i32) -> (i32, i32) {
    %c0_i32 = arith.constant 0 : i32
    %c0_i32_0 = arith.constant 0 : i32
    return %arg1, %c0_i32 : i32, i32
  }
  func.func @transform_2(%arg0: i32, %arg1: i32) -> (i32, i32) {
    %c0_i32 = arith.constant 0 : i32
    %c0_i32_0 = arith.constant 0 : i32
    %c0_i32_1 = arith.constant 0 : i32
    return %c0_i32, %c0_i32_0 : i32, i32
  }
  func.func @transform_3(%arg0: i32, %arg1: i32) -> (i32, i32) {
    %c0_i32 = arith.constant 0 : i32
    %c0_i32_0 = arith.constant 0 : i32
    return %arg0, %c0_i32 : i32, i32
  }
}

module attributes {stable_mosaic.version = 11 : i64} {
  func.func @_matmul_bias_kernel(%arg0: i32, %arg1: i32, %arg2: memref<8x512xbf16, #tpu.memory_space<vmem>>, %arg3: memref<512x128xbf16, #tpu.memory_space<vmem>>, %arg4: memref<1x128xf32, #tpu.memory_space<vmem>>, %arg5: memref<8x128xbf16, #tpu.memory_space<vmem>>, %arg6: memref<8x128xf32, #tpu.memory_space<vmem>>) attributes {dimension_semantics = [#tpu.dimension_semantics<parallel>, #tpu.dimension_semantics<arbitrary>], iteration_bounds = array<i64: 1, 8>, scalar_prefetch = 0 : i64, scratch_operands = 1 : i64, tpu.core_type = #tpu.core_type<tc>, window_params = [{transform_indices = @transform_0, window_bounds = array<i64: 8, 512>}, {transform_indices = @transform_1, window_bounds = array<i64: 512, 128>}, {pipeline_mode = #tpu.pipeline_mode<synchronous>, transform_indices = @transform_2, window_bounds = array<i64: 1, 128>}, {transform_indices = @transform_3, window_bounds = array<i64: 8, 128>}]} {
    %c0_i32 = arith.constant 0 : i32
    %0 = arith.cmpi eq, %arg1, %c0_i32 : i32
    %1 = arith.extui %0 : i1 to i32
    %c0_i32_0 = arith.constant 0 : i32
    %2 = arith.cmpi ne, %1, %c0_i32_0 : i32
    scf.if %2 {
      %cst_9 = arith.constant 0.000000e+00 : f32
      %12 = vector.broadcast %cst_9 : f32 to vector<8x128xf32>
      %c0_10 = arith.constant 0 : index
      %c0_11 = arith.constant 0 : index
      %13 = vector.load %arg6[%c0_10, %c0_11] : memref<8x128xf32, #tpu.memory_space<vmem>>, vector<8x128xf32>
      tpu.vector_store %arg6[%c0_10, %c0_11], %12 {strides = array<i32>} : memref<8x128xf32, #tpu.memory_space<vmem>>, vector<8x128xf32>,
    } else {
    }
    %c0 = arith.constant 0 : index
    %c0_1 = arith.constant 0 : index
    %3 = vector.load %arg6[%c0, %c0_1] : memref<8x128xf32, #tpu.memory_space<vmem>>, vector<8x128xf32>
    %c0_2 = arith.constant 0 : index
    %c0_3 = arith.constant 0 : index
    %4 = vector.load %arg2[%c0_2, %c0_3] : memref<8x512xbf16, #tpu.memory_space<vmem>>, vector<8x512xbf16>
    %c0_4 = arith.constant 0 : index
    %c0_5 = arith.constant 0 : index
    %5 = vector.load %arg3[%c0_4, %c0_5] : memref<512x128xbf16, #tpu.memory_space<vmem>>, vector<512x128xbf16>
    %cst = arith.constant dense<0.000000e+00> : vector<8x128xf32>
    %6 = tpu.matmul %4, %5, %cst {dimension_numbers = #tpu.dot_dimension_numbers<[1], [0], [0], [1], [0, 0, 1, 1], [], []>} : vector<8x512xbf16>, vector<512x128xbf16>, vector<8x128xf32> -> vector<8x128xf32>
    %7 = arith.addf %3, %6 : vector<8x128xf32>
    %c0_6 = arith.constant 0 : index
    %c0_7 = arith.constant 0 : index
    %8 = vector.load %arg6[%c0_6, %c0_7] : memref<8x128xf32, #tpu.memory_space<vmem>>, vector<8x128xf32>
    tpu.vector_store %arg6[%c0_6, %c0_7], %7 {strides = array<i32>} : memref<8x128xf32, #tpu.memory_space<vmem>>, vector<8x128xf32>,
    %c7_i32 = arith.constant 7 : i32
    %9 = arith.cmpi eq, %arg1, %c7_i32 : i32
    %10 = arith.extui %9 : i1 to i32
    %c0_i32_8 = arith.constant 0 : i32
    %11 = arith.cmpi ne, %10, %c0_i32_8 : i32
    scf.if %11 {
      %c0_9 = arith.constant 0 : index
      %c0_10 = arith.constant 0 : index
      %12 = vector.load %arg6[%c0_9, %c0_10] : memref<8x128xf32, #tpu.memory_space<vmem>>, vector<8x128xf32>
      %c0_11 = arith.constant 0 : index
      %c0_12 = arith.constant 0 : index
      %13 = vector.load %arg4[%c0_11, %c0_12] : memref<1x128xf32, #tpu.memory_space<vmem>>, vector<1x128xf32>
      %14 = vector.broadcast %13 : vector<1x128xf32> to vector<8x128xf32>
      %15 = arith.addf %12, %14 : vector<8x128xf32>
      %cst_13 = arith.constant 0.000000e+00 : f32
      %16 = vector.broadcast %cst_13 : f32 to vector<8x128xf32>
      %17 = arith.cmpf oge, %15, %16 : vector<8x128xf32>
      %cst_14 = arith.constant 0.00999999977 : f32
      %18 = vector.broadcast %cst_14 : f32 to vector<8x128xf32>
      %19 = arith.mulf %18, %15 : vector<8x128xf32>
      %20 = arith.select %17, %15, %19 : vector<8x128xi1>, vector<8x128xf32>
      %21 = arith.truncf %20 : vector<8x128xf32> to vector<8x128xbf16>
      %c0_15 = arith.constant 0 : index
      %c0_16 = arith.constant 0 : index
      %22 = vector.load %arg5[%c0_15, %c0_16] : memref<8x128xbf16, #tpu.memory_space<vmem>>, vector<8x128xbf16>
      tpu.vector_store %arg5[%c0_15, %c0_16], %21 {strides = array<i32>} : memref<8x128xbf16, #tpu.memory_space<vmem>>, vector<8x128xbf16>,
    } else {
    }
    return
  }
  func.func @transform_0(%arg0: i32, %arg1: i32) -> (i32, i32) {
    %c0_i32 = arith.constant 0 : i32
    return %arg0, %arg1 : i32, i32
  }
  func.func @transform_1(%arg0: i32, %arg1: i32) -> (i32, i32) {
    %c0_i32 = arith.constant 0 : i32
    %c0_i32_0 = arith.constant 0 : i32
    return %arg1, %c0_i32 : i32, i32
  }
  func.func @transform_2(%arg0: i32, %arg1: i32) -> (i32, i32) {
    %c0_i32 = arith.constant 0 : i32
    %c0_i32_0 = arith.constant 0 : i32
    %c0_i32_1 = arith.constant 0 : i32
    return %c0_i32, %c0_i32_0 : i32, i32
  }
  func.func @transform_3(%arg0: i32, %arg1: i32) -> (i32, i32) {
    %c0_i32 = arith.constant 0 : i32
    %c0_i32_0 = arith.constant 0 : i32
    return %arg0, %c0_i32 : i32, i32
  }
}

module attributes {stable_mosaic.version = 11 : i64} {
  func.func @_matmul_bias_kernel(%arg0: i32, %arg1: i32, %arg2: memref<8x512xbf16, #tpu.memory_space<vmem>>, %arg3: memref<512x128xbf16, #tpu.memory_space<vmem>>, %arg4: memref<1x128xf32, #tpu.memory_space<vmem>>, %arg5: memref<8x128xbf16, #tpu.memory_space<vmem>>, %arg6: memref<8x128xf32, #tpu.memory_space<vmem>>) attributes {dimension_semantics = [#tpu.dimension_semantics<parallel>, #tpu.dimension_semantics<arbitrary>], iteration_bounds = array<i64: 1, 2>, scalar_prefetch = 0 : i64, scratch_operands = 1 : i64, tpu.core_type = #tpu.core_type<tc>, window_params = [{transform_indices = @transform_0, window_bounds = array<i64: 8, 512>}, {transform_indices = @transform_1, window_bounds = array<i64: 512, 128>}, {pipeline_mode = #tpu.pipeline_mode<synchronous>, transform_indices = @transform_2, window_bounds = array<i64: 1, 128>}, {transform_indices = @transform_3, window_bounds = array<i64: 8, 128>}]} {
    %c0_i32 = arith.constant 0 : i32
    %0 = arith.cmpi eq, %arg1, %c0_i32 : i32
    %1 = arith.extui %0 : i1 to i32
    %c0_i32_0 = arith.constant 0 : i32
    %2 = arith.cmpi ne, %1, %c0_i32_0 : i32
    scf.if %2 {
      %cst_9 = arith.constant 0.000000e+00 : f32
      %12 = vector.broadcast %cst_9 : f32 to vector<8x128xf32>
      %c0_10 = arith.constant 0 : index
      %c0_11 = arith.constant 0 : index
      %13 = vector.load %arg6[%c0_10, %c0_11] : memref<8x128xf32, #tpu.memory_space<vmem>>, vector<8x128xf32>
      tpu.vector_store %arg6[%c0_10, %c0_11], %12 {strides = array<i32>} : memref<8x128xf32, #tpu.memory_space<vmem>>, vector<8x128xf32>,
    } else {
    }
    %c0 = arith.constant 0 : index
    %c0_1 = arith.constant 0 : index
    %3 = vector.load %arg6[%c0, %c0_1] : memref<8x128xf32, #tpu.memory_space<vmem>>, vector<8x128xf32>
    %c0_2 = arith.constant 0 : index
    %c0_3 = arith.constant 0 : index
    %4 = vector.load %arg2[%c0_2, %c0_3] : memref<8x512xbf16, #tpu.memory_space<vmem>>, vector<8x512xbf16>
    %c0_4 = arith.constant 0 : index
    %c0_5 = arith.constant 0 : index
    %5 = vector.load %arg3[%c0_4, %c0_5] : memref<512x128xbf16, #tpu.memory_space<vmem>>, vector<512x128xbf16>
    %cst = arith.constant dense<0.000000e+00> : vector<8x128xf32>
    %6 = tpu.matmul %4, %5, %cst {dimension_numbers = #tpu.dot_dimension_numbers<[1], [0], [0], [1], [0, 0, 1, 1], [], []>} : vector<8x512xbf16>, vector<512x128xbf16>, vector<8x128xf32> -> vector<8x128xf32>
    %7 = arith.addf %3, %6 : vector<8x128xf32>
    %c0_6 = arith.constant 0 : index
    %c0_7 = arith.constant 0 : index
    %8 = vector.load %arg6[%c0_6, %c0_7] : memref<8x128xf32, #tpu.memory_space<vmem>>, vector<8x128xf32>
    tpu.vector_store %arg6[%c0_6, %c0_7], %7 {strides = array<i32>} : memref<8x128xf32, #tpu.memory_space<vmem>>, vector<8x128xf32>,
    %c1_i32 = arith.constant 1 : i32
    %9 = arith.cmpi eq, %arg1, %c1_i32 : i32
    %10 = arith.extui %9 : i1 to i32
    %c0_i32_8 = arith.constant 0 : i32
    %11 = arith.cmpi ne, %10, %c0_i32_8 : i32
    scf.if %11 {
      %c0_9 = arith.constant 0 : index
      %c0_10 = arith.constant 0 : index
      %12 = vector.load %arg6[%c0_9, %c0_10] : memref<8x128xf32, #tpu.memory_space<vmem>>, vector<8x128xf32>
      %c0_11 = arith.constant 0 : index
      %c0_12 = arith.constant 0 : index
      %13 = vector.load %arg4[%c0_11, %c0_12] : memref<1x128xf32, #tpu.memory_space<vmem>>, vector<1x128xf32>
      %14 = vector.broadcast %13 : vector<1x128xf32> to vector<8x128xf32>
      %15 = arith.addf %12, %14 : vector<8x128xf32>
      %cst_13 = arith.constant 0.000000e+00 : f32
      %16 = vector.broadcast %cst_13 : f32 to vector<8x128xf32>
      %17 = arith.cmpf oge, %15, %16 : vector<8x128xf32>
      %cst_14 = arith.constant 0.00999999977 : f32
      %18 = vector.broadcast %cst_14 : f32 to vector<8x128xf32>
      %19 = arith.mulf %18, %15 : vector<8x128xf32>
      %20 = arith.select %17, %15, %19 : vector<8x128xi1>, vector<8x128xf32>
      %21 = arith.truncf %20 : vector<8x128xf32> to vector<8x128xbf16>
      %c0_15 = arith.constant 0 : index
      %c0_16 = arith.constant 0 : index
      %22 = vector.load %arg5[%c0_15, %c0_16] : memref<8x128xbf16, #tpu.memory_space<vmem>>, vector<8x128xbf16>
      tpu.vector_store %arg5[%c0_15, %c0_16], %21 {strides = array<i32>} : memref<8x128xbf16, #tpu.memory_space<vmem>>, vector<8x128xbf16>,
    } else {
    }
    return
  }
  func.func @transform_0(%arg0: i32, %arg1: i32) -> (i32, i32) {
    %c0_i32 = arith.constant 0 : i32
    return %arg0, %arg1 : i32, i32
  }
  func.func @transform_1(%arg0: i32, %arg1: i32) -> (i32, i32) {
    %c0_i32 = arith.constant 0 : i32
    %c0_i32_0 = arith.constant 0 : i32
    return %arg1, %c0_i32 : i32, i32
  }
  func.func @transform_2(%arg0: i32, %arg1: i32) -> (i32, i32) {
    %c0_i32 = arith.constant 0 : i32
    %c0_i32_0 = arith.constant 0 : i32
    %c0_i32_1 = arith.constant 0 : i32
    return %c0_i32, %c0_i32_0 : i32, i32
  }
  func.func @transform_3(%arg0: i32, %arg1: i32) -> (i32, i32) {
    %c0_i32 = arith.constant 0 : i32
    %c0_i32_0 = arith.constant 0 : i32
    return %arg0, %c0_i32 : i32, i32
  }
}

module attributes {stable_mosaic.version = 11 : i64} {
  func.func @_matmul_bias_kernel(%arg0: i32, %arg1: i32, %arg2: memref<16x512xbf16, #tpu.memory_space<vmem>>, %arg3: memref<512x64xbf16, #tpu.memory_space<vmem>>, %arg4: memref<1x64xf32, #tpu.memory_space<vmem>>, %arg5: memref<16x64xbf16, #tpu.memory_space<vmem>>, %arg6: memref<16x64xf32, #tpu.memory_space<vmem>>) attributes {dimension_semantics = [#tpu.dimension_semantics<parallel>, #tpu.dimension_semantics<arbitrary>], iteration_bounds = array<i64: 1, 3>, scalar_prefetch = 0 : i64, scratch_operands = 1 : i64, tpu.core_type = #tpu.core_type<tc>, window_params = [{transform_indices = @transform_0, window_bounds = array<i64: 16, 512>}, {transform_indices = @transform_1, window_bounds = array<i64: 512, 64>}, {pipeline_mode = #tpu.pipeline_mode<synchronous>, transform_indices = @transform_2, window_bounds = array<i64: 1, 64>}, {transform_indices = @transform_3, window_bounds = array<i64: 16, 64>}]} {
    %c0_i32 = arith.constant 0 : i32
    %0 = arith.cmpi eq, %arg1, %c0_i32 : i32
    %1 = arith.extui %0 : i1 to i32
    %c0_i32_0 = arith.constant 0 : i32
    %2 = arith.cmpi ne, %1, %c0_i32_0 : i32
    scf.if %2 {
      %cst_9 = arith.constant 0.000000e+00 : f32
      %12 = vector.broadcast %cst_9 : f32 to vector<16x64xf32>
      %c0_10 = arith.constant 0 : index
      %c0_11 = arith.constant 0 : index
      %13 = vector.load %arg6[%c0_10, %c0_11] : memref<16x64xf32, #tpu.memory_space<vmem>>, vector<16x64xf32>
      tpu.vector_store %arg6[%c0_10, %c0_11], %12 {strides = array<i32>} : memref<16x64xf32, #tpu.memory_space<vmem>>, vector<16x64xf32>,
    } else {
    }
    %c0 = arith.constant 0 : index
    %c0_1 = arith.constant 0 : index
    %3 = vector.load %arg6[%c0, %c0_1] : memref<16x64xf32, #tpu.memory_space<vmem>>, vector<16x64xf32>
    %c0_2 = arith.constant 0 : index
    %c0_3 = arith.constant 0 : index
    %4 = vector.load %arg2[%c0_2, %c0_3] : memref<16x512xbf16, #tpu.memory_space<vmem>>, vector<16x512xbf16>
    %c0_4 = arith.constant 0 : index
    %c0_5 = arith.constant 0 : index
    %5 = vector.load %arg3[%c0_4, %c0_5] : memref<512x64xbf16, #tpu.memory_space<vmem>>, vector<512x64xbf16>
    %cst = arith.constant dense<0.000000e+00> : vector<16x64xf32>
    %6 = tpu.matmul %4, %5, %cst {dimension_numbers = #tpu.dot_dimension_numbers<[1], [0], [0], [1], [0, 0, 1, 1], [], []>} : vector<16x512xbf16>, vector<512x64xbf16>, vector<16x64xf32> -> vector<16x64xf32>
    %7 = arith.addf %3, %6 : vector<16x64xf32>
    %c0_6 = arith.constant 0 : index
    %c0_7 = arith.constant 0 : index
    %8 = vector.load %arg6[%c0_6, %c0_7] : memref<16x64xf32, #tpu.memory_space<vmem>>, vector<16x64xf32>
    tpu.vector_store %arg6[%c0_6, %c0_7], %7 {strides = array<i32>} : memref<16x64xf32, #tpu.memory_space<vmem>>, vector<16x64xf32>,
    %c2_i32 = arith.constant 2 : i32
    %9 = arith.cmpi eq, %arg1, %c2_i32 : i32
    %10 = arith.extui %9 : i1 to i32
    %c0_i32_8 = arith.constant 0 : i32
    %11 = arith.cmpi ne, %10, %c0_i32_8 : i32
    scf.if %11 {
      %c0_9 = arith.constant 0 : index
      %c0_10 = arith.constant 0 : index
      %12 = vector.load %arg6[%c0_9, %c0_10] : memref<16x64xf32, #tpu.memory_space<vmem>>, vector<16x64xf32>
      %c0_11 = arith.constant 0 : index
      %c0_12 = arith.constant 0 : index
      %13 = vector.load %arg4[%c0_11, %c0_12] : memref<1x64xf32, #tpu.memory_space<vmem>>, vector<1x64xf32>
      %14 = vector.broadcast %13 : vector<1x64xf32> to vector<16x64xf32>
      %15 = arith.addf %12, %14 : vector<16x64xf32>
      %cst_13 = arith.constant 0.000000e+00 : f32
      %16 = vector.broadcast %cst_13 : f32 to vector<16x64xf32>
      %17 = arith.cmpf oge, %15, %16 : vector<16x64xf32>
      %cst_14 = arith.constant 0.00999999977 : f32
      %18 = vector.broadcast %cst_14 : f32 to vector<16x64xf32>
      %19 = arith.mulf %18, %15 : vector<16x64xf32>
      %20 = arith.select %17, %15, %19 : vector<16x64xi1>, vector<16x64xf32>
      %21 = arith.truncf %20 : vector<16x64xf32> to vector<16x64xbf16>
      %c0_15 = arith.constant 0 : index
      %c0_16 = arith.constant 0 : index
      %22 = vector.load %arg5[%c0_15, %c0_16] : memref<16x64xbf16, #tpu.memory_space<vmem>>, vector<16x64xbf16>
      tpu.vector_store %arg5[%c0_15, %c0_16], %21 {strides = array<i32>} : memref<16x64xbf16, #tpu.memory_space<vmem>>, vector<16x64xbf16>,
    } else {
    }
    return
  }
  func.func @transform_0(%arg0: i32, %arg1: i32) -> (i32, i32) {
    %c0_i32 = arith.constant 0 : i32
    return %arg0, %arg1 : i32, i32
  }
  func.func @transform_1(%arg0: i32, %arg1: i32) -> (i32, i32) {
    %c0_i32 = arith.constant 0 : i32
    %c0_i32_0 = arith.constant 0 : i32
    return %arg1, %c0_i32 : i32, i32
  }
  func.func @transform_2(%arg0: i32, %arg1: i32) -> (i32, i32) {
    %c0_i32 = arith.constant 0 : i32
    %c0_i32_0 = arith.constant 0 : i32
    %c0_i32_1 = arith.constant 0 : i32
    return %c0_i32, %c0_i32_0 : i32, i32
  }
  func.func @transform_3(%arg0: i32, %arg1: i32) -> (i32, i32) {
    %c0_i32 = arith.constant 0 : i32
    %c0_i32_0 = arith.constant 0 : i32
    return %arg0, %c0_i32 : i32, i32
  }
}

module attributes {stable_mosaic.version = 11 : i64} {
  func.func @_smooth_l2norm_kernel(%arg0: i32, %arg1: i32, %arg2: memref<1x4x4x4x32xf32, #tpu.memory_space<vmem>>, %arg3: memref<1x1x4x4x32xf32, #tpu.memory_space<vmem>>, %arg4: memref<1x4x4x4x32xf32, #tpu.memory_space<vmem>>, %arg5: memref<1x1xf32, #tpu.memory_space<smem>>) attributes {dimension_semantics = [#tpu.dimension_semantics<arbitrary>, #tpu.dimension_semantics<arbitrary>], iteration_bounds = array<i64: 2, 1>, scalar_prefetch = 0 : i64, scratch_operands = 0 : i64, tpu.core_type = #tpu.core_type<tc>, window_params = [{transform_indices = @transform_0, window_bounds = array<i64: 1, 4, 4, 4, 32>}, {transform_indices = @transform_1, window_bounds = array<i64: 1, 1, 4, 4, 32>}, {transform_indices = @transform_2, window_bounds = array<i64: 1, 4, 4, 4, 32>}, {transform_indices = @transform_3, window_bounds = array<i64: 1, 1>}]} {
    %c0 = arith.constant 0 : index
    %c0_0 = arith.constant 0 : index
    %c0_1 = arith.constant 0 : index
    %c0_2 = arith.constant 0 : index
    %c0_3 = arith.constant 0 : index
    %0 = vector.load %arg2[%c0, %c0_0, %c0_1, %c0_2, %c0_3] : memref<1x4x4x4x32xf32, #tpu.memory_space<vmem>>, vector<1x4x4x4x32xf32>
    %c0_4 = arith.constant 0 : index
    %c0_5 = arith.constant 0 : index
    %c0_6 = arith.constant 0 : index
    %c0_7 = arith.constant 0 : index
    %c0_8 = arith.constant 0 : index
    %1 = vector.load %arg3[%c0_4, %c0_5, %c0_6, %c0_7, %c0_8] : memref<1x1x4x4x32xf32, #tpu.memory_space<vmem>>, vector<1x1x4x4x32xf32>
    %2 = vector.extract_strided_slice %0 {offsets = [0, 1, 0, 0, 0], sizes = [1, 3, 4, 4, 32], strides = [1, 1, 1, 1, 1]} : vector<1x4x4x4x32xf32> to vector<1x3x4x4x32xf32>
    %3 = vector.extract_strided_slice %0 {offsets = [0, 0, 0, 0, 0], sizes = [1, 3, 4, 4, 32], strides = [1, 1, 1, 1, 1]} : vector<1x4x4x4x32xf32> to vector<1x3x4x4x32xf32>
    %4 = arith.subf %2, %3 : vector<1x3x4x4x32xf32>
    %5 = math.absf %4 : vector<1x3x4x4x32xf32>
    %6 = vector.shape_cast %5 : vector<1x3x4x4x32xf32> to vector<1x1x3x4x4x32xf32>
    %cst = arith.constant dense<0.000000e+00> : vector<1xf32>
    %7 = vector.multi_reduction <add>, %6, %cst [1, 2, 3, 4, 5] : vector<1x1x3x4x4x32xf32> to vector<1xf32>
    %8 = vector.shape_cast %7 : vector<1xf32> to vector<1x1x1x1x1x1xf32>
    %9 = vector.extract %8[0, 0, 0, 0, 0, 0] : f32 from vector<1x1x1x1x1x1xf32>
    %cst_9 = arith.constant 0.000000e+00 : f32
    %10 = arith.addf %cst_9, %9 : f32
    %11 = vector.extract_strided_slice %0 {offsets = [0, 0, 1, 0, 0], sizes = [1, 4, 3, 4, 32], strides = [1, 1, 1, 1, 1]} : vector<1x4x4x4x32xf32> to vector<1x4x3x4x32xf32>
    %12 = vector.extract_strided_slice %0 {offsets = [0, 0, 0, 0, 0], sizes = [1, 4, 3, 4, 32], strides = [1, 1, 1, 1, 1]} : vector<1x4x4x4x32xf32> to vector<1x4x3x4x32xf32>
    %13 = arith.subf %11, %12 : vector<1x4x3x4x32xf32>
    %14 = math.absf %13 : vector<1x4x3x4x32xf32>
    %15 = vector.shape_cast %14 : vector<1x4x3x4x32xf32> to vector<1x1x4x3x4x32xf32>
    %cst_10 = arith.constant dense<0.000000e+00> : vector<1xf32>
    %16 = vector.multi_reduction <add>, %15, %cst_10 [1, 2, 3, 4, 5] : vector<1x1x4x3x4x32xf32> to vector<1xf32>
    %17 = vector.shape_cast %16 : vector<1xf32> to vector<1x1x1x1x1x1xf32>
    %18 = vector.extract %17[0, 0, 0, 0, 0, 0] : f32 from vector<1x1x1x1x1x1xf32>
    %19 = arith.addf %10, %18 : f32
    %20 = vector.extract_strided_slice %0 {offsets = [0, 0, 0, 1, 0], sizes = [1, 4, 4, 3, 32], strides = [1, 1, 1, 1, 1]} : vector<1x4x4x4x32xf32> to vector<1x4x4x3x32xf32>
    %21 = vector.extract_strided_slice %0 {offsets = [0, 0, 0, 0, 0], sizes = [1, 4, 4, 3, 32], strides = [1, 1, 1, 1, 1]} : vector<1x4x4x4x32xf32> to vector<1x4x4x3x32xf32>
    %22 = arith.subf %20, %21 : vector<1x4x4x3x32xf32>
    %23 = math.absf %22 : vector<1x4x4x3x32xf32>
    %24 = vector.shape_cast %23 : vector<1x4x4x3x32xf32> to vector<1x1x4x4x3x32xf32>
    %cst_11 = arith.constant dense<0.000000e+00> : vector<1xf32>
    %25 = vector.multi_reduction <add>, %24, %cst_11 [1, 2, 3, 4, 5] : vector<1x1x4x4x3x32xf32> to vector<1xf32>
    %26 = vector.shape_cast %25 : vector<1xf32> to vector<1x1x1x1x1x1xf32>
    %27 = vector.extract %26[0, 0, 0, 0, 0, 0] : f32 from vector<1x1x1x1x1x1xf32>
    %28 = arith.addf %19, %27 : f32
    %c0_i32 = arith.constant 0 : i32
    %29 = arith.cmpi ne, %arg1, %c0_i32 : i32
    %30 = arith.extui %29 : i1 to i32
    %31 = arith.sitofp %30 : i32 to f32
    %32 = vector.shape_cast %1 : vector<1x1x4x4x32xf32> to vector<1x4x4x32xf32>
    %33 = vector.extract_strided_slice %0 {offsets = [0, 3, 0, 0, 0], sizes = [1, 1, 4, 4, 32], strides = [1, 1, 1, 1, 1]} : vector<1x4x4x4x32xf32> to vector<1x1x4x4x32xf32>
    %34 = vector.shape_cast %33 : vector<1x1x4x4x32xf32> to vector<1x4x4x32xf32>
    %35 = arith.subf %32, %34 : vector<1x4x4x32xf32>
    %36 = math.absf %35 : vector<1x4x4x32xf32>
    %37 = vector.shape_cast %36 : vector<1x4x4x32xf32> to vector<1x1x4x4x32xf32>
    %cst_12 = arith.constant dense<0.000000e+00> : vector<1xf32>
    %38 = vector.multi_reduction <add>, %37, %cst_12 [1, 2, 3, 4] : vector<1x1x4x4x32xf32> to vector<1xf32>
    %39 = vector.shape_cast %38 : vector<1xf32> to vector<1x1x1x1x1xf32>
    %40 = vector.extract %39[0, 0, 0, 0, 0] : f32 from vector<1x1x1x1x1xf32>
    %41 = arith.mulf %31, %40 : f32
    %42 = arith.addf %28, %41 : f32
    %c0_i32_13 = arith.constant 0 : i32
    %43 = arith.cmpi eq, %arg0, %c0_i32_13 : i32
    %c0_i32_14 = arith.constant 0 : i32
    %44 = arith.cmpi eq, %arg1, %c0_i32_14 : i32
    %45 = arith.andi %43, %44 : i1
    %46 = arith.extui %45 : i1 to i32
    %c0_i32_15 = arith.constant 0 : i32
    %47 = arith.cmpi ne, %46, %c0_i32_15 : i32
    scf.if %47 {
      %cst_27 = arith.constant 0.000000e+00 : f32
      %c0_28 = arith.constant 0 : index
      %c0_29 = arith.constant 0 : index
      %60 = memref.load %arg5[%c0_28, %c0_29] : memref<1x1xf32, #tpu.memory_space<smem>>
      memref.store %cst_27, %arg5[%c0_28, %c0_29] : memref<1x1xf32, #tpu.memory_space<smem>>
    } else {
    }
    %c0_16 = arith.constant 0 : index
    %c0_17 = arith.constant 0 : index
    %48 = memref.load %arg5[%c0_16, %c0_17] : memref<1x1xf32, #tpu.memory_space<smem>>
    %49 = arith.addf %48, %42 : f32
    %c0_18 = arith.constant 0 : index
    %c0_19 = arith.constant 0 : index
    %50 = memref.load %arg5[%c0_18, %c0_19] : memref<1x1xf32, #tpu.memory_space<smem>>
    memref.store %49, %arg5[%c0_18, %c0_19] : memref<1x1xf32, #tpu.memory_space<smem>>
    %51 = arith.mulf %0, %0 : vector<1x4x4x4x32xf32>
    %cst_20 = arith.constant dense<0.000000e+00> : vector<1x4x4x4xf32>
    %52 = vector.multi_reduction <add>, %51, %cst_20 [4] : vector<1x4x4x4x32xf32> to vector<1x4x4x4xf32>
    %53 = vector.shape_cast %52 : vector<1x4x4x4xf32> to vector<1x4x4x4x1xf32>
    %54 = math.sqrt %53 : vector<1x4x4x4x1xf32>
    %cst_21 = arith.constant 9.99999996E-13 : f32
    %55 = vector.broadcast %cst_21 : f32 to vector<1x4x4x4x1xf32>
    %56 = arith.maximumf %54, %55 : vector<1x4x4x4x1xf32>
    %57 = vector.broadcast %56 : vector<1x4x4x4x1xf32> to vector<1x4x4x4x32xf32>
    %58 = arith.divf %0, %57 : vector<1x4x4x4x32xf32>
    %c0_22 = arith.constant 0 : index
    %c0_23 = arith.constant 0 : index
    %c0_24 = arith.constant 0 : index
    %c0_25 = arith.constant 0 : index
    %c0_26 = arith.constant 0 : index
    %59 = vector.load %arg4[%c0_22, %c0_23, %c0_24, %c0_25, %c0_26] : memref<1x4x4x4x32xf32, #tpu.memory_space<vmem>>, vector<1x4x4x4x32xf32>
    tpu.vector_store %arg4[%c0_22, %c0_23, %c0_24, %c0_25, %c0_26], %58 {strides = array<i32>} : memref<1x4x4x4x32xf32, #tpu.memory_space<vmem>>, vector<1x4x4x4x32xf32>,
    return
  }
  func.func @transform_0(%arg0: i32, %arg1: i32) -> (i32, i32, i32, i32, i32) {
    %c0_i32 = arith.constant 0 : i32
    %c0_i32_0 = arith.constant 0 : i32
    %c0_i32_1 = arith.constant 0 : i32
    %c0_i32_2 = arith.constant 0 : i32
    return %arg0, %arg1, %c0_i32, %c0_i32_0, %c0_i32_1 : i32, i32, i32, i32, i32
  }
  func.func @transform_1(%arg0: i32, %arg1: i32) -> (i32, i32, i32, i32, i32) {
    %c1_i32 = arith.constant 1 : i32
    %0 = arith.addi %arg1, %c1_i32 : i32
    %c4_i32 = arith.constant 4 : i32
    %1 = arith.muli %0, %c4_i32 : i32
    %c3_i32 = arith.constant 3 : i32
    %2 = arith.minsi %1, %c3_i32 : i32
    %c0_i32 = arith.constant 0 : i32
    %c0_i32_0 = arith.constant 0 : i32
    %c0_i32_1 = arith.constant 0 : i32
    %c0_i32_2 = arith.constant 0 : i32
    return %arg0, %2, %c0_i32, %c0_i32_0, %c0_i32_1 : i32, i32, i32, i32, i32
  }
  func.func @transform_2(%arg0: i32, %arg1: i32) -> (i32, i32, i32, i32, i32) {
    %c0_i32 = arith.constant 0 : i32
    %c0_i32_0 = arith.constant 0 : i32
    %c0_i32_1 = arith.constant 0 : i32
    %c0_i32_2 = arith.constant 0 : i32
    return %arg0, %arg1, %c0_i32, %c0_i32_0, %c0_i32_1 : i32, i32, i32, i32, i32
  }
  func.func @transform_3(%arg0: i32, %arg1: i32) -> (i32, i32) {
    %c0_i32 = arith.constant 0 : i32
    %c0_i32_0 = arith.constant 0 : i32
    %c0_i32_1 = arith.constant 0 : i32
    return %c0_i32, %c0_i32_0 : i32, i32
  }
}

module attributes {stable_mosaic.version = 11 : i64} {
  func.func @_matmul_bias_kernel(%arg0: i32, %arg1: i32, %arg2: memref<128x128xbf16, #tpu.memory_space<vmem>>, %arg3: memref<128x32xbf16, #tpu.memory_space<vmem>>, %arg4: memref<1x32xf32, #tpu.memory_space<vmem>>, %arg5: memref<128x32xf32, #tpu.memory_space<vmem>>, %arg6: memref<128x32xf32, #tpu.memory_space<vmem>>) attributes {dimension_semantics = [#tpu.dimension_semantics<parallel>, #tpu.dimension_semantics<arbitrary>], iteration_bounds = array<i64: 1, 1>, scalar_prefetch = 0 : i64, scratch_operands = 1 : i64, tpu.core_type = #tpu.core_type<tc>, window_params = [{transform_indices = @transform_0, window_bounds = array<i64: 128, 128>}, {transform_indices = @transform_1, window_bounds = array<i64: 128, 32>}, {pipeline_mode = #tpu.pipeline_mode<synchronous>, transform_indices = @transform_2, window_bounds = array<i64: 1, 32>}, {transform_indices = @transform_3, window_bounds = array<i64: 128, 32>}]} {
    %c0_i32 = arith.constant 0 : i32
    %0 = arith.cmpi eq, %arg1, %c0_i32 : i32
    %1 = arith.extui %0 : i1 to i32
    %c0_i32_0 = arith.constant 0 : i32
    %2 = arith.cmpi ne, %1, %c0_i32_0 : i32
    scf.if %2 {
      %cst_10 = arith.constant 0.000000e+00 : f32
      %12 = vector.broadcast %cst_10 : f32 to vector<128x32xf32>
      %c0_11 = arith.constant 0 : index
      %c0_12 = arith.constant 0 : index
      %13 = vector.load %arg6[%c0_11, %c0_12] : memref<128x32xf32, #tpu.memory_space<vmem>>, vector<128x32xf32>
      tpu.vector_store %arg6[%c0_11, %c0_12], %12 {strides = array<i32>} : memref<128x32xf32, #tpu.memory_space<vmem>>, vector<128x32xf32>,
    } else {
    }
    %c0 = arith.constant 0 : index
    %c0_1 = arith.constant 0 : index
    %3 = vector.load %arg6[%c0, %c0_1] : memref<128x32xf32, #tpu.memory_space<vmem>>, vector<128x32xf32>
    %c0_2 = arith.constant 0 : index
    %c0_3 = arith.constant 0 : index
    %4 = vector.load %arg2[%c0_2, %c0_3] : memref<128x128xbf16, #tpu.memory_space<vmem>>, vector<128x128xbf16>
    %c0_4 = arith.constant 0 : index
    %c0_5 = arith.constant 0 : index
    %5 = vector.load %arg3[%c0_4, %c0_5] : memref<128x32xbf16, #tpu.memory_space<vmem>>, vector<128x32xbf16>
    %cst = arith.constant dense<0.000000e+00> : vector<128x32xf32>
    %6 = tpu.matmul %4, %5, %cst {dimension_numbers = #tpu.dot_dimension_numbers<[1], [0], [0], [1], [0, 0, 1, 1], [], []>} : vector<128x128xbf16>, vector<128x32xbf16>, vector<128x32xf32> -> vector<128x32xf32>
    %7 = arith.addf %3, %6 : vector<128x32xf32>
    %c0_6 = arith.constant 0 : index
    %c0_7 = arith.constant 0 : index
    %8 = vector.load %arg6[%c0_6, %c0_7] : memref<128x32xf32, #tpu.memory_space<vmem>>, vector<128x32xf32>
    tpu.vector_store %arg6[%c0_6, %c0_7], %7 {strides = array<i32>} : memref<128x32xf32, #tpu.memory_space<vmem>>, vector<128x32xf32>,
    %c0_i32_8 = arith.constant 0 : i32
    %9 = arith.cmpi eq, %arg1, %c0_i32_8 : i32
    %10 = arith.extui %9 : i1 to i32
    %c0_i32_9 = arith.constant 0 : i32
    %11 = arith.cmpi ne, %10, %c0_i32_9 : i32
    scf.if %11 {
      %c0_10 = arith.constant 0 : index
      %c0_11 = arith.constant 0 : index
      %12 = vector.load %arg6[%c0_10, %c0_11] : memref<128x32xf32, #tpu.memory_space<vmem>>, vector<128x32xf32>
      %c0_12 = arith.constant 0 : index
      %c0_13 = arith.constant 0 : index
      %13 = vector.load %arg4[%c0_12, %c0_13] : memref<1x32xf32, #tpu.memory_space<vmem>>, vector<1x32xf32>
      %14 = vector.broadcast %13 : vector<1x32xf32> to vector<128x32xf32>
      %15 = arith.addf %12, %14 : vector<128x32xf32>
      %c0_14 = arith.constant 0 : index
      %c0_15 = arith.constant 0 : index
      %16 = vector.load %arg5[%c0_14, %c0_15] : memref<128x32xf32, #tpu.memory_space<vmem>>, vector<128x32xf32>
      tpu.vector_store %arg5[%c0_14, %c0_15], %15 {strides = array<i32>} : memref<128x32xf32, #tpu.memory_space<vmem>>, vector<128x32xf32>,
    } else {
    }
    return
  }
  func.func @transform_0(%arg0: i32, %arg1: i32) -> (i32, i32) {
    %c0_i32 = arith.constant 0 : i32
    return %arg0, %arg1 : i32, i32
  }
  func.func @transform_1(%arg0: i32, %arg1: i32) -> (i32, i32) {
    %c0_i32 = arith.constant 0 : i32
    %c0_i32_0 = arith.constant 0 : i32
    return %arg1, %c0_i32 : i32, i32
  }
  func.func @transform_2(%arg0: i32, %arg1: i32) -> (i32, i32) {
    %c0_i32 = arith.constant 0 : i32
    %c0_i32_0 = arith.constant 0 : i32
    %c0_i32_1 = arith.constant 0 : i32
    return %c0_i32, %c0_i32_0 : i32, i32
  }
  func.func @transform_3(%arg0: i32, %arg1: i32) -> (i32, i32) {
    %c0_i32 = arith.constant 0 : i32
    %c0_i32_0 = arith.constant 0 : i32
    return %arg0, %c0_i32 : i32, i32
  }
}

</mosaic_0001>

<llo_original>
// kernel: featnet_forward.21
$region0: #{featnet_forward.21}
  #allocation0 [shape = 'u32[]', space=smem, size = 0x4, offset = 0x4, fixed_abs, tag = 'smem constant byte address 0x4 - core index']
  #allocation1 [shape = 'u32[72,128]{1,0:T(1,128)}', space=vmem, size = 0x9000, scoped, tag = 'internal scratch']
  #allocation2 [shape = 'f32[128,32]{1,0:T(8,128)}', space=vmem, size = 0x10000, scoped, tag = 'scratch operand']
  %s0 = inlined_call_operand.vmem [shape: bf16[128,256], index: 0, kind: input, shape index: {}]
  %s1 = inlined_call_operand.vmem [shape: bf16[256,32], index: 1, kind: input, shape index: {}]
  %s2 = inlined_call_operand.vmem [shape: f32[1,32], index: 2, kind: input, shape index: {}]
  %s3 = inlined_call_operand.vmem [shape: bf16[128,32], index: 3, kind: output, shape index: {}]
  %s4 = sld [smem:[#allocation0]]
  $region30: #{featnet_forward.21} parent=0
    _
  %s6 = ssub.s32 1, %s4
  %s7 = scalar_select 0, %s6, %s4
  // Predicated region
  $region2: #{featnet_forward.21} parent=0 // pred_check
    _
  $region3: #{featnet_forward.21} parent=0 // pred_check_branch
    %9 = sbr.rel (0) target = $region5
  $region4: #{featnet_forward.21} parent=0 // pred_region
    _
  $region5: #{featnet_forward.21} parent=0 // pred_fallthru
    _
  // Predicated region
  $region6: #{featnet_forward.21} parent=0 // pred_check
    _
  $region7: #{featnet_forward.21} parent=0 // pred_check_branch
    %11 = sbr.rel (0) target = $region9
  $region8: #{featnet_forward.21} parent=0 // pred_region
    _
  $region9: #{featnet_forward.21} parent=0 // pred_fallthru
    _
  // Predicated region
  $region10: #{featnet_forward.21} parent=0 // pred_check
    _
  $region11: #{featnet_forward.21} parent=0 // pred_check_branch
    %13 = sbr.rel (0) target = $region13
  $region12: #{featnet_forward.21} parent=0 // pred_region
    _
  $region13: #{featnet_forward.21} parent=0 // pred_fallthru
    _
  %p14 = scmp.eq.s32.totalorder 0, 0
  // Predicated region
  $region14: #{featnet_forward.21} parent=0 // pred_check
    %p15 = pneg %p14
  $region15: #{featnet_forward.21} parent=0 // pred_check_branch
    %17 = sbr.rel (%p15) target = $region17
  $region16: #{featnet_forward.21} parent=0 // pred_region
    %vm18 = vcmask 261120
    %19 = vst.msk [vmem:[#allocation2] sm:$0xff] %vm18, 0.0
    %20 = vst.msk [vmem:[#allocation2 + $0x8] sm:$0xff] %vm18, 0.0
    %21 = vst.msk [vmem:[#allocation2 + $0x10] sm:$0xff] %vm18, 0.0
    %22 = vst.msk [vmem:[#allocation2 + $0x18] sm:$0xff] %vm18, 0.0
    %23 = vst.msk [vmem:[#allocation2 + $0x20] sm:$0xff] %vm18, 0.0
    %24 = vst.msk [vmem:[#allocation2 + $0x28] sm:$0xff] %vm18, 0.0
    %25 = vst.msk [vmem:[#allocation2 + $0x30] sm:$0xff] %vm18, 0.0
    %26 = vst.msk [vmem:[#allocation2 + $0x38] sm:$0xff] %vm18, 0.0
    %27 = vst.msk [vmem:[#allocation2 + $0x40] sm:$0xff] %vm18, 0.0
    %28 = vst.msk [vmem:[#allocation2 + $0x48] sm:$0xff] %vm18, 0.0
    %29 = vst.msk [vmem:[#allocation2 + $0x50] sm:$0xff] %vm18, 0.0
    %30 = vst.msk [vmem:[#allocation2 + $0x58] sm:$0xff] %vm18, 0.0
    %31 = vst.msk [vmem:[#allocation2 + $0x60] sm:$0xff] %vm18, 0.0
    %32 = vst.msk [vmem:[#allocation2 + $0x68] sm:$0xff] %vm18, 0.0
    %33 = vst.msk [vmem:[#allocation2 + $0x70] sm:$0xff] %vm18, 0.0
    %34 = vst.msk [vmem:[#allocation2 + $0x78] sm:$0xff] %vm18, 0.0
  $region17: #{featnet_forward.21} parent=0 // pred_fallthru
    _
  %v35 = vld [vmem:[#allocation2] sm:$0xff]
  %v36 = vld [vmem:[#allocation2 + $0x8] sm:$0xff]
  %v37 = vld [vmem:[#allocation2 + $0x10] sm:$0xff]
  %v38 = vld [vmem:[#allocation2 + $0x18] sm:$0xff]
  %v39 = vld [vmem:[#allocation2 + $0x20] sm:$0xff]
  %v40 = vld [vmem:[#allocation2 + $0x28] sm:$0xff]
  %v41 = vld [vmem:[#allocation2 + $0x30] sm:$0xff]
  %v42 = vld [vmem:[#allocation2 + $0x38] sm:$0xff]
  %v43 = vld [vmem:[#allocation2 + $0x40] sm:$0xff]
  %v44 = vld [vmem:[#allocation2 + $0x48] sm:$0xff]
  %v45 = vld [vmem:[#allocation2 + $0x50] sm:$0xff]
  %v46 = vld [vmem:[#allocation2 + $0x58] sm:$0xff]
  %v47 = vld [vmem:[#allocation2 + $0x60] sm:$0xff]
  %v48 = vld [vmem:[#allocation2 + $0x68] sm:$0xff]
  %v49 = vld [vmem:[#allocation2 + $0x70] sm:$0xff]
  %v50 = vld [vmem:[#allocation2 + $0x78] sm:$0xff]
  %v51 = vld [vmem:[%s0] sm:$0xff]
  %v52 = vld [vmem:[%s0 + $0x8] sm:$0xff]
  %v53 = vld [vmem:[%s0 + $0x10] sm:$0xff]
  %v54 = vld [vmem:[%s0 + $0x18] sm:$0xff]
  %v55 = vld [vmem:[%s0 + $0x20] sm:$0xff]
  %v56 = vld [vmem:[%s0 + $0x28] sm:$0xff]
  %v57 = vld [vmem:[%s0 + $0x30] sm:$0xff]
  %v58 = vld [vmem:[%s0 + $0x38] sm:$0xff]
  %v59 = vld [vmem:[%s0 + $0x40] sm:$0xff]
  %v60 = vld [vmem:[%s0 + $0x48] sm:$0xff]
  %v61 = vld [vmem:[%s0 + $0x50] sm:$0xff]
  %v62 = vld [vmem:[%s0 + $0x58] sm:$0xff]
  %v63 = vld [vmem:[%s0 + $0x60] sm:$0xff]
  %v64 = vld [vmem:[%s0 + $0x68] sm:$0xff]
  %v65 = vld [vmem:[%s0 + $0x70] sm:$0xff]
  %v66 = vld [vmem:[%s0 + $0x78] sm:$0xff]
  %v67 = vld [vmem:[%s1] sm:$0xf]
  %v68 = vld [vmem:[%s1 + $0x4] sm:$0xf]
  %v69 = vld [vmem:[%s1 + $0x8] sm:$0xf]
  %v70 = vld [vmem:[%s1 + $0xc] sm:$0xf]
  %v71 = vld [vmem:[%s1 + $0x10] sm:$0xf]
  %v72 = vld [vmem:[%s1 + $0x14] sm:$0xf]
  %v73 = vld [vmem:[%s1 + $0x18] sm:$0xf]
  %v74 = vld [vmem:[%s1 + $0x1c] sm:$0xf]
  %v75 = vld [vmem:[%s1 + $0x20] sm:$0xf]
  %v76 = vld [vmem:[%s1 + $0x24] sm:$0xf]
  %v77 = vld [vmem:[%s1 + $0x28] sm:$0xf]
  %v78 = vld [vmem:[%s1 + $0x2c] sm:$0xf]
  %v79 = vld [vmem:[%s1 + $0x30] sm:$0xf]
  %v80 = vld [vmem:[%s1 + $0x34] sm:$0xf]
  %v81 = vld [vmem:[%s1 + $0x38] sm:$0xf]
  %v82 = vld [vmem:[%s1 + $0x3c] sm:$0xf]
  %v83 = vld [vmem:[%s1 + $0x40] sm:$0xf]
  %v84 = vld [vmem:[%s1 + $0x44] sm:$0xf]
  %v85 = vld [vmem:[%s1 + $0x48] sm:$0xf]
  %v86 = vld [vmem:[%s1 + $0x4c] sm:$0xf]
  %v87 = vld [vmem:[%s1 + $0x50] sm:$0xf]
  %v88 = vld [vmem:[%s1 + $0x54] sm:$0xf]
  %v89 = vld [vmem:[%s1 + $0x58] sm:$0xf]
  %v90 = vld [vmem:[%s1 + $0x5c] sm:$0xf]
  %v91 = vld [vmem:[%s1 + $0x60] sm:$0xf]
  %v92 = vld [vmem:[%s1 + $0x64] sm:$0xf]
  %v93 = vld [vmem:[%s1 + $0x68] sm:$0xf]
  %v94 = vld [vmem:[%s1 + $0x6c] sm:$0xf]
  %v95 = vld [vmem:[%s1 + $0x70] sm:$0xf]
  %v96 = vld [vmem:[%s1 + $0x74] sm:$0xf]
  %v97 = vld [vmem:[%s1 + $0x78] sm:$0xf]
  %v98 = vld [vmem:[%s1 + $0x7c] sm:$0xf]
  %v115 = vunpack.c.l.b16 %v51
  %v116 = vunpack.c.h.b16 %v51
  %v117 = vunpack.c.l.b16 %v52
  %v118 = vunpack.c.h.b16 %v52
  %v119 = vunpack.c.l.b16 %v53
  %v120 = vunpack.c.h.b16 %v53
  %v121 = vunpack.c.l.b16 %v54
  %v122 = vunpack.c.h.b16 %v54
  %v123 = vunpack.c.l.b16 %v55
  %v124 = vunpack.c.h.b16 %v55
  %v125 = vunpack.c.l.b16 %v56
  %v126 = vunpack.c.h.b16 %v56
  %v127 = vunpack.c.l.b16 %v57
  %v128 = vunpack.c.h.b16 %v57
  %v129 = vunpack.c.l.b16 %v58
  %v130 = vunpack.c.h.b16 %v58
  %v131 = vunpack.c.l.b16 %v59
  %v132 = vunpack.c.h.b16 %v59
  %v133 = vunpack.c.l.b16 %v60
  %v134 = vunpack.c.h.b16 %v60
  %v135 = vunpack.c.l.b16 %v61
  %v136 = vunpack.c.h.b16 %v61
  %v137 = vunpack.c.l.b16 %v62
  %v138 = vunpack.c.h.b16 %v62
  %v139 = vunpack.c.l.b16 %v63
  %v140 = vunpack.c.h.b16 %v63
  %v141 = vunpack.c.l.b16 %v64
  %v142 = vunpack.c.h.b16 %v64
  %v143 = vunpack.c.l.b16 %v65
  %v144 = vunpack.c.h.b16 %v65
  %v145 = vunpack.c.l.b16 %v66
  %v146 = vunpack.c.h.b16 %v66
  %v147 = vpack.c.b16 %v117, %v115
  %v148 = vpack.c.b16 %v118, %v116
  %v149 = vpack.c.b16 %v121, %v119
  %v150 = vpack.c.b16 %v122, %v120
  %v151 = vpack.c.b16 %v125, %v123
  %v152 = vpack.c.b16 %v126, %v124
  %v153 = vpack.c.b16 %v129, %v127
  %v154 = vpack.c.b16 %v130, %v128
  %v155 = vpack.c.b16 %v133, %v131
  %v156 = vpack.c.b16 %v134, %v132
  %v157 = vpack.c.b16 %v137, %v135
  %v158 = vpack.c.b16 %v138, %v136
  %v159 = vpack.c.b16 %v141, %v139
  %v160 = vpack.c.b16 %v142, %v140
  %v161 = vpack.c.b16 %v145, %v143
  %v162 = vpack.c.b16 %v146, %v144
  %v211 = vunpack.c.l.b16 %v67
  %v212 = vunpack.c.l.b16 %v68
  %v213 = vunpack.c.l.b16 %v69
  %v214 = vunpack.c.l.b16 %v70
  %v215 = vunpack.c.l.b16 %v71
  %v216 = vunpack.c.l.b16 %v72
  %v217 = vunpack.c.l.b16 %v73
  %v218 = vunpack.c.l.b16 %v74
  %v219 = vunpack.c.l.b16 %v75
  %v220 = vunpack.c.l.b16 %v76
  %v221 = vunpack.c.l.b16 %v77
  %v222 = vunpack.c.l.b16 %v78
  %v223 = vunpack.c.l.b16 %v79
  %v224 = vunpack.c.l.b16 %v80
  %v225 = vunpack.c.l.b16 %v81
  %v226 = vunpack.c.l.b16 %v82
  %v227 = vunpack.c.l.b16 %v83
  %v228 = vunpack.c.l.b16 %v84
  %v229 = vunpack.c.l.b16 %v85
  %v230 = vunpack.c.l.b16 %v86
  %v231 = vunpack.c.l.b16 %v87
  %v232 = vunpack.c.l.b16 %v88
  %v233 = vunpack.c.l.b16 %v89
  %v234 = vunpack.c.l.b16 %v90
  %v235 = vunpack.c.l.b16 %v91
  %v236 = vunpack.c.l.b16 %v92
  %v237 = vunpack.c.l.b16 %v93
  %v238 = vunpack.c.l.b16 %v94
  %v239 = vunpack.c.l.b16 %v95
  %v240 = vunpack.c.l.b16 %v96
  %v241 = vunpack.c.l.b16 %v97
  %v242 = vunpack.c.l.b16 %v98
  %v243 = vpack.c.b16 %v212, %v211
  %v244 = vpack.c.b16 %v214, %v213
  %v245 = vpack.c.b16 %v216, %v215
  %v246 = vpack.c.b16 %v218, %v217
  %v247 = vpack.c.b16 %v220, %v219
  %v248 = vpack.c.b16 %v222, %v221
  %v249 = vpack.c.b16 %v224, %v223
  %v250 = vpack.c.b16 %v226, %v225
  %v251 = vpack.c.b16 %v228, %v227
  %v252 = vpack.c.b16 %v230, %v229
  %v253 = vpack.c.b16 %v232, %v231
  %v254 = vpack.c.b16 %v234, %v233
  %v255 = vpack.c.b16 %v236, %v235
  %v256 = vpack.c.b16 %v238, %v237
  %v257 = vpack.c.b16 %v240, %v239
  %v258 = vpack.c.b16 %v242, %v241
  %275 = vmatpush.bf16.msra.mxu0 %v250
  %276 = vmatpush.bf16.msra.mxu0 %v249
  %277 = vmatpush.bf16.msra.mxu0 %v248
  %278 = vmatpush.bf16.msra.mxu0 %v247
  %279 = vmatpush.bf16.msra.mxu0 %v246
  %280 = vmatpush.bf16.msra.mxu0 %v245
  %281 = vmatpush.bf16.msra.mxu0 %v244
  %282 = vmatpush.bf16.msra.mxu0 %v243
  %283 = vmatmul.bf16.gmra.mxu0 %v147
  %v284 = vpop.f32.mrf.mxu0
  %v285 = vadd.f32 0.0, %v284
  %v286 = vpop.f32.mrf.mxu0
  %v287 = vadd.f32 0.0, %v286
  %288 = vmatmul.bf16.gmra.mxu0 %v149
  %v289 = vpop.f32.mrf.mxu0
  %v290 = vadd.f32 0.0, %v289
  %v291 = vpop.f32.mrf.mxu0
  %v292 = vadd.f32 0.0, %v291
  %293 = vmatmul.bf16.gmra.mxu0 %v151
  %v294 = vpop.f32.mrf.mxu0
  %v295 = vadd.f32 0.0, %v294
  %v296 = vpop.f32.mrf.mxu0
  %v297 = vadd.f32 0.0, %v296
  %298 = vmatmul.bf16.gmra.mxu0 %v153
  %v299 = vpop.f32.mrf.mxu0
  %v300 = vadd.f32 0.0, %v299
  %v301 = vpop.f32.mrf.mxu0
  %v302 = vadd.f32 0.0, %v301
  %303 = vmatmul.bf16.gmra.mxu0 %v155
  %v304 = vpop.f32.mrf.mxu0
  %v305 = vadd.f32 0.0, %v304
  %v306 = vpop.f32.mrf.mxu0
  %v307 = vadd.f32 0.0, %v306
  %308 = vmatmul.bf16.gmra.mxu0 %v157
  %v309 = vpop.f32.mrf.mxu0
  %v310 = vadd.f32 0.0, %v309
  %v311 = vpop.f32.mrf.mxu0
  %v312 = vadd.f32 0.0, %v311
  %313 = vmatmul.bf16.gmra.mxu0 %v159
  %v314 = vpop.f32.mrf.mxu0
  %v315 = vadd.f32 0.0, %v314
  %v316 = vpop.f32.mrf.mxu0
  %v317 = vadd.f32 0.0, %v316
  %318 = vmatmul.bf16.gmra.mxu0 %v161
  %v319 = vpop.f32.mrf.mxu0
  %v320 = vadd.f32 0.0, %v319
  %v321 = vpop.f32.mrf.mxu0
  %v322 = vadd.f32 0.0, %v321
  %323 = vdwg.mxu0
  %324 = vmatpush.bf16.msra.mxu0 %v258
  %325 = vmatpush.bf16.msra.mxu0 %v257
  %326 = vmatpush.bf16.msra.mxu0 %v256
  %327 = vmatpush.bf16.msra.mxu0 %v255
  %328 = vmatpush.bf16.msra.mxu0 %v254
  %329 = vmatpush.bf16.msra.mxu0 %v253
  %330 = vmatpush.bf16.msra.mxu0 %v252
  %331 = vmatpush.bf16.msra.mxu0 %v251
  %332 = vmatmul.bf16.gmra.mxu0 %v148
  %v333 = vpop.f32.mrf.mxu0
  %v334 = vadd.f32 %v285, %v333
  %v335 = vpop.f32.mrf.mxu0
  %v336 = vadd.f32 %v287, %v335
  %337 = vmatmul.bf16.gmra.mxu0 %v150
  %v338 = vpop.f32.mrf.mxu0
  %v339 = vadd.f32 %v290, %v338
  %v340 = vpop.f32.mrf.mxu0
  %v341 = vadd.f32 %v292, %v340
  %342 = vmatmul.bf16.gmra.mxu0 %v152
  %v343 = vpop.f32.mrf.mxu0
  %v344 = vadd.f32 %v295, %v343
  %v345 = vpop.f32.mrf.mxu0
  %v346 = vadd.f32 %v297, %v345
  %347 = vmatmul.bf16.gmra.mxu0 %v154
  %v348 = vpop.f32.mrf.mxu0
  %v349 = vadd.f32 %v300, %v348
  %v350 = vpop.f32.mrf.mxu0
  %v351 = vadd.f32 %v302, %v350
  %352 = vmatmul.bf16.gmra.mxu0 %v156
  %v353 = vpop.f32.mrf.mxu0
  %v354 = vadd.f32 %v305, %v353
  %v355 = vpop.f32.mrf.mxu0
  %v356 = vadd.f32 %v307, %v355
  %357 = vmatmul.bf16.gmra.mxu0 %v158
  %v358 = vpop.f32.mrf.mxu0
  %v359 = vadd.f32 %v310, %v358
  %v360 = vpop.f32.mrf.mxu0
  %v361 = vadd.f32 %v312, %v360
  %362 = vmatmul.bf16.gmra.mxu0 %v160
  %v363 = vpop.f32.mrf.mxu0
  %v364 = vadd.f32 %v315, %v363
  %v365 = vpop.f32.mrf.mxu0
  %v366 = vadd.f32 %v317, %v365
  %367 = vmatmul.bf16.gmra.mxu0 %v162
  %v368 = vpop.f32.mrf.mxu0
  %v369 = vadd.f32 %v320, %v368
  %v370 = vpop.f32.mrf.mxu0
  %v371 = vadd.f32 %v322, %v370
  %372 = vdwg.mxu0
  %v373 = vadd.f32 %v35, %v334
  %v374 = vadd.f32 %v36, %v336
  %v375 = vadd.f32 %v37, %v339
  %v376 = vadd.f32 %v38, %v341
  %v377 = vadd.f32 %v39, %v344
  %v378 = vadd.f32 %v40, %v346
  %v379 = vadd.f32 %v41, %v349
  %v380 = vadd.f32 %v42, %v351
  %v381 = vadd.f32 %v43, %v354
  %v382 = vadd.f32 %v44, %v356
  %v383 = vadd.f32 %v45, %v359
  %v384 = vadd.f32 %v46, %v361
  %v385 = vadd.f32 %v47, %v364
  %v386 = vadd.f32 %v48, %v366
  %v387 = vadd.f32 %v49, %v369
  %v388 = vadd.f32 %v50, %v371
  %vm389 = vcmask 261120
  %390 = vst.msk [vmem:[#allocation2] sm:$0xff] %vm389, %v373
  %391 = vst.msk [vmem:[#allocation2 + $0x8] sm:$0xff] %vm389, %v374
  %392 = vst.msk [vmem:[#allocation2 + $0x10] sm:$0xff] %vm389, %v375
  %393 = vst.msk [vmem:[#allocation2 + $0x18] sm:$0xff] %vm389, %v376
  %394 = vst.msk [vmem:[#allocation2 + $0x20] sm:$0xff] %vm389, %v377
  %395 = vst.msk [vmem:[#allocation2 + $0x28] sm:$0xff] %vm389, %v378
  %396 = vst.msk [vmem:[#allocation2 + $0x30] sm:$0xff] %vm389, %v379
  %397 = vst.msk [vmem:[#allocation2 + $0x38] sm:$0xff] %vm389, %v380
  %398 = vst.msk [vmem:[#allocation2 + $0x40] sm:$0xff] %vm389, %v381
  %399 = vst.msk [vmem:[#allocation2 + $0x48] sm:$0xff] %vm389, %v382
  %400 = vst.msk [vmem:[#allocation2 + $0x50] sm:$0xff] %vm389, %v383
  %401 = vst.msk [vmem:[#allocation2 + $0x58] sm:$0xff] %vm389, %v384
  %402 = vst.msk [vmem:[#allocation2 + $0x60] sm:$0xff] %vm389, %v385
  %403 = vst.msk [vmem:[#allocation2 + $0x68] sm:$0xff] %vm389, %v386
  %404 = vst.msk [vmem:[#allocation2 + $0x70] sm:$0xff] %vm389, %v387
  %405 = vst.msk [vmem:[#allocation2 + $0x78] sm:$0xff] %vm389, %v388
  // Predicated region
  $region18: #{featnet_forward.21} parent=0 // pred_check
    %p406 = pneg %p14
  $region19: #{featnet_forward.21} parent=0 // pred_check_branch
    %408 = sbr.rel (%p406) target = $region21
  $region20: #{featnet_forward.21} parent=0 // pred_region
    %v409 = vld [vmem:[#allocation2] sm:$0xff]
    %v410 = vld [vmem:[#allocation2 + $0x8] sm:$0xff]
    %v411 = vld [vmem:[#allocation2 + $0x10] sm:$0xff]
    %v412 = vld [vmem:[#allocation2 + $0x18] sm:$0xff]
    %v413 = vld [vmem:[#allocation2 + $0x20] sm:$0xff]
    %v414 = vld [vmem:[#allocation2 + $0x28] sm:$0xff]
    %v415 = vld [vmem:[#allocation2 + $0x30] sm:$0xff]
    %v416 = vld [vmem:[#allocation2 + $0x38] sm:$0xff]
    %v417 = vld [vmem:[#allocation2 + $0x40] sm:$0xff]
    %v418 = vld [vmem:[#allocation2 + $0x48] sm:$0xff]
    %v419 = vld [vmem:[#allocation2 + $0x50] sm:$0xff]
    %v420 = vld [vmem:[#allocation2 + $0x58] sm:$0xff]
    %v421 = vld [vmem:[#allocation2 + $0x60] sm:$0xff]
    %v422 = vld [vmem:[#allocation2 + $0x68] sm:$0xff]
    %v423 = vld [vmem:[#allocation2 + $0x70] sm:$0xff]
    %v424 = vld [vmem:[#allocation2 + $0x78] sm:$0xff]
    %v425 = vld [vmem:[%s2] sm:$0x1]
    %v427 = vperm.slane %v425, 0
    %v429 = vadd.f32 %v409, %v427
    %v430 = vadd.f32 %v410, %v427
    %v431 = vadd.f32 %v411, %v427
    %v432 = vadd.f32 %v412, %v427
    %v433 = vadd.f32 %v413, %v427
    %v434 = vadd.f32 %v414, %v427
    %v435 = vadd.f32 %v415, %v427
    %v436 = vadd.f32 %v416, %v427
    %v437 = vadd.f32 %v417, %v427
    %v438 = vadd.f32 %v418, %v427
    %v439 = vadd.f32 %v419, %v427
    %v440 = vadd.f32 %v420, %v427
    %v441 = vadd.f32 %v421, %v427
    %v442 = vadd.f32 %v422, %v427
    %v443 = vadd.f32 %v423, %v427
    %v444 = vadd.f32 %v424, %v427
    %vm445 = vcmp.ge.f32.partialorder %v429, 0.0
    %vm446 = vcmp.ge.f32.partialorder %v430, 0.0
    %vm447 = vcmp.ge.f32.partialorder %v431, 0.0
    %vm448 = vcmp.ge.f32.partialorder %v432, 0.0
    %vm449 = vcmp.ge.f32.partialorder %v433, 0.0
    %vm450 = vcmp.ge.f32.partialorder %v434, 0.0
    %vm451 = vcmp.ge.f32.partialorder %v435, 0.0
    %vm452 = vcmp.ge.f32.partialorder %v436, 0.0
    %vm453 = vcmp.ge.f32.partialorder %v437, 0.0
    %vm454 = vcmp.ge.f32.partialorder %v438, 0.0
    %vm455 = vcmp.ge.f32.partialorder %v439, 0.0
    %vm456 = vcmp.ge.f32.partialorder %v440, 0.0
    %vm457 = vcmp.ge.f32.partialorder %v441, 0.0
    %vm458 = vcmp.ge.f32.partialorder %v442, 0.0
    %vm459 = vcmp.ge.f32.partialorder %v443, 0.0
    %vm460 = vcmp.ge.f32.partialorder %v444, 0.0
    %v461 = vmul.f32 %v429, 0.01
    %v462 = vmul.f32 %v430, 0.01
    %v463 = vmul.f32 %v431, 0.01
    %v464 = vmul.f32 %v432, 0.01
    %v465 = vmul.f32 %v433, 0.01
    %v466 = vmul.f32 %v434, 0.01
    %v467 = vmul.f32 %v435, 0.01
    %v468 = vmul.f32 %v436, 0.01
    %v469 = vmul.f32 %v437, 0.01
    %v470 = vmul.f32 %v438, 0.01
    %v471 = vmul.f32 %v439, 0.01
    %v472 = vmul.f32 %v440, 0.01
    %v473 = vmul.f32 %v441, 0.01
    %v474 = vmul.f32 %v442, 0.01
    %v475 = vmul.f32 %v443, 0.01
    %v476 = vmul.f32 %v444, 0.01
    %v477 = vsel %vm445, %v429, %v461
    %v478 = vsel %vm446, %v430, %v462
    %v479 = vsel %vm447, %v431, %v463
    %v480 = vsel %vm448, %v432, %v464
    %v481 = vsel %vm449, %v433, %v465
    %v482 = vsel %vm450, %v434, %v466
    %v483 = vsel %vm451, %v435, %v467
    %v484 = vsel %vm452, %v436, %v468
    %v485 = vsel %vm453, %v437, %v469
    %v486 = vsel %vm454, %v438, %v470
    %v487 = vsel %vm455, %v439, %v471
    %v488 = vsel %vm456, %v440, %v472
    %v489 = vsel %vm457, %v441, %v473
    %v490 = vsel %vm458, %v442, %v474
    %v491 = vsel %vm459, %v443, %v475
    %v492 = vsel %vm460, %v444, %v476
    %v493 = vpack.c.bf16 %v477, %v477
    %v494 = vpack.c.bf16 %v478, %v478
    %v495 = vpack.c.bf16 %v479, %v479
    %v496 = vpack.c.bf16 %v480, %v480
    %v497 = vpack.c.bf16 %v481, %v481
    %v498 = vpack.c.bf16 %v482, %v482
    %v499 = vpack.c.bf16 %v483, %v483
    %v500 = vpack.c.bf16 %v484, %v484
    %v501 = vpack.c.bf16 %v485, %v485
    %v502 = vpack.c.bf16 %v486, %v486
    %v503 = vpack.c.bf16 %v487, %v487
    %v504 = vpack.c.bf16 %v488, %v488
    %v505 = vpack.c.bf16 %v489, %v489
    %v506 = vpack.c.bf16 %v490, %v490
    %v507 = vpack.c.bf16 %v491, %v491
    %v508 = vpack.c.bf16 %v492, %v492
    %vm509 = vcmask 257024
    %510 = vst.msk [vmem:[%s3] sm:$0xf] %vm509, %v493
    %511 = vst.msk [vmem:[%s3 + $0x4] sm:$0xf] %vm509, %v494
    %512 = vst.msk [vmem:[%s3 + $0x8] sm:$0xf] %vm509, %v495
    %513 = vst.msk [vmem:[%s3 + $0xc] sm:$0xf] %vm509, %v496
    %514 = vst.msk [vmem:[%s3 + $0x10] sm:$0xf] %vm509, %v497
    %515 = vst.msk [vmem:[%s3 + $0x14] sm:$0xf] %vm509, %v498
    %516 = vst.msk [vmem:[%s3 + $0x18] sm:$0xf] %vm509, %v499
    %517 = vst.msk [vmem:[%s3 + $0x1c] sm:$0xf] %vm509, %v500
    %518 = vst.msk [vmem:[%s3 + $0x20] sm:$0xf] %vm509, %v501
    %519 = vst.msk [vmem:[%s3 + $0x24] sm:$0xf] %vm509, %v502
    %520 = vst.msk [vmem:[%s3 + $0x28] sm:$0xf] %vm509, %v503
    %521 = vst.msk [vmem:[%s3 + $0x2c] sm:$0xf] %vm509, %v504
    %522 = vst.msk [vmem:[%s3 + $0x30] sm:$0xf] %vm509, %v505
    %523 = vst.msk [vmem:[%s3 + $0x34] sm:$0xf] %vm509, %v506
    %524 = vst.msk [vmem:[%s3 + $0x38] sm:$0xf] %vm509, %v507
    %525 = vst.msk [vmem:[%s3 + $0x3c] sm:$0xf] %vm509, %v508
  $region21: #{featnet_forward.21} parent=0 // pred_fallthru
    _
  // Predicated region
  $region22: #{featnet_forward.21} parent=0 // pred_check
    _
  $region23: #{featnet_forward.21} parent=0 // pred_check_branch
    %527 = sbr.rel (0) target = $region25
  $region24: #{featnet_forward.21} parent=0 // pred_region
    _
  $region25: #{featnet_forward.21} parent=0 // pred_fallthru
    _
  // Predicated region
  $region26: #{featnet_forward.21} parent=0 // pred_check
    _
  $region27: #{featnet_forward.21} parent=0 // pred_check_branch
    %529 = sbr.rel (0) target = $region29
  $region28: #{featnet_forward.21} parent=0 // pred_region
    _
  $region29: #{featnet_forward.21} parent=0 // pred_fallthru
    _

// kernel: featnet_forward.22
$region0: #{featnet_forward.22}
  #allocation0 [shape = 'u32[]', space=smem, size = 0x4, offset = 0x4, fixed_abs, tag = 'smem constant byte address 0x4 - core index']
  #allocation1 [shape = 'u32[72,128]{1,0:T(1,128)}', space=vmem, size = 0x9000, scoped, tag = 'internal scratch']
  #allocation2 [shape = 'f32[16,64]{1,0:T(8,128)}', space=vmem, size = 0x2000, scoped, tag = 'scratch operand']
  %s0 = inlined_call_operand.vmem [shape: bf16[16,2048], index: 0, kind: input, shape index: {}]
  %s1 = inlined_call_operand.vmem [shape: bf16[2048,64], index: 1, kind: input, shape index: {}]
  %s2 = inlined_call_operand.vmem [shape: f32[1,64], index: 2, kind: input, shape index: {}]
  %s3 = inlined_call_operand.vmem [shape: bf16[16,64], index: 3, kind: output, shape index: {}]
  %s4 = sld [smem:[#allocation0]]
  $region76: #{featnet_forward.22} parent=0
    _
  %s6 = ssub.s32 1, %s4
  %s7 = scalar_select 0, %s6, %s4
  $region1: #{featnet_forward.22} parent=0
    #allocation3 [shape = 'u8[32768]{0}', space=vmem, size = 0x8000, scoped, tag = 'input window, operand 0']
    loop: start=0, step=1, limit=6
    $region2: #{featnet_forward.22} parent=1 // loop_pre_header
      _
    $region3: #{featnet_forward.22} parent=1 // loop_header
      %s9 = sphi 0, %s13
      %p10 = scmp.ge.s32.totalorder %s9, 6
      %s16 = sphi 0, %s28
      %s17 = sphi 0, %s24
      %s18 = sphi 0, %s16
      %s19 = sphi 0, %s17
      %s20 = sphi 0, %s18
      %s21 = sphi 0, %s19
      %s33 = sphi 0, %s35
      %s36 = sphi 0, %s33
      %s37 = sphi 0, %s36
      %s53 = sphi 0, %s37
      %s59 = sphi 0, %s61
      %s62 = sphi 0, %s59
      %s63 = sphi 0, %s62
      %s79 = sphi 0, %s63
      %s83 = sphi 0, %s83
      %s85 = sphi 0, %s83
      %s86 = sphi 0, %s85
      %s100 = sphi 0, %s86
      %s106 = sphi 0, %s108
      %s109 = sphi 0, %s106
      %s110 = sphi 0, %s109
      %s126 = sphi 0, %s110
    $region4: #{featnet_forward.22} parent=1 // loop_header_branch
      %12 = sbr.rel (%p10) target = $region8
    $region5: #{featnet_forward.22} parent=1 // loop_body
      %s14 = ssub.s32 %s9, 1
      %s15 = ssub.s32 %s9, 2
      %s22 = sadd.s32 1, %s17
      %p23 = scmp.ge.s32.totalorder %s22, 4
      %s24 = scalar_select %p23, 0, %s22
      %s25 = sadd.s32 1, %s16
      %s26 = scalar_select %p23, %s25, %s16
      %p27 = scmp.ge.s32.totalorder %s26, 1
      %s28 = scalar_select %p27, 0, %s26
      %s29 = ssub.s32 %s16, %s28
      %s30 = ssub.s32 %s17, %s24
      %s31 = sor.u32 %s29, %s30
      %p32 = scmp.eq.s32.totalorder %s31, 0
      %s34 = sadd.s32 %s33, 1
      %s35 = scalar_select %p32, %s33, %s34
      %p38 = pneg %p32
      %p39 = scmp.eq.s32.totalorder %s9, 3
      %p40 = por %p38, %p39
      %p41 = scmp.ne.s32.totalorder %s33, %s36
      %p42 = scmp.eq.s32.totalorder %s9, 0
      %p43 = por %p41, %p42
      %p44 = scmp.ne.s32.totalorder %s33, %s36
      %p45 = scmp.eq.s32.totalorder %s14, 3
      %p46 = por %p44, %p45
      %p47 = scmp.ne.s32.totalorder %s36, %s37
      %p48 = scmp.eq.s32.totalorder %s14, 0
      %p49 = por %p47, %p48
      %p50 = scmp.ne.s32.totalorder %s36, %s37
      %p51 = scmp.eq.s32.totalorder %s15, 3
      %p52 = por %p50, %p51
      %p54 = scmp.ne.s32.totalorder %s37, %s53
      %p55 = scmp.eq.s32.totalorder %s15, 0
      %p56 = por %p54, %p55
      %s57 = ssub.s32 %s17, %s24
      %p58 = scmp.eq.s32.totalorder %s57, 0
      %s60 = sadd.s32 %s59, 1
      %s61 = scalar_select %p58, %s59, %s60
      %p64 = pneg %p58
      %p65 = scmp.eq.s32.totalorder %s9, 3
      %p66 = por %p64, %p65
      %p67 = scmp.ne.s32.totalorder %s59, %s62
      %p68 = scmp.eq.s32.totalorder %s9, 0
      %p69 = por %p67, %p68
      %p70 = scmp.ne.s32.totalorder %s59, %s62
      %p71 = scmp.eq.s32.totalorder %s14, 3
      %p72 = por %p70, %p71
      %p73 = scmp.ne.s32.totalorder %s62, %s63
      %p74 = scmp.eq.s32.totalorder %s14, 0
      %p75 = por %p73, %p74
      %p76 = scmp.ne.s32.totalorder %s62, %s63
      %p77 = scmp.eq.s32.totalorder %s15, 3
      %p78 = por %p76, %p77
      %p80 = scmp.ne.s32.totalorder %s63, %s79
      %p81 = scmp.eq.s32.totalorder %s15, 0
      %p82 = por %p80, %p81
      %s84 = sadd.s32 %s83, 1
      %p87 = scmp.eq.s32.totalorder %s9, 3
      %p88 = scmp.ne.s32.totalorder %s83, %s85
      %p89 = scmp.eq.s32.totalorder %s9, 0
      %p90 = por %p88, %p89
      %p91 = scmp.ne.s32.totalorder %s83, %s85
      %p92 = scmp.eq.s32.totalorder %s14, 3
      %p93 = por %p91, %p92
      %p94 = scmp.ne.s32.totalorder %s85, %s86
      %p95 = scmp.eq.s32.totalorder %s14, 0
      %p96 = por %p94, %p95
      %p97 = scmp.ne.s32.totalorder %s85, %s86
      %p98 = scmp.eq.s32.totalorder %s15, 3
      %p99 = por %p97, %p98
      %p101 = scmp.ne.s32.totalorder %s86, %s100
      %p102 = scmp.eq.s32.totalorder %s15, 0
      %p103 = por %p101, %p102
      %s104 = ssub.s32 %s16, %s28
      %p105 = scmp.eq.s32.totalorder %s104, 0
      %s107 = sadd.s32 %s106, 1
      %s108 = scalar_select %p105, %s106, %s107
      %p111 = pneg %p105
      %p112 = scmp.eq.s32.totalorder %s9, 3
      %p113 = por %p111, %p112
      %p114 = scmp.ne.s32.totalorder %s106, %s109
      %p115 = scmp.eq.s32.totalorder %s9, 0
      %p116 = por %p114, %p115
      %p117 = scmp.ne.s32.totalorder %s106, %s109
      %p118 = scmp.eq.s32.totalorder %s14, 3
      %p119 = por %p117, %p118
      %p120 = scmp.ne.s32.totalorder %s109, %s110
      %p121 = scmp.eq.s32.totalorder %s14, 0
      %p122 = por %p120, %p121
      %p123 = scmp.ne.s32.totalorder %s109, %s110
      %p124 = scmp.eq.s32.totalorder %s15, 3
      %p125 = por %p123, %p124
      %p127 = scmp.ne.s32.totalorder %s110, %s126
      %p128 = scmp.eq.s32.totalorder %s15, 0
      %p129 = por %p127, %p128
      %p130 = scmp.le.s32.totalorder 1, %s9
      %p131 = scmp.lt.s32.totalorder %s9, 5
      %p132 = pnand %p130, %p131
      %p133 = pneg %p132
      // Predicated region
      $region9: #{featnet_forward.22} parent=5 // pred_check
        _
      $region10: #{featnet_forward.22} parent=5 // pred_check_branch
        %135 = sbr.rel (%p132) target = $region12
      $region11: #{featnet_forward.22} parent=5 // pred_region
        %s136 = ssub.s32 %s9, 1
        // Predicated region
        $region13: #{featnet_forward.22} parent=11 // pred_check
          %p137 = pneg %p96
        $region14: #{featnet_forward.22} parent=11 // pred_check_branch
          %139 = sbr.rel (%p137) target = $region16
        $region15: #{featnet_forward.22} parent=11 // pred_region
          _
        $region16: #{featnet_forward.22} parent=11 // pred_fallthru
          _
      $region12: #{featnet_forward.22} parent=5 // pred_fallthru
        _
      %p140 = scmp.lt.s32.totalorder %s9, 4
      // Predicated region
      $region17: #{featnet_forward.22} parent=5 // pred_check
        %p141 = pneg %p140
      $region18: #{featnet_forward.22} parent=5 // pred_check_branch
        %143 = sbr.rel (%p141) target = $region20
      $region19: #{featnet_forward.22} parent=5 // pred_region
        // Predicated region
        $region21: #{featnet_forward.22} parent=19 // pred_check
          %p144 = pneg %p43
        $region22: #{featnet_forward.22} parent=19 // pred_check_branch
          %146 = sbr.rel (%p144) target = $region24
        $region23: #{featnet_forward.22} parent=19 // pred_region
          %s147 = sand.u32 %s33, 1
          %s148 = sand.u32 %s33, 1
          %s149 = smul.addr %s148, 32
          %s150 = scalar_lea.vmem [#allocation3], %s149
          %s151 = smul.u32 2, %s16
          %s152 = smul.u32 4, %s17
          %s153 = smul.addr %s151, 16
          %s154 = sadd.s32 %s152, %s153
          %s155 = smul.addr %s154, 4
          %s156 = scalar_lea.vmem %s0, %s155
          // Predicated region
          $region25: #{featnet_forward.22} parent=23 // pred_check
            _
          $region26: #{featnet_forward.22} parent=23 // pred_check_branch
            %158 = sbr.rel (0) target = $region28
          $region27: #{featnet_forward.22} parent=23 // pred_region
            // Predicated region
            $region29: #{featnet_forward.22} parent=27 // pred_check
              _
            $region30: #{featnet_forward.22} parent=27 // pred_check_branch
              %160 = sbr.rel (0) target = $region32
            $region31: #{featnet_forward.22} parent=27 // pred_region
              loop: start=0, step=1, limit=1
              $region33: #{featnet_forward.22} parent=31 // loop_pre_header
                _
              $region34: #{featnet_forward.22} parent=31 // loop_header
                %s162 = sphi 0, %s166
                %p163 = scmp.ge.s32.totalorder %s162, 1
                %s167 = sphi %s156, %s156
                %s168 = sphi %s150, %s150
              $region35: #{featnet_forward.22} parent=31 // loop_header_branch
                %165 = sbr.rel (%p163) target = $region39
              $region36: #{featnet_forward.22} parent=31 // loop_body
                %v169 = vld [vmem:[%s167] sm:$0xff]
                %170 = vst [vmem:[%s168] sm:$0xff] %v169
                %v171 = vld [vmem:[%s167 + $0x8] sm:$0xff]
                %172 = vst [vmem:[%s168 + $0x8] sm:$0xff] %v171
                %v173 = vld [vmem:[%s167 + $0x40] sm:$0xff]
                %174 = vst [vmem:[%s168 + $0x10] sm:$0xff] %v173
                %v175 = vld [vmem:[%s167 + $0x48] sm:$0xff]
                %176 = vst [vmem:[%s168 + $0x18] sm:$0xff] %v175
              $region37: #{featnet_forward.22} parent=31 // loop_footer
                %s166 = sadd.s32 1, %s162
              $region38: #{featnet_forward.22} parent=31 // loop_footer_branch
                %161 = sbr.rel target = $region34
              $region39: #{featnet_forward.22} parent=31 // loop_exit
                _
            $region32: #{featnet_forward.22} parent=27 // pred_fallthru
              _
            // Predicated region
            $region40: #{featnet_forward.22} parent=27 // pred_check
              _
            $region41: #{featnet_forward.22} parent=27 // pred_check_branch
              %178 = sbr.rel target = $region43
            $region42: #{featnet_forward.22} parent=27 // pred_region
              _
            $region43: #{featnet_forward.22} parent=27 // pred_fallthru
              _
          $region28: #{featnet_forward.22} parent=23 // pred_fallthru
            _
          %179 = vnop
        $region24: #{featnet_forward.22} parent=19 // pred_fallthru
          _
        // Predicated region
        $region44: #{featnet_forward.22} parent=19 // pred_check
          %p180 = pneg %p69
        $region45: #{featnet_forward.22} parent=19 // pred_check_branch
          %182 = sbr.rel (%p180) target = $region47
        $region46: #{featnet_forward.22} parent=19 // pred_region
          %s183 = smul.u32 64, %s17
          %p184 = scmp.lt.s32.totalorder %s183, 255
          %s185 = scalar_select %p184, %s183, 255
          %s186 = smul.addr %s185, 4
          %s187 = scalar_lea.vmem %s1, %s186
          %s188 = smul.u32 64, %s17
        $region47: #{featnet_forward.22} parent=19 // pred_fallthru
          _
      $region20: #{featnet_forward.22} parent=5 // pred_fallthru
        _
      %p189 = scmp.le.s32.totalorder 1, %s9
      %p190 = scmp.lt.s32.totalorder %s9, 5
      %p191 = pnand %p189, %p190
      %p192 = pneg %p191
      // Predicated region
      $region48: #{featnet_forward.22} parent=5 // pred_check
        _
      $region49: #{featnet_forward.22} parent=5 // pred_check_branch
        %194 = sbr.rel (%p191) target = $region51
      $region50: #{featnet_forward.22} parent=5 // pred_region
        %s195 = ssub.s32 %s9, 1
        %s196 = sand.u32 %s36, 1
        %s197 = sand.u32 %s36, 1
        %s198 = smul.addr %s197, 32
        %s199 = scalar_lea.vmem [#allocation3], %s198
        // Predicated region
        $region52: #{featnet_forward.22} parent=50 // pred_check
          %p200 = pneg %p49
        $region53: #{featnet_forward.22} parent=50 // pred_check_branch
          %202 = sbr.rel (%p200) target = $region55
        $region54: #{featnet_forward.22} parent=50 // pred_region
          _
        $region55: #{featnet_forward.22} parent=50 // pred_fallthru
          _
        %s203 = sand.u32 %s36, 1
        %s204 = sand.u32 %s36, 1
        %s205 = smul.addr %s204, 32
        %s206 = scalar_lea.vmem [#allocation3], %s205
        %p207 = pneg %p49
        %p208 = pneg %p46
        %s209 = smul.u32 64, %s19
        %p210 = scmp.lt.s32.totalorder %s209, 255
        %s211 = scalar_select %p210, %s209, 255
        %s212 = smul.addr %s211, 4
        %s213 = scalar_lea.vmem %s1, %s212
        %p214 = pneg %p75
        %p215 = pneg %p72
        %p216 = pneg %p96
        %p217 = pneg %p93
        %p218 = pneg %p122
        %p219 = pneg %p119
        %s220 = smul.u32 2, %s18
        %p221 = scmp.lt.s32.totalorder %s220, 1
        %s222 = scalar_select %p221, %s220, 1
        %s223 = smul.addr %s222, 4
        %s224 = scalar_lea.vmem %s3, %s223
        %s225 = smul.u32 2, %s18
        %s226 = smul.u32 4, %s19
        %s227 = smul.u32 64, %s19
        %p228 = scmp.lt.s32.totalorder %s227, 255
        %s229 = scalar_select %p228, %s227, 255
        %s230 = smul.addr %s229, 4
        %s231 = scalar_lea.vmem %s1, %s230
        %s232 = smul.u32 64, %s19
        %s233 = smul.u32 2, %s18
        %p234 = scmp.lt.s32.totalorder %s233, 1
        %s235 = scalar_select %p234, %s233, 1
        %s236 = smul.addr %s235, 4
        %s237 = scalar_lea.vmem %s3, %s236
        %s238 = smul.u32 2, %s18
        %p239 = scmp.eq.s32.totalorder %s19, 0
        // Predicated region
        $region56: #{featnet_forward.22} parent=50 // pred_check
          %p240 = pneg %p239
        $region57: #{featnet_forward.22} parent=50 // pred_check_branch
          %242 = sbr.rel (%p240) target = $region59
        $region58: #{featnet_forward.22} parent=50 // pred_region
          %vm243 = vcmask 523264
          %244 = vst.msk [vmem:[#allocation2] sm:$0xff] %vm243, 0.0
          %245 = vst.msk [vmem:[#allocation2 + $0x8] sm:$0xff] %vm243, 0.0
        $region59: #{featnet_forward.22} parent=50 // pred_fallthru
          _
        %v246 = vld [vmem:[#allocation2] sm:$0xff]
        %v247 = vld [vmem:[#allocation2 + $0x8] sm:$0xff]
        %v248 = vld [vmem:[%s199] sm:$0xff]
        %v249 = vld [vmem:[%s199 + $0x8] sm:$0xff]
        %v250 = vld [vmem:[%s199 + $0x10] sm:$0xff]
        %v251 = vld [vmem:[%s199 + $0x18] sm:$0xff]
        %v252 = vld [vmem:[%s231] sm:$0xf]
        %v253 = vld [vmem:[%s231 + $0x4] sm:$0xf]
        %v254 = vld [vmem:[%s231 + $0x8] sm:$0xf]
        %v255 = vld [vmem:[%s231 + $0xc] sm:$0xf]
        %v256 = vld [vmem:[%s231 + $0x10] sm:$0xf]
        %v257 = vld [vmem:[%s231 + $0x14] sm:$0xf]
        %v258 = vld [vmem:[%s231 + $0x18] sm:$0xf]
        %v259 = vld [vmem:[%s231 + $0x1c] sm:$0xf]
        %v260 = vld [vmem:[%s231 + $0x20] sm:$0xf]
        %v261 = vld [vmem:[%s231 + $0x24] sm:$0xf]
        %v262 = vld [vmem:[%s231 + $0x28] sm:$0xf]
        %v263 = vld [vmem:[%s231 + $0x2c] sm:$0xf]
        %v264 = vld [vmem:[%s231 + $0x30] sm:$0xf]
        %v265 = vld [vmem:[%s231 + $0x34] sm:$0xf]
        %v266 = vld [vmem:[%s231 + $0x38] sm:$0xf]
        %v267 = vld [vmem:[%s231 + $0x3c] sm:$0xf]
        %v268 = vld [vmem:[%s231 + $0x40] sm:$0xf]
        %v269 = vld [vmem:[%s231 + $0x44] sm:$0xf]
        %v270 = vld [vmem:[%s231 + $0x48] sm:$0xf]
        %v271 = vld [vmem:[%s231 + $0x4c] sm:$0xf]
        %v272 = vld [vmem:[%s231 + $0x50] sm:$0xf]
        %v273 = vld [vmem:[%s231 + $0x54] sm:$0xf]
        %v274 = vld [vmem:[%s231 + $0x58] sm:$0xf]
        %v275 = vld [vmem:[%s231 + $0x5c] sm:$0xf]
        %v276 = vld [vmem:[%s231 + $0x60] sm:$0xf]
        %v277 = vld [vmem:[%s231 + $0x64] sm:$0xf]
        %v278 = vld [vmem:[%s231 + $0x68] sm:$0xf]
        %v279 = vld [vmem:[%s231 + $0x6c] sm:$0xf]
        %v280 = vld [vmem:[%s231 + $0x70] sm:$0xf]
        %v281 = vld [vmem:[%s231 + $0x74] sm:$0xf]
        %v282 = vld [vmem:[%s231 + $0x78] sm:$0xf]
        %v283 = vld [vmem:[%s231 + $0x7c] sm:$0xf]
        %v284 = vld [vmem:[%s231 + $0x80] sm:$0xf]
        %v285 = vld [vmem:[%s231 + $0x84] sm:$0xf]
        %v286 = vld [vmem:[%s231 + $0x88] sm:$0xf]
        %v287 = vld [vmem:[%s231 + $0x8c] sm:$0xf]
        %v288 = vld [vmem:[%s231 + $0x90] sm:$0xf]
        %v289 = vld [vmem:[%s231 + $0x94] sm:$0xf]
        %v290 = vld [vmem:[%s231 + $0x98] sm:$0xf]
        %v291 = vld [vmem:[%s231 + $0x9c] sm:$0xf]
        %v292 = vld [vmem:[%s231 + $0xa0] sm:$0xf]
        %v293 = vld [vmem:[%s231 + $0xa4] sm:$0xf]
        %v294 = vld [vmem:[%s231 + $0xa8] sm:$0xf]
        %v295 = vld [vmem:[%s231 + $0xac] sm:$0xf]
        %v296 = vld [vmem:[%s231 + $0xb0] sm:$0xf]
        %v297 = vld [vmem:[%s231 + $0xb4] sm:$0xf]
        %v298 = vld [vmem:[%s231 + $0xb8] sm:$0xf]
        %v299 = vld [vmem:[%s231 + $0xbc] sm:$0xf]
        %v300 = vld [vmem:[%s231 + $0xc0] sm:$0xf]
        %v301 = vld [vmem:[%s231 + $0xc4] sm:$0xf]
        %v302 = vld [vmem:[%s231 + $0xc8] sm:$0xf]
        %v303 = vld [vmem:[%s231 + $0xcc] sm:$0xf]
        %v304 = vld [vmem:[%s231 + $0xd0] sm:$0xf]
        %v305 = vld [vmem:[%s231 + $0xd4] sm:$0xf]
        %v306 = vld [vmem:[%s231 + $0xd8] sm:$0xf]
        %v307 = vld [vmem:[%s231 + $0xdc] sm:$0xf]
        %v308 = vld [vmem:[%s231 + $0xe0] sm:$0xf]
        %v309 = vld [vmem:[%s231 + $0xe4] sm:$0xf]
        %v310 = vld [vmem:[%s231 + $0xe8] sm:$0xf]
        %v311 = vld [vmem:[%s231 + $0xec] sm:$0xf]
        %v312 = vld [vmem:[%s231 + $0xf0] sm:$0xf]
        %v313 = vld [vmem:[%s231 + $0xf4] sm:$0xf]
        %v314 = vld [vmem:[%s231 + $0xf8] sm:$0xf]
        %v315 = vld [vmem:[%s231 + $0xfc] sm:$0xf]
        %v320 = vunpack.c.l.b16 %v248
        %v321 = vunpack.c.h.b16 %v248
        %v322 = vunpack.c.l.b16 %v249
        %v323 = vunpack.c.h.b16 %v249
        %v324 = vunpack.c.l.b16 %v250
        %v325 = vunpack.c.h.b16 %v250
        %v326 = vunpack.c.l.b16 %v251
        %v327 = vunpack.c.h.b16 %v251
        %v328 = vpack.c.b16 %v324, %v320
        %v329 = vpack.c.b16 %v325, %v321
        %v330 = vpack.c.b16 %v326, %v322
        %v331 = vpack.c.b16 %v327, %v323
        %v400 = vunpack.c.l.b16 %v252
        %v401 = vunpack.c.l.b16 %v253
        %v402 = vunpack.c.l.b16 %v254
        %v403 = vunpack.c.l.b16 %v255
        %v404 = vunpack.c.l.b16 %v256
        %v405 = vunpack.c.l.b16 %v257
        %v406 = vunpack.c.l.b16 %v258
        %v407 = vunpack.c.l.b16 %v259
        %v408 = vunpack.c.l.b16 %v260
        %v409 = vunpack.c.l.b16 %v261
        %v410 = vunpack.c.l.b16 %v262
        %v411 = vunpack.c.l.b16 %v263
        %v412 = vunpack.c.l.b16 %v264
        %v413 = vunpack.c.l.b16 %v265
        %v414 = vunpack.c.l.b16 %v266
        %v415 = vunpack.c.l.b16 %v267
        %v416 = vunpack.c.l.b16 %v268
        %v417 = vunpack.c.l.b16 %v269
        %v418 = vunpack.c.l.b16 %v270
        %v419 = vunpack.c.l.b16 %v271
        %v420 = vunpack.c.l.b16 %v272
        %v421 = vunpack.c.l.b16 %v273
        %v422 = vunpack.c.l.b16 %v274
        %v423 = vunpack.c.l.b16 %v275
        %v424 = vunpack.c.l.b16 %v276
        %v425 = vunpack.c.l.b16 %v277
        %v426 = vunpack.c.l.b16 %v278
        %v427 = vunpack.c.l.b16 %v279
        %v428 = vunpack.c.l.b16 %v280
        %v429 = vunpack.c.l.b16 %v281
        %v430 = vunpack.c.l.b16 %v282
        %v431 = vunpack.c.l.b16 %v283
        %v432 = vunpack.c.l.b16 %v284
        %v433 = vunpack.c.l.b16 %v285
        %v434 = vunpack.c.l.b16 %v286
        %v435 = vunpack.c.l.b16 %v287
        %v436 = vunpack.c.l.b16 %v288
        %v437 = vunpack.c.l.b16 %v289
        %v438 = vunpack.c.l.b16 %v290
        %v439 = vunpack.c.l.b16 %v291
        %v440 = vunpack.c.l.b16 %v292
        %v441 = vunpack.c.l.b16 %v293
        %v442 = vunpack.c.l.b16 %v294
        %v443 = vunpack.c.l.b16 %v295
        %v444 = vunpack.c.l.b16 %v296
        %v445 = vunpack.c.l.b16 %v297
        %v446 = vunpack.c.l.b16 %v298
        %v447 = vunpack.c.l.b16 %v299
        %v448 = vunpack.c.l.b16 %v300
        %v449 = vunpack.c.l.b16 %v301
        %v450 = vunpack.c.l.b16 %v302
        %v451 = vunpack.c.l.b16 %v303
        %v452 = vunpack.c.l.b16 %v304
        %v453 = vunpack.c.l.b16 %v305
        %v454 = vunpack.c.l.b16 %v306
        %v455 = vunpack.c.l.b16 %v307
        %v456 = vunpack.c.l.b16 %v308
        %v457 = vunpack.c.l.b16 %v309
        %v458 = vunpack.c.l.b16 %v310
        %v459 = vunpack.c.l.b16 %v311
        %v460 = vunpack.c.l.b16 %v312
        %v461 = vunpack.c.l.b16 %v313
        %v462 = vunpack.c.l.b16 %v314
        %v463 = vunpack.c.l.b16 %v315
        %v464 = vpack.c.b16 %v401, %v400
        %v465 = vpack.c.b16 %v403, %v402
        %v466 = vpack.c.b16 %v405, %v404
        %v467 = vpack.c.b16 %v407, %v406
        %v468 = vpack.c.b16 %v409, %v408
        %v469 = vpack.c.b16 %v411, %v410
        %v470 = vpack.c.b16 %v413, %v412
        %v471 = vpack.c.b16 %v415, %v414
        %v472 = vpack.c.b16 %v417, %v416
        %v473 = vpack.c.b16 %v419, %v418
        %v474 = vpack.c.b16 %v421, %v420
        %v475 = vpack.c.b16 %v423, %v422
        %v476 = vpack.c.b16 %v425, %v424
        %v477 = vpack.c.b16 %v427, %v426
        %v478 = vpack.c.b16 %v429, %v428
        %v479 = vpack.c.b16 %v431, %v430
        %v480 = vpack.c.b16 %v433, %v432
        %v481 = vpack.c.b16 %v435, %v434
        %v482 = vpack.c.b16 %v437, %v436
        %v483 = vpack.c.b16 %v439, %v438
        %v484 = vpack.c.b16 %v441, %v440
        %v485 = vpack.c.b16 %v443, %v442
        %v486 = vpack.c.b16 %v445, %v444
        %v487 = vpack.c.b16 %v447, %v446
        %v488 = vpack.c.b16 %v449, %v448
        %v489 = vpack.c.b16 %v451, %v450
        %v490 = vpack.c.b16 %v453, %v452
        %v491 = vpack.c.b16 %v455, %v454
        %v492 = vpack.c.b16 %v457, %v456
        %v493 = vpack.c.b16 %v459, %v458
        %v494 = vpack.c.b16 %v461, %v460
        %v495 = vpack.c.b16 %v463, %v462
        %528 = vmatpush.bf16.msra.mxu0 %v471
        %529 = vmatpush.bf16.msra.mxu0 %v470
        %530 = vmatpush.bf16.msra.mxu0 %v469
        %531 = vmatpush.bf16.msra.mxu0 %v468
        %532 = vmatpush.bf16.msra.mxu0 %v467
        %533 = vmatpush.bf16.msra.mxu0 %v466
        %534 = vmatpush.bf16.msra.mxu0 %v465
        %535 = vmatpush.bf16.msra.mxu0 %v464
        %536 = vmatmul.bf16.gmra.mxu0 %v328
        %v537 = vpop.f32.mrf.mxu0
        %v538 = vadd.f32 0.0, %v537
        %v539 = vpop.f32.mrf.mxu0
        %v540 = vadd.f32 0.0, %v539
        %541 = vdwg.mxu0
        %542 = vmatpush.bf16.msra.mxu0 %v479
        %543 = vmatpush.bf16.msra.mxu0 %v478
        %544 = vmatpush.bf16.msra.mxu0 %v477
        %545 = vmatpush.bf16.msra.mxu0 %v476
        %546 = vmatpush.bf16.msra.mxu0 %v475
        %547 = vmatpush.bf16.msra.mxu0 %v474
        %548 = vmatpush.bf16.msra.mxu0 %v473
        %549 = vmatpush.bf16.msra.mxu0 %v472
        %550 = vmatmul.bf16.gmra.mxu0 %v329
        %v551 = vpop.f32.mrf.mxu0
        %v552 = vadd.f32 %v538, %v551
        %v553 = vpop.f32.mrf.mxu0
        %v554 = vadd.f32 %v540, %v553
        %555 = vdwg.mxu0
        %556 = vmatpush.bf16.msra.mxu0 %v487
        %557 = vmatpush.bf16.msra.mxu0 %v486
        %558 = vmatpush.bf16.msra.mxu0 %v485
        %559 = vmatpush.bf16.msra.mxu0 %v484
        %560 = vmatpush.bf16.msra.mxu0 %v483
        %561 = vmatpush.bf16.msra.mxu0 %v482
        %562 = vmatpush.bf16.msra.mxu0 %v481
        %563 = vmatpush.bf16.msra.mxu0 %v480
        %564 = vmatmul.bf16.gmra.mxu0 %v330
        %v565 = vpop.f32.mrf.mxu0
        %v566 = vadd.f32 %v552, %v565
        %v567 = vpop.f32.mrf.mxu0
        %v568 = vadd.f32 %v554, %v567
        %569 = vdwg.mxu0
        %570 = vmatpush.bf16.msra.mxu0 %v495
        %571 = vmatpush.bf16.msra.mxu0 %v494
        %572 = vmatpush.bf16.msra.mxu0 %v493
        %573 = vmatpush.bf16.msra.mxu0 %v492
        %574 = vmatpush.bf16.msra.mxu0 %v491
        %575 = vmatpush.bf16.msra.mxu0 %v490
        %576 = vmatpush.bf16.msra.mxu0 %v489
        %577 = vmatpush.bf16.msra.mxu0 %v488
        %578 = vmatmul.bf16.gmra.mxu0 %v331
        %v579 = vpop.f32.mrf.mxu0
        %v580 = vadd.f32 %v566, %v579
        %v581 = vpop.f32.mrf.mxu0
        %v582 = vadd.f32 %v568, %v581
        %583 = vdwg.mxu0
        %v584 = vadd.f32 %v246, %v580
        %v585 = vadd.f32 %v247, %v582
        %vm586 = vcmask 523264
        %587 = vst.msk [vmem:[#allocation2] sm:$0xff] %vm586, %v584
        %588 = vst.msk [vmem:[#allocation2 + $0x8] sm:$0xff] %vm586, %v585
        %p589 = scmp.eq.s32.totalorder %s19, 3
        // Predicated region
        $region60: #{featnet_forward.22} parent=50 // pred_check
          %p590 = pneg %p589
        $region61: #{featnet_forward.22} parent=50 // pred_check_branch
          %592 = sbr.rel (%p590) target = $region63
        $region62: #{featnet_forward.22} parent=50 // pred_region
          %v593 = vld [vmem:[#allocation2] sm:$0xff]
          %v594 = vld [vmem:[#allocation2 + $0x8] sm:$0xff]
          %v595 = vld [vmem:[%s2] sm:$0x1]
          %v597 = vperm.slane %v595, 0
          %v599 = vadd.f32 %v593, %v597
          %v600 = vadd.f32 %v594, %v597
          %vm601 = vcmp.ge.f32.partialorder %v599, 0.0
          %vm602 = vcmp.ge.f32.partialorder %v600, 0.0
          %v603 = vmul.f32 %v599, 0.01
          %v604 = vmul.f32 %v600, 0.01
          %v605 = vsel %vm601, %v599, %v603
          %v606 = vsel %vm602, %v600, %v604
          %v607 = vpack.c.bf16 %v605, %v605
          %v608 = vpack.c.bf16 %v606, %v606
          %vm609 = vcmask 519168
          %610 = vst.msk [vmem:[%s237] sm:$0xf] %vm609, %v607
          %611 = vst.msk [vmem:[%s237 + $0x4] sm:$0xf] %vm609, %v608
        $region63: #{featnet_forward.22} parent=50 // pred_fallthru
          _
        %s612 = smul.u32 2, %s18
        %p613 = scmp.lt.s32.totalorder %s612, 1
        %s614 = scalar_select %p613, %s612, 1
        %s615 = smul.addr %s614, 4
        %s616 = scalar_lea.vmem %s3, %s615
        // Predicated region
        $region64: #{featnet_forward.22} parent=50 // pred_check
          %p617 = pneg %p119
        $region65: #{featnet_forward.22} parent=50 // pred_check_branch
          %619 = sbr.rel (%p617) target = $region67
        $region66: #{featnet_forward.22} parent=50 // pred_region
          %s620 = smul.u32 2, %s18
        $region67: #{featnet_forward.22} parent=50 // pred_fallthru
          _
        // Predicated region
        $region68: #{featnet_forward.22} parent=50 // pred_check
          %p621 = pneg %p119
        $region69: #{featnet_forward.22} parent=50 // pred_check_branch
          %623 = sbr.rel (%p621) target = $region71
        $region70: #{featnet_forward.22} parent=50 // pred_region
          %s624 = smul.u32 2, %s18
          %p625 = scmp.lt.s32.totalorder %s624, 1
          %s626 = scalar_select %p625, %s624, 1
          %s627 = smul.addr %s626, 4
          %s628 = scalar_lea.vmem %s3, %s627
        $region71: #{featnet_forward.22} parent=50 // pred_fallthru
          _
      $region51: #{featnet_forward.22} parent=5 // pred_fallthru
        _
      %p629 = scmp.le.s32.totalorder 2, %s9
      // Predicated region
      $region72: #{featnet_forward.22} parent=5 // pred_check
        %p630 = pneg %p629
      $region73: #{featnet_forward.22} parent=5 // pred_check_branch
        %632 = sbr.rel (%p630) target = $region75
      $region74: #{featnet_forward.22} parent=5 // pred_region
        %s633 = ssub.s32 %s9, 2
      $region75: #{featnet_forward.22} parent=5 // pred_fallthru
        _
    $region6: #{featnet_forward.22} parent=1 // loop_footer
      %s13 = sadd.s32 1, %s9
    $region7: #{featnet_forward.22} parent=1 // loop_footer_branch
      %8 = sbr.rel target = $region3
    $region8: #{featnet_forward.22} parent=1 // loop_exit
      _

// kernel: featnet_forward.23
$region0: #{featnet_forward.23}
  #allocation0 [shape = 'u32[]', space=smem, size = 0x4, offset = 0x4, fixed_abs, tag = 'smem constant byte address 0x4 - core index']
  #allocation1 [shape = 'u32[72,128]{1,0:T(1,128)}', space=vmem, size = 0x9000, scoped, tag = 'internal scratch']
  #allocation2 [shape = 'f32[8,128]{1,0:T(8,128)}', space=vmem, size = 0x1000, scoped, tag = 'scratch operand']
  %s0 = inlined_call_operand.vmem [shape: bf16[8,4096], index: 0, kind: input, shape index: {}]
  %s1 = inlined_call_operand.vmem [shape: bf16[4096,128], index: 1, kind: input, shape index: {}]
  %s2 = inlined_call_operand.vmem [shape: f32[1,128], index: 2, kind: input, shape index: {}]
  %s3 = inlined_call_operand.vmem [shape: bf16[8,128], index: 3, kind: output, shape index: {}]
  %s4 = sld [smem:[#allocation0]]
  $region53: #{featnet_forward.23} parent=0
    _
  %s6 = ssub.s32 1, %s4
  %s7 = scalar_select 0, %s6, %s4
  loop: start=0, step=1, limit=10
  $region2: #{featnet_forward.23} parent=0 // loop_pre_header
    _
  $region3: #{featnet_forward.23} parent=0 // loop_header
    %s9 = sphi 0, %s13
    %p10 = scmp.ge.s32.totalorder %s9, 10
    %s16 = sphi 0, %s28
    %s17 = sphi 0, %s24
    %s18 = sphi 0, %s16
    %s19 = sphi 0, %s17
    %s20 = sphi 0, %s18
    %s21 = sphi 0, %s19
    %s33 = sphi 0, %s35
    %s36 = sphi 0, %s33
    %s37 = sphi 0, %s36
    %s53 = sphi 0, %s37
    %s59 = sphi 0, %s61
    %s62 = sphi 0, %s59
    %s63 = sphi 0, %s62
    %s79 = sphi 0, %s63
    %s83 = sphi 0, %s83
    %s85 = sphi 0, %s83
    %s86 = sphi 0, %s85
    %s100 = sphi 0, %s86
    %s106 = sphi 0, %s108
    %s109 = sphi 0, %s106
    %s110 = sphi 0, %s109
    %s126 = sphi 0, %s110
  $region4: #{featnet_forward.23} parent=0 // loop_header_branch
    %12 = sbr.rel (%p10) target = $region8
  $region5: #{featnet_forward.23} parent=0 // loop_body
    %s14 = ssub.s32 %s9, 1
    %s15 = ssub.s32 %s9, 2
    %s22 = sadd.s32 1, %s17
    %p23 = scmp.ge.s32.totalorder %s22, 8
    %s24 = scalar_select %p23, 0, %s22
    %s25 = sadd.s32 1, %s16
    %s26 = scalar_select %p23, %s25, %s16
    %p27 = scmp.ge.s32.totalorder %s26, 1
    %s28 = scalar_select %p27, 0, %s26
    %s29 = ssub.s32 %s16, %s28
    %s30 = ssub.s32 %s17, %s24
    %s31 = sor.u32 %s29, %s30
    %p32 = scmp.eq.s32.totalorder %s31, 0
    %s34 = sadd.s32 %s33, 1
    %s35 = scalar_select %p32, %s33, %s34
    %p38 = pneg %p32
    %p39 = scmp.eq.s32.totalorder %s9, 7
    %p40 = por %p38, %p39
    %p41 = scmp.ne.s32.totalorder %s33, %s36
    %p42 = scmp.eq.s32.totalorder %s9, 0
    %p43 = por %p41, %p42
    %p44 = scmp.ne.s32.totalorder %s33, %s36
    %p45 = scmp.eq.s32.totalorder %s14, 7
    %p46 = por %p44, %p45
    %p47 = scmp.ne.s32.totalorder %s36, %s37
    %p48 = scmp.eq.s32.totalorder %s14, 0
    %p49 = por %p47, %p48
    %p50 = scmp.ne.s32.totalorder %s36, %s37
    %p51 = scmp.eq.s32.totalorder %s15, 7
    %p52 = por %p50, %p51
    %p54 = scmp.ne.s32.totalorder %s37, %s53
    %p55 = scmp.eq.s32.totalorder %s15, 0
    %p56 = por %p54, %p55
    %s57 = ssub.s32 %s17, %s24
    %p58 = scmp.eq.s32.totalorder %s57, 0
    %s60 = sadd.s32 %s59, 1
    %s61 = scalar_select %p58, %s59, %s60
    %p64 = pneg %p58
    %p65 = scmp.eq.s32.totalorder %s9, 7
    %p66 = por %p64, %p65
    %p67 = scmp.ne.s32.totalorder %s59, %s62
    %p68 = scmp.eq.s32.totalorder %s9, 0
    %p69 = por %p67, %p68
    %p70 = scmp.ne.s32.totalorder %s59, %s62
    %p71 = scmp.eq.s32.totalorder %s14, 7
    %p72 = por %p70, %p71
    %p73 = scmp.ne.s32.totalorder %s62, %s63
    %p74 = scmp.eq.s32.totalorder %s14, 0
    %p75 = por %p73, %p74
    %p76 = scmp.ne.s32.totalorder %s62, %s63
    %p77 = scmp.eq.s32.totalorder %s15, 7
    %p78 = por %p76, %p77
    %p80 = scmp.ne.s32.totalorder %s63, %s79
    %p81 = scmp.eq.s32.totalorder %s15, 0
    %p82 = por %p80, %p81
    %s84 = sadd.s32 %s83, 1
    %p87 = scmp.eq.s32.totalorder %s9, 7
    %p88 = scmp.ne.s32.totalorder %s83, %s85
    %p89 = scmp.eq.s32.totalorder %s9, 0
    %p90 = por %p88, %p89
    %p91 = scmp.ne.s32.totalorder %s83, %s85
    %p92 = scmp.eq.s32.totalorder %s14, 7
    %p93 = por %p91, %p92
    %p94 = scmp.ne.s32.totalorder %s85, %s86
    %p95 = scmp.eq.s32.totalorder %s14, 0
    %p96 = por %p94, %p95
    %p97 = scmp.ne.s32.totalorder %s85, %s86
    %p98 = scmp.eq.s32.totalorder %s15, 7
    %p99 = por %p97, %p98
    %p101 = scmp.ne.s32.totalorder %s86, %s100
    %p102 = scmp.eq.s32.totalorder %s15, 0
    %p103 = por %p101, %p102
    %s104 = ssub.s32 %s16, %s28
    %p105 = scmp.eq.s32.totalorder %s104, 0
    %s107 = sadd.s32 %s106, 1
    %s108 = scalar_select %p105, %s106, %s107
    %p111 = pneg %p105
    %p112 = scmp.eq.s32.totalorder %s9, 7
    %p113 = por %p111, %p112
    %p114 = scmp.ne.s32.totalorder %s106, %s109
    %p115 = scmp.eq.s32.totalorder %s9, 0
    %p116 = por %p114, %p115
    %p117 = scmp.ne.s32.totalorder %s106, %s109
    %p118 = scmp.eq.s32.totalorder %s14, 7
    %p119 = por %p117, %p118
    %p120 = scmp.ne.s32.totalorder %s109, %s110
    %p121 = scmp.eq.s32.totalorder %s14, 0
    %p122 = por %p120, %p121
    %p123 = scmp.ne.s32.totalorder %s109, %s110
    %p124 = scmp.eq.s32.totalorder %s15, 7
    %p125 = por %p123, %p124
    %p127 = scmp.ne.s32.totalorder %s110, %s126
    %p128 = scmp.eq.s32.totalorder %s15, 0
    %p129 = por %p127, %p128
    %p130 = scmp.le.s32.totalorder 1, %s9
    %p131 = scmp.lt.s32.totalorder %s9, 9
    %p132 = pnand %p130, %p131
    %p133 = pneg %p132
    // Predicated region
    $region9: #{featnet_forward.23} parent=5 // pred_check
      _
    $region10: #{featnet_forward.23} parent=5 // pred_check_branch
      %135 = sbr.rel (%p132) target = $region12
    $region11: #{featnet_forward.23} parent=5 // pred_region
      %s136 = ssub.s32 %s9, 1
      // Predicated region
      $region13: #{featnet_forward.23} parent=11 // pred_check
        %p137 = pneg %p96
      $region14: #{featnet_forward.23} parent=11 // pred_check_branch
        %139 = sbr.rel (%p137) target = $region16
      $region15: #{featnet_forward.23} parent=11 // pred_region
        _
      $region16: #{featnet_forward.23} parent=11 // pred_fallthru
        _
    $region12: #{featnet_forward.23} parent=5 // pred_fallthru
      _
    %p140 = scmp.lt.s32.totalorder %s9, 8
    // Predicated region
    $region17: #{featnet_forward.23} parent=5 // pred_check
      %p141 = pneg %p140
    $region18: #{featnet_forward.23} parent=5 // pred_check_branch
      %143 = sbr.rel (%p141) target = $region20
    $region19: #{featnet_forward.23} parent=5 // pred_region
      // Predicated region
      $region21: #{featnet_forward.23} parent=19 // pred_check
        %p144 = pneg %p43
      $region22: #{featnet_forward.23} parent=19 // pred_check_branch
        %146 = sbr.rel (%p144) target = $region24
      $region23: #{featnet_forward.23} parent=19 // pred_region
        %s147 = smul.u32 4, %s17
        %p148 = scmp.lt.s32.totalorder %s16, 0
        %s149 = scalar_select %p148, %s16, 0
        %p150 = scmp.lt.s32.totalorder %s147, 31
        %s151 = scalar_select %p150, %s147, 31
        %s152 = smul.addr %s149, 32
        %s153 = sadd.s32 %s151, %s152
        %s154 = smul.addr %s153, 4
        %s155 = scalar_lea.vmem %s0, %s154
        %s156 = smul.u32 4, %s17
      $region24: #{featnet_forward.23} parent=19 // pred_fallthru
        _
      // Predicated region
      $region25: #{featnet_forward.23} parent=19 // pred_check
        %p157 = pneg %p69
      $region26: #{featnet_forward.23} parent=19 // pred_check_branch
        %159 = sbr.rel (%p157) target = $region28
      $region27: #{featnet_forward.23} parent=19 // pred_region
        %s160 = smul.u32 64, %s17
        %p161 = scmp.lt.s32.totalorder %s160, 511
        %s162 = scalar_select %p161, %s160, 511
        %s163 = smul.addr %s162, 4
        %s164 = scalar_lea.vmem %s1, %s163
        %s165 = smul.u32 64, %s17
      $region28: #{featnet_forward.23} parent=19 // pred_fallthru
        _
    $region20: #{featnet_forward.23} parent=5 // pred_fallthru
      _
    %p166 = scmp.le.s32.totalorder 1, %s9
    %p167 = scmp.lt.s32.totalorder %s9, 9
    %p168 = pnand %p166, %p167
    %p169 = pneg %p168
    // Predicated region
    $region29: #{featnet_forward.23} parent=5 // pred_check
      _
    $region30: #{featnet_forward.23} parent=5 // pred_check_branch
      %171 = sbr.rel (%p168) target = $region32
    $region31: #{featnet_forward.23} parent=5 // pred_region
      %s172 = ssub.s32 %s9, 1
      %s173 = smul.u32 4, %s19
      %p174 = scmp.lt.s32.totalorder %s18, 0
      %s175 = scalar_select %p174, %s18, 0
      %p176 = scmp.lt.s32.totalorder %s173, 31
      %s177 = scalar_select %p176, %s173, 31
      %s178 = smul.addr %s175, 32
      %s179 = sadd.s32 %s177, %s178
      %s180 = smul.addr %s179, 4
      %s181 = scalar_lea.vmem %s0, %s180
      %p182 = pneg %p49
      %p183 = pneg %p46
      %s184 = smul.u32 64, %s19
      %p185 = scmp.lt.s32.totalorder %s184, 511
      %s186 = scalar_select %p185, %s184, 511
      %s187 = smul.addr %s186, 4
      %s188 = scalar_lea.vmem %s1, %s187
      %p189 = pneg %p75
      %p190 = pneg %p72
      %p191 = pneg %p96
      %p192 = pneg %p93
      %p193 = pneg %p122
      %p194 = pneg %p119
      %p195 = scmp.lt.s32.totalorder %s18, 0
      %s196 = scalar_select %p195, %s18, 0
      %s197 = smul.addr %s196, 4
      %s198 = scalar_lea.vmem %s3, %s197
      %s199 = smul.u32 4, %s19
      %p200 = scmp.lt.s32.totalorder %s18, 0
      %s201 = scalar_select %p200, %s18, 0
      %p202 = scmp.lt.s32.totalorder %s199, 31
      %s203 = scalar_select %p202, %s199, 31
      %s204 = smul.addr %s201, 32
      %s205 = sadd.s32 %s203, %s204
      %s206 = smul.addr %s205, 4
      %s207 = scalar_lea.vmem %s0, %s206
      %s208 = smul.u32 4, %s19
      %s209 = smul.u32 64, %s19
      %p210 = scmp.lt.s32.totalorder %s209, 511
      %s211 = scalar_select %p210, %s209, 511
      %s212 = smul.addr %s211, 4
      %s213 = scalar_lea.vmem %s1, %s212
      %s214 = smul.u32 64, %s19
      %p215 = scmp.lt.s32.totalorder %s18, 0
      %s216 = scalar_select %p215, %s18, 0
      %s217 = smul.addr %s216, 4
      %s218 = scalar_lea.vmem %s3, %s217
      %p219 = scmp.eq.s32.totalorder %s19, 0
      // Predicated region
      $region33: #{featnet_forward.23} parent=31 // pred_check
        %p220 = pneg %p219
      $region34: #{featnet_forward.23} parent=31 // pred_check_branch
        %222 = sbr.rel (%p220) target = $region36
      $region35: #{featnet_forward.23} parent=31 // pred_region
        %223 = vst [vmem:[#allocation2] sm:$0xff] 0.0
      $region36: #{featnet_forward.23} parent=31 // pred_fallthru
        _
      %v224 = vld [vmem:[#allocation2] sm:$0xff]
      %v225 = vld [vmem:[%s207] sm:$0xff]
      %v226 = vld [vmem:[%s207 + $0x8] sm:$0xff]
      %v227 = vld [vmem:[%s213] sm:$0xf]
      %v228 = vld [vmem:[%s213 + $0x4] sm:$0xf]
      %v229 = vld [vmem:[%s213 + $0x8] sm:$0xf]
      %v230 = vld [vmem:[%s213 + $0xc] sm:$0xf]
      %v231 = vld [vmem:[%s213 + $0x10] sm:$0xf]
      %v232 = vld [vmem:[%s213 + $0x14] sm:$0xf]
      %v233 = vld [vmem:[%s213 + $0x18] sm:$0xf]
      %v234 = vld [vmem:[%s213 + $0x1c] sm:$0xf]
      %v235 = vld [vmem:[%s213 + $0x20] sm:$0xf]
      %v236 = vld [vmem:[%s213 + $0x24] sm:$0xf]
      %v237 = vld [vmem:[%s213 + $0x28] sm:$0xf]
      %v238 = vld [vmem:[%s213 + $0x2c] sm:$0xf]
      %v239 = vld [vmem:[%s213 + $0x30] sm:$0xf]
      %v240 = vld [vmem:[%s213 + $0x34] sm:$0xf]
      %v241 = vld [vmem:[%s213 + $0x38] sm:$0xf]
      %v242 = vld [vmem:[%s213 + $0x3c] sm:$0xf]
      %v243 = vld [vmem:[%s213 + $0x40] sm:$0xf]
      %v244 = vld [vmem:[%s213 + $0x44] sm:$0xf]
      %v245 = vld [vmem:[%s213 + $0x48] sm:$0xf]
      %v246 = vld [vmem:[%s213 + $0x4c] sm:$0xf]
      %v247 = vld [vmem:[%s213 + $0x50] sm:$0xf]
      %v248 = vld [vmem:[%s213 + $0x54] sm:$0xf]
      %v249 = vld [vmem:[%s213 + $0x58] sm:$0xf]
      %v250 = vld [vmem:[%s213 + $0x5c] sm:$0xf]
      %v251 = vld [vmem:[%s213 + $0x60] sm:$0xf]
      %v252 = vld [vmem:[%s213 + $0x64] sm:$0xf]
      %v253 = vld [vmem:[%s213 + $0x68] sm:$0xf]
      %v254 = vld [vmem:[%s213 + $0x6c] sm:$0xf]
      %v255 = vld [vmem:[%s213 + $0x70] sm:$0xf]
      %v256 = vld [vmem:[%s213 + $0x74] sm:$0xf]
      %v257 = vld [vmem:[%s213 + $0x78] sm:$0xf]
      %v258 = vld [vmem:[%s213 + $0x7c] sm:$0xf]
      %v259 = vld [vmem:[%s213 + $0x80] sm:$0xf]
      %v260 = vld [vmem:[%s213 + $0x84] sm:$0xf]
      %v261 = vld [vmem:[%s213 + $0x88] sm:$0xf]
      %v262 = vld [vmem:[%s213 + $0x8c] sm:$0xf]
      %v263 = vld [vmem:[%s213 + $0x90] sm:$0xf]
      %v264 = vld [vmem:[%s213 + $0x94] sm:$0xf]
      %v265 = vld [vmem:[%s213 + $0x98] sm:$0xf]
      %v266 = vld [vmem:[%s213 + $0x9c] sm:$0xf]
      %v267 = vld [vmem:[%s213 + $0xa0] sm:$0xf]
      %v268 = vld [vmem:[%s213 + $0xa4] sm:$0xf]
      %v269 = vld [vmem:[%s213 + $0xa8] sm:$0xf]
      %v270 = vld [vmem:[%s213 + $0xac] sm:$0xf]
      %v271 = vld [vmem:[%s213 + $0xb0] sm:$0xf]
      %v272 = vld [vmem:[%s213 + $0xb4] sm:$0xf]
      %v273 = vld [vmem:[%s213 + $0xb8] sm:$0xf]
      %v274 = vld [vmem:[%s213 + $0xbc] sm:$0xf]
      %v275 = vld [vmem:[%s213 + $0xc0] sm:$0xf]
      %v276 = vld [vmem:[%s213 + $0xc4] sm:$0xf]
      %v277 = vld [vmem:[%s213 + $0xc8] sm:$0xf]
      %v278 = vld [vmem:[%s213 + $0xcc] sm:$0xf]
      %v279 = vld [vmem:[%s213 + $0xd0] sm:$0xf]
      %v280 = vld [vmem:[%s213 + $0xd4] sm:$0xf]
      %v281 = vld [vmem:[%s213 + $0xd8] sm:$0xf]
      %v282 = vld [vmem:[%s213 + $0xdc] sm:$0xf]
      %v283 = vld [vmem:[%s213 + $0xe0] sm:$0xf]
      %v284 = vld [vmem:[%s213 + $0xe4] sm:$0xf]
      %v285 = vld [vmem:[%s213 + $0xe8] sm:$0xf]
      %v286 = vld [vmem:[%s213 + $0xec] sm:$0xf]
      %v287 = vld [vmem:[%s213 + $0xf0] sm:$0xf]
      %v288 = vld [vmem:[%s213 + $0xf4] sm:$0xf]
      %v289 = vld [vmem:[%s213 + $0xf8] sm:$0xf]
      %v290 = vld [vmem:[%s213 + $0xfc] sm:$0xf]
      %v293 = vunpack.c.l.b16 %v225
      %v294 = vunpack.c.h.b16 %v225
      %v295 = vunpack.c.l.b16 %v226
      %v296 = vunpack.c.h.b16 %v226
      %v297 = vpack.c.b16 %v293, %v293
      %v298 = vpack.c.b16 %v294, %v294
      %v299 = vpack.c.b16 %v295, %v295
      %v300 = vpack.c.b16 %v296, %v296
      %v369 = vunpack.c.l.b16 %v227
      %v370 = vunpack.c.l.b16 %v228
      %v371 = vunpack.c.l.b16 %v229
      %v372 = vunpack.c.l.b16 %v230
      %v373 = vunpack.c.l.b16 %v231
      %v374 = vunpack.c.l.b16 %v232
      %v375 = vunpack.c.l.b16 %v233
      %v376 = vunpack.c.l.b16 %v234
      %v377 = vunpack.c.l.b16 %v235
      %v378 = vunpack.c.l.b16 %v236
      %v379 = vunpack.c.l.b16 %v237
      %v380 = vunpack.c.l.b16 %v238
      %v381 = vunpack.c.l.b16 %v239
      %v382 = vunpack.c.l.b16 %v240
      %v383 = vunpack.c.l.b16 %v241
      %v384 = vunpack.c.l.b16 %v242
      %v385 = vunpack.c.l.b16 %v243
      %v386 = vunpack.c.l.b16 %v244
      %v387 = vunpack.c.l.b16 %v245
      %v388 = vunpack.c.l.b16 %v246
      %v389 = vunpack.c.l.b16 %v247
      %v390 = vunpack.c.l.b16 %v248
      %v391 = vunpack.c.l.b16 %v249
      %v392 = vunpack.c.l.b16 %v250
      %v393 = vunpack.c.l.b16 %v251
      %v394 = vunpack.c.l.b16 %v252
      %v395 = vunpack.c.l.b16 %v253
      %v396 = vunpack.c.l.b16 %v254
      %v397 = vunpack.c.l.b16 %v255
      %v398 = vunpack.c.l.b16 %v256
      %v399 = vunpack.c.l.b16 %v257
      %v400 = vunpack.c.l.b16 %v258
      %v401 = vunpack.c.l.b16 %v259
      %v402 = vunpack.c.l.b16 %v260
      %v403 = vunpack.c.l.b16 %v261
      %v404 = vunpack.c.l.b16 %v262
      %v405 = vunpack.c.l.b16 %v263
      %v406 = vunpack.c.l.b16 %v264
      %v407 = vunpack.c.l.b16 %v265
      %v408 = vunpack.c.l.b16 %v266
      %v409 = vunpack.c.l.b16 %v267
      %v410 = vunpack.c.l.b16 %v268
      %v411 = vunpack.c.l.b16 %v269
      %v412 = vunpack.c.l.b16 %v270
      %v413 = vunpack.c.l.b16 %v271
      %v414 = vunpack.c.l.b16 %v272
      %v415 = vunpack.c.l.b16 %v273
      %v416 = vunpack.c.l.b16 %v274
      %v417 = vunpack.c.l.b16 %v275
      %v418 = vunpack.c.l.b16 %v276
      %v419 = vunpack.c.l.b16 %v277
      %v420 = vunpack.c.l.b16 %v278
      %v421 = vunpack.c.l.b16 %v279
      %v422 = vunpack.c.l.b16 %v280
      %v423 = vunpack.c.l.b16 %v281
      %v424 = vunpack.c.l.b16 %v282
      %v425 = vunpack.c.l.b16 %v283
      %v426 = vunpack.c.l.b16 %v284
      %v427 = vunpack.c.l.b16 %v285
      %v428 = vunpack.c.l.b16 %v286
      %v429 = vunpack.c.l.b16 %v287
      %v430 = vunpack.c.l.b16 %v288
      %v431 = vunpack.c.l.b16 %v289
      %v432 = vunpack.c.l.b16 %v290
      %v433 = vpack.c.b16 %v370, %v369
      %v434 = vpack.c.b16 %v372, %v371
      %v435 = vpack.c.b16 %v374, %v373
      %v436 = vpack.c.b16 %v376, %v375
      %v437 = vpack.c.b16 %v378, %v377
      %v438 = vpack.c.b16 %v380, %v379
      %v439 = vpack.c.b16 %v382, %v381
      %v440 = vpack.c.b16 %v384, %v383
      %v441 = vpack.c.b16 %v386, %v385
      %v442 = vpack.c.b16 %v388, %v387
      %v443 = vpack.c.b16 %v390, %v389
      %v444 = vpack.c.b16 %v392, %v391
      %v445 = vpack.c.b16 %v394, %v393
      %v446 = vpack.c.b16 %v396, %v395
      %v447 = vpack.c.b16 %v398, %v397
      %v448 = vpack.c.b16 %v400, %v399
      %v449 = vpack.c.b16 %v402, %v401
      %v450 = vpack.c.b16 %v404, %v403
      %v451 = vpack.c.b16 %v406, %v405
      %v452 = vpack.c.b16 %v408, %v407
      %v453 = vpack.c.b16 %v410, %v409
      %v454 = vpack.c.b16 %v412, %v411
      %v455 = vpack.c.b16 %v414, %v413
      %v456 = vpack.c.b16 %v416, %v415
      %v457 = vpack.c.b16 %v418, %v417
      %v458 = vpack.c.b16 %v420, %v419
      %v459 = vpack.c.b16 %v422, %v421
      %v460 = vpack.c.b16 %v424, %v423
      %v461 = vpack.c.b16 %v426, %v425
      %v462 = vpack.c.b16 %v428, %v427
      %v463 = vpack.c.b16 %v430, %v429
      %v464 = vpack.c.b16 %v432, %v431
      %497 = vmatpush.bf16.msra.mxu0 %v440
      %498 = vmatpush.bf16.msra.mxu0 %v439
      %499 = vmatpush.bf16.msra.mxu0 %v438
      %500 = vmatpush.bf16.msra.mxu0 %v437
      %501 = vmatpush.bf16.msra.mxu0 %v436
      %502 = vmatpush.bf16.msra.mxu0 %v435
      %503 = vmatpush.bf16.msra.mxu0 %v434
      %504 = vmatpush.bf16.msra.mxu0 %v433
      %505 = vmatmul.bf16.gmra.mxu0 %v297
      %v506 = vpop.f32.mrf.mxu0
      %v507 = vadd.f32 0.0, %v506
      %v508 = vpop.f32.mrf.mxu0
      %509 = vdwg.mxu0
      %510 = vmatpush.bf16.msra.mxu0 %v448
      %511 = vmatpush.bf16.msra.mxu0 %v447
      %512 = vmatpush.bf16.msra.mxu0 %v446
      %513 = vmatpush.bf16.msra.mxu0 %v445
      %514 = vmatpush.bf16.msra.mxu0 %v444
      %515 = vmatpush.bf16.msra.mxu0 %v443
      %516 = vmatpush.bf16.msra.mxu0 %v442
      %517 = vmatpush.bf16.msra.mxu0 %v441
      %518 = vmatmul.bf16.gmra.mxu0 %v298
      %v519 = vpop.f32.mrf.mxu0
      %v520 = vadd.f32 %v507, %v519
      %v521 = vpop.f32.mrf.mxu0
      %522 = vdwg.mxu0
      %523 = vmatpush.bf16.msra.mxu0 %v456
      %524 = vmatpush.bf16.msra.mxu0 %v455
      %525 = vmatpush.bf16.msra.mxu0 %v454
      %526 = vmatpush.bf16.msra.mxu0 %v453
      %527 = vmatpush.bf16.msra.mxu0 %v452
      %528 = vmatpush.bf16.msra.mxu0 %v451
      %529 = vmatpush.bf16.msra.mxu0 %v450
      %530 = vmatpush.bf16.msra.mxu0 %v449
      %531 = vmatmul.bf16.gmra.mxu0 %v299
      %v532 = vpop.f32.mrf.mxu0
      %v533 = vadd.f32 %v520, %v532
      %v534 = vpop.f32.mrf.mxu0
      %535 = vdwg.mxu0
      %536 = vmatpush.bf16.msra.mxu0 %v464
      %537 = vmatpush.bf16.msra.mxu0 %v463
      %538 = vmatpush.bf16.msra.mxu0 %v462
      %539 = vmatpush.bf16.msra.mxu0 %v461
      %540 = vmatpush.bf16.msra.mxu0 %v460
      %541 = vmatpush.bf16.msra.mxu0 %v459
      %542 = vmatpush.bf16.msra.mxu0 %v458
      %543 = vmatpush.bf16.msra.mxu0 %v457
      %544 = vmatmul.bf16.gmra.mxu0 %v300
      %v545 = vpop.f32.mrf.mxu0
      %v546 = vadd.f32 %v533, %v545
      %v547 = vpop.f32.mrf.mxu0
      %548 = vdwg.mxu0
      %v549 = vadd.f32 %v224, %v546
      %550 = vst [vmem:[#allocation2] sm:$0xff] %v549
      %p551 = scmp.eq.s32.totalorder %s19, 7
      // Predicated region
      $region37: #{featnet_forward.23} parent=31 // pred_check
        %p552 = pneg %p551
      $region38: #{featnet_forward.23} parent=31 // pred_check_branch
        %554 = sbr.rel (%p552) target = $region40
      $region39: #{featnet_forward.23} parent=31 // pred_region
        %v555 = vld [vmem:[#allocation2] sm:$0xff]
        %v556 = vld [vmem:[%s2] sm:$0x1]
        %v558 = vperm.slane %v556, 0
        %v560 = vadd.f32 %v555, %v558
        %vm561 = vcmp.ge.f32.partialorder %v560, 0.0
        %v562 = vmul.f32 %v560, 0.01
        %v563 = vsel %vm561, %v560, %v562
        %v564 = vpack.c.bf16 %v563, %v563
        %565 = vst [vmem:[%s218] sm:$0xf] %v564
      $region40: #{featnet_forward.23} parent=31 // pred_fallthru
        _
      %p566 = scmp.lt.s32.totalorder %s18, 0
      %s567 = scalar_select %p566, %s18, 0
      %s568 = smul.addr %s567, 4
      %s569 = scalar_lea.vmem %s3, %s568
      // Predicated region
      $region41: #{featnet_forward.23} parent=31 // pred_check
        %p570 = pneg %p119
      $region42: #{featnet_forward.23} parent=31 // pred_check_branch
        %572 = sbr.rel (%p570) target = $region44
      $region43: #{featnet_forward.23} parent=31 // pred_region
        _
      $region44: #{featnet_forward.23} parent=31 // pred_fallthru
        _
      // Predicated region
      $region45: #{featnet_forward.23} parent=31 // pred_check
        %p573 = pneg %p119
      $region46: #{featnet_forward.23} parent=31 // pred_check_branch
        %575 = sbr.rel (%p573) target = $region48
      $region47: #{featnet_forward.23} parent=31 // pred_region
        %p576 = scmp.lt.s32.totalorder %s18, 0
        %s577 = scalar_select %p576, %s18, 0
        %s578 = smul.addr %s577, 4
        %s579 = scalar_lea.vmem %s3, %s578
      $region48: #{featnet_forward.23} parent=31 // pred_fallthru
        _
    $region32: #{featnet_forward.23} parent=5 // pred_fallthru
      _
    %p580 = scmp.le.s32.totalorder 2, %s9
    // Predicated region
    $region49: #{featnet_forward.23} parent=5 // pred_check
      %p581 = pneg %p580
    $region50: #{featnet_forward.23} parent=5 // pred_check_branch
      %583 = sbr.rel (%p581) target = $region52
    $region51: #{featnet_forward.23} parent=5 // pred_region
      %s584 = ssub.s32 %s9, 2
    $region52: #{featnet_forward.23} parent=5 // pred_fallthru
      _
  $region6: #{featnet_forward.23} parent=0 // loop_footer
    %s13 = sadd.s32 1, %s9
  $region7: #{featnet_forward.23} parent=0 // loop_footer_branch
    %8 = sbr.rel target = $region3
  $region8: #{featnet_forward.23} parent=0 // loop_exit
    _

// kernel: featnet_forward.24
$region0: #{featnet_forward.24}
  #allocation0 [shape = 'u32[]', space=smem, size = 0x4, offset = 0x4, fixed_abs, tag = 'smem constant byte address 0x4 - core index']
  #allocation1 [shape = 'u32[72,128]{1,0:T(1,128)}', space=vmem, size = 0x9000, scoped, tag = 'internal scratch']
  #allocation2 [shape = 'f32[8,128]{1,0:T(8,128)}', space=vmem, size = 0x1000, scoped, tag = 'scratch operand']
  %s0 = inlined_call_operand.vmem [shape: bf16[8,1024], index: 0, kind: input, shape index: {}]
  %s1 = inlined_call_operand.vmem [shape: bf16[1024,128], index: 1, kind: input, shape index: {}]
  %s2 = inlined_call_operand.vmem [shape: f32[1,128], index: 2, kind: input, shape index: {}]
  %s3 = inlined_call_operand.vmem [shape: bf16[8,128], index: 3, kind: output, shape index: {}]
  %s4 = sld [smem:[#allocation0]]
  $region53: #{featnet_forward.24} parent=0
    _
  %s6 = ssub.s32 1, %s4
  %s7 = scalar_select 0, %s6, %s4
  loop: start=0, step=1, limit=4
  $region2: #{featnet_forward.24} parent=0 // loop_pre_header
    _
  $region3: #{featnet_forward.24} parent=0 // loop_header
    %s9 = sphi 0, %s13
    %p10 = scmp.ge.s32.totalorder %s9, 4
    %s16 = sphi 0, %s28
    %s17 = sphi 0, %s24
    %s18 = sphi 0, %s16
    %s19 = sphi 0, %s17
    %s20 = sphi 0, %s18
    %s21 = sphi 0, %s19
    %s33 = sphi 0, %s35
    %s36 = sphi 0, %s33
    %s37 = sphi 0, %s36
    %s53 = sphi 0, %s37
    %s59 = sphi 0, %s61
    %s62 = sphi 0, %s59
    %s63 = sphi 0, %s62
    %s79 = sphi 0, %s63
    %s83 = sphi 0, %s83
    %s85 = sphi 0, %s83
    %s86 = sphi 0, %s85
    %s100 = sphi 0, %s86
    %s106 = sphi 0, %s108
    %s109 = sphi 0, %s106
    %s110 = sphi 0, %s109
    %s126 = sphi 0, %s110
  $region4: #{featnet_forward.24} parent=0 // loop_header_branch
    %12 = sbr.rel (%p10) target = $region8
  $region5: #{featnet_forward.24} parent=0 // loop_body
    %s14 = ssub.s32 %s9, 1
    %s15 = ssub.s32 %s9, 2
    %s22 = sadd.s32 1, %s17
    %p23 = scmp.ge.s32.totalorder %s22, 2
    %s24 = scalar_select %p23, 0, %s22
    %s25 = sadd.s32 1, %s16
    %s26 = scalar_select %p23, %s25, %s16
    %p27 = scmp.ge.s32.totalorder %s26, 1
    %s28 = scalar_select %p27, 0, %s26
    %s29 = ssub.s32 %s16, %s28
    %s30 = ssub.s32 %s17, %s24
    %s31 = sor.u32 %s29, %s30
    %p32 = scmp.eq.s32.totalorder %s31, 0
    %s34 = sadd.s32 %s33, 1
    %s35 = scalar_select %p32, %s33, %s34
    %p38 = pneg %p32
    %p39 = scmp.eq.s32.totalorder %s9, 1
    %p40 = por %p38, %p39
    %p41 = scmp.ne.s32.totalorder %s33, %s36
    %p42 = scmp.eq.s32.totalorder %s9, 0
    %p43 = por %p41, %p42
    %p44 = scmp.ne.s32.totalorder %s33, %s36
    %p45 = scmp.eq.s32.totalorder %s14, 1
    %p46 = por %p44, %p45
    %p47 = scmp.ne.s32.totalorder %s36, %s37
    %p48 = scmp.eq.s32.totalorder %s14, 0
    %p49 = por %p47, %p48
    %p50 = scmp.ne.s32.totalorder %s36, %s37
    %p51 = scmp.eq.s32.totalorder %s15, 1
    %p52 = por %p50, %p51
    %p54 = scmp.ne.s32.totalorder %s37, %s53
    %p55 = scmp.eq.s32.totalorder %s15, 0
    %p56 = por %p54, %p55
    %s57 = ssub.s32 %s17, %s24
    %p58 = scmp.eq.s32.totalorder %s57, 0
    %s60 = sadd.s32 %s59, 1
    %s61 = scalar_select %p58, %s59, %s60
    %p64 = pneg %p58
    %p65 = scmp.eq.s32.totalorder %s9, 1
    %p66 = por %p64, %p65
    %p67 = scmp.ne.s32.totalorder %s59, %s62
    %p68 = scmp.eq.s32.totalorder %s9, 0
    %p69 = por %p67, %p68
    %p70 = scmp.ne.s32.totalorder %s59, %s62
    %p71 = scmp.eq.s32.totalorder %s14, 1
    %p72 = por %p70, %p71
    %p73 = scmp.ne.s32.totalorder %s62, %s63
    %p74 = scmp.eq.s32.totalorder %s14, 0
    %p75 = por %p73, %p74
    %p76 = scmp.ne.s32.totalorder %s62, %s63
    %p77 = scmp.eq.s32.totalorder %s15, 1
    %p78 = por %p76, %p77
    %p80 = scmp.ne.s32.totalorder %s63, %s79
    %p81 = scmp.eq.s32.totalorder %s15, 0
    %p82 = por %p80, %p81
    %s84 = sadd.s32 %s83, 1
    %p87 = scmp.eq.s32.totalorder %s9, 1
    %p88 = scmp.ne.s32.totalorder %s83, %s85
    %p89 = scmp.eq.s32.totalorder %s9, 0
    %p90 = por %p88, %p89
    %p91 = scmp.ne.s32.totalorder %s83, %s85
    %p92 = scmp.eq.s32.totalorder %s14, 1
    %p93 = por %p91, %p92
    %p94 = scmp.ne.s32.totalorder %s85, %s86
    %p95 = scmp.eq.s32.totalorder %s14, 0
    %p96 = por %p94, %p95
    %p97 = scmp.ne.s32.totalorder %s85, %s86
    %p98 = scmp.eq.s32.totalorder %s15, 1
    %p99 = por %p97, %p98
    %p101 = scmp.ne.s32.totalorder %s86, %s100
    %p102 = scmp.eq.s32.totalorder %s15, 0
    %p103 = por %p101, %p102
    %s104 = ssub.s32 %s16, %s28
    %p105 = scmp.eq.s32.totalorder %s104, 0
    %s107 = sadd.s32 %s106, 1
    %s108 = scalar_select %p105, %s106, %s107
    %p111 = pneg %p105
    %p112 = scmp.eq.s32.totalorder %s9, 1
    %p113 = por %p111, %p112
    %p114 = scmp.ne.s32.totalorder %s106, %s109
    %p115 = scmp.eq.s32.totalorder %s9, 0
    %p116 = por %p114, %p115
    %p117 = scmp.ne.s32.totalorder %s106, %s109
    %p118 = scmp.eq.s32.totalorder %s14, 1
    %p119 = por %p117, %p118
    %p120 = scmp.ne.s32.totalorder %s109, %s110
    %p121 = scmp.eq.s32.totalorder %s14, 0
    %p122 = por %p120, %p121
    %p123 = scmp.ne.s32.totalorder %s109, %s110
    %p124 = scmp.eq.s32.totalorder %s15, 1
    %p125 = por %p123, %p124
    %p127 = scmp.ne.s32.totalorder %s110, %s126
    %p128 = scmp.eq.s32.totalorder %s15, 0
    %p129 = por %p127, %p128
    %p130 = scmp.le.s32.totalorder 1, %s9
    %p131 = scmp.lt.s32.totalorder %s9, 3
    %p132 = pnand %p130, %p131
    %p133 = pneg %p132
    // Predicated region
    $region9: #{featnet_forward.24} parent=5 // pred_check
      _
    $region10: #{featnet_forward.24} parent=5 // pred_check_branch
      %135 = sbr.rel (%p132) target = $region12
    $region11: #{featnet_forward.24} parent=5 // pred_region
      %s136 = ssub.s32 %s9, 1
      // Predicated region
      $region13: #{featnet_forward.24} parent=11 // pred_check
        %p137 = pneg %p96
      $region14: #{featnet_forward.24} parent=11 // pred_check_branch
        %139 = sbr.rel (%p137) target = $region16
      $region15: #{featnet_forward.24} parent=11 // pred_region
        _
      $region16: #{featnet_forward.24} parent=11 // pred_fallthru
        _
    $region12: #{featnet_forward.24} parent=5 // pred_fallthru
      _
    %p140 = scmp.lt.s32.totalorder %s9, 2
    // Predicated region
    $region17: #{featnet_forward.24} parent=5 // pred_check
      %p141 = pneg %p140
    $region18: #{featnet_forward.24} parent=5 // pred_check_branch
      %143 = sbr.rel (%p141) target = $region20
    $region19: #{featnet_forward.24} parent=5 // pred_region
      // Predicated region
      $region21: #{featnet_forward.24} parent=19 // pred_check
        %p144 = pneg %p43
      $region22: #{featnet_forward.24} parent=19 // pred_check_branch
        %146 = sbr.rel (%p144) target = $region24
      $region23: #{featnet_forward.24} parent=19 // pred_region
        %s147 = smul.u32 4, %s17
        %p148 = scmp.lt.s32.totalorder %s16, 0
        %s149 = scalar_select %p148, %s16, 0
        %p150 = scmp.lt.s32.totalorder %s147, 7
        %s151 = scalar_select %p150, %s147, 7
        %s152 = smul.addr %s149, 8
        %s153 = sadd.s32 %s151, %s152
        %s154 = smul.addr %s153, 4
        %s155 = scalar_lea.vmem %s0, %s154
        %s156 = smul.u32 4, %s17
      $region24: #{featnet_forward.24} parent=19 // pred_fallthru
        _
      // Predicated region
      $region25: #{featnet_forward.24} parent=19 // pred_check
        %p157 = pneg %p69
      $region26: #{featnet_forward.24} parent=19 // pred_check_branch
        %159 = sbr.rel (%p157) target = $region28
      $region27: #{featnet_forward.24} parent=19 // pred_region
        %s160 = smul.u32 64, %s17
        %p161 = scmp.lt.s32.totalorder %s160, 127
        %s162 = scalar_select %p161, %s160, 127
        %s163 = smul.addr %s162, 4
        %s164 = scalar_lea.vmem %s1, %s163
        %s165 = smul.u32 64, %s17
      $region28: #{featnet_forward.24} parent=19 // pred_fallthru
        _
    $region20: #{featnet_forward.24} parent=5 // pred_fallthru
      _
    %p166 = scmp.le.s32.totalorder 1, %s9
    %p167 = scmp.lt.s32.totalorder %s9, 3
    %p168 = pnand %p166, %p167
    %p169 = pneg %p168
    // Predicated region
    $region29: #{featnet_forward.24} parent=5 // pred_check
      _
    $region30: #{featnet_forward.24} parent=5 // pred_check_branch
      %171 = sbr.rel (%p168) target = $region32
    $region31: #{featnet_forward.24} parent=5 // pred_region
      %s172 = ssub.s32 %s9, 1
      %s173 = smul.u32 4, %s19
      %p174 = scmp.lt.s32.totalorder %s18, 0
      %s175 = scalar_select %p174, %s18, 0
      %p176 = scmp.lt.s32.totalorder %s173, 7
      %s177 = scalar_select %p176, %s173, 7
      %s178 = smul.addr %s175, 8
      %s179 = sadd.s32 %s177, %s178
      %s180 = smul.addr %s179, 4
      %s181 = scalar_lea.vmem %s0, %s180
      %p182 = pneg %p49
      %p183 = pneg %p46
      %s184 = smul.u32 64, %s19
      %p185 = scmp.lt.s32.totalorder %s184, 127
      %s186 = scalar_select %p185, %s184, 127
      %s187 = smul.addr %s186, 4
      %s188 = scalar_lea.vmem %s1, %s187
      %p189 = pneg %p75
      %p190 = pneg %p72
      %p191 = pneg %p96
      %p192 = pneg %p93
      %p193 = pneg %p122
      %p194 = pneg %p119
      %p195 = scmp.lt.s32.totalorder %s18, 0
      %s196 = scalar_select %p195, %s18, 0
      %s197 = smul.addr %s196, 4
      %s198 = scalar_lea.vmem %s3, %s197
      %s199 = smul.u32 4, %s19
      %p200 = scmp.lt.s32.totalorder %s18, 0
      %s201 = scalar_select %p200, %s18, 0
      %p202 = scmp.lt.s32.totalorder %s199, 7
      %s203 = scalar_select %p202, %s199, 7
      %s204 = smul.addr %s201, 8
      %s205 = sadd.s32 %s203, %s204
      %s206 = smul.addr %s205, 4
      %s207 = scalar_lea.vmem %s0, %s206
      %s208 = smul.u32 4, %s19
      %s209 = smul.u32 64, %s19
      %p210 = scmp.lt.s32.totalorder %s209, 127
      %s211 = scalar_select %p210, %s209, 127
      %s212 = smul.addr %s211, 4
      %s213 = scalar_lea.vmem %s1, %s212
      %s214 = smul.u32 64, %s19
      %p215 = scmp.lt.s32.totalorder %s18, 0
      %s216 = scalar_select %p215, %s18, 0
      %s217 = smul.addr %s216, 4
      %s218 = scalar_lea.vmem %s3, %s217
      %p219 = scmp.eq.s32.totalorder %s19, 0
      // Predicated region
      $region33: #{featnet_forward.24} parent=31 // pred_check
        %p220 = pneg %p219
      $region34: #{featnet_forward.24} parent=31 // pred_check_branch
        %222 = sbr.rel (%p220) target = $region36
      $region35: #{featnet_forward.24} parent=31 // pred_region
        %223 = vst [vmem:[#allocation2] sm:$0xff] 0.0
      $region36: #{featnet_forward.24} parent=31 // pred_fallthru
        _
      %v224 = vld [vmem:[#allocation2] sm:$0xff]
      %v225 = vld [vmem:[%s207] sm:$0xff]
      %v226 = vld [vmem:[%s207 + $0x8] sm:$0xff]
      %v227 = vld [vmem:[%s213] sm:$0xf]
      %v228 = vld [vmem:[%s213 + $0x4] sm:$0xf]
      %v229 = vld [vmem:[%s213 + $0x8] sm:$0xf]
      %v230 = vld [vmem:[%s213 + $0xc] sm:$0xf]
      %v231 = vld [vmem:[%s213 + $0x10] sm:$0xf]
      %v232 = vld [vmem:[%s213 + $0x14] sm:$0xf]
      %v233 = vld [vmem:[%s213 + $0x18] sm:$0xf]
      %v234 = vld [vmem:[%s213 + $0x1c] sm:$0xf]
      %v235 = vld [vmem:[%s213 + $0x20] sm:$0xf]
      %v236 = vld [vmem:[%s213 + $0x24] sm:$0xf]
      %v237 = vld [vmem:[%s213 + $0x28] sm:$0xf]
      %v238 = vld [vmem:[%s213 + $0x2c] sm:$0xf]
      %v239 = vld [vmem:[%s213 + $0x30] sm:$0xf]
      %v240 = vld [vmem:[%s213 + $0x34] sm:$0xf]
      %v241 = vld [vmem:[%s213 + $0x38] sm:$0xf]
      %v242 = vld [vmem:[%s213 + $0x3c] sm:$0xf]
      %v243 = vld [vmem:[%s213 + $0x40] sm:$0xf]
      %v244 = vld [vmem:[%s213 + $0x44] sm:$0xf]
      %v245 = vld [vmem:[%s213 + $0x48] sm:$0xf]
      %v246 = vld [vmem:[%s213 + $0x4c] sm:$0xf]
      %v247 = vld [vmem:[%s213 + $0x50] sm:$0xf]
      %v248 = vld [vmem:[%s213 + $0x54] sm:$0xf]
      %v249 = vld [vmem:[%s213 + $0x58] sm:$0xf]
      %v250 = vld [vmem:[%s213 + $0x5c] sm:$0xf]
      %v251 = vld [vmem:[%s213 + $0x60] sm:$0xf]
      %v252 = vld [vmem:[%s213 + $0x64] sm:$0xf]
      %v253 = vld [vmem:[%s213 + $0x68] sm:$0xf]
      %v254 = vld [vmem:[%s213 + $0x6c] sm:$0xf]
      %v255 = vld [vmem:[%s213 + $0x70] sm:$0xf]
      %v256 = vld [vmem:[%s213 + $0x74] sm:$0xf]
      %v257 = vld [vmem:[%s213 + $0x78] sm:$0xf]
      %v258 = vld [vmem:[%s213 + $0x7c] sm:$0xf]
      %v259 = vld [vmem:[%s213 + $0x80] sm:$0xf]
      %v260 = vld [vmem:[%s213 + $0x84] sm:$0xf]
      %v261 = vld [vmem:[%s213 + $0x88] sm:$0xf]
      %v262 = vld [vmem:[%s213 + $0x8c] sm:$0xf]
      %v263 = vld [vmem:[%s213 + $0x90] sm:$0xf]
      %v264 = vld [vmem:[%s213 + $0x94] sm:$0xf]
      %v265 = vld [vmem:[%s213 + $0x98] sm:$0xf]
      %v266 = vld [vmem:[%s213 + $0x9c] sm:$0xf]
      %v267 = vld [vmem:[%s213 + $0xa0] sm:$0xf]
      %v268 = vld [vmem:[%s213 + $0xa4] sm:$0xf]
      %v269 = vld [vmem:[%s213 + $0xa8] sm:$0xf]
      %v270 = vld [vmem:[%s213 + $0xac] sm:$0xf]
      %v271 = vld [vmem:[%s213 + $0xb0] sm:$0xf]
      %v272 = vld [vmem:[%s213 + $0xb4] sm:$0xf]
      %v273 = vld [vmem:[%s213 + $0xb8] sm:$0xf]
      %v274 = vld [vmem:[%s213 + $0xbc] sm:$0xf]
      %v275 = vld [vmem:[%s213 + $0xc0] sm:$0xf]
      %v276 = vld [vmem:[%s213 + $0xc4] sm:$0xf]
      %v277 = vld [vmem:[%s213 + $0xc8] sm:$0xf]
      %v278 = vld [vmem:[%s213 + $0xcc] sm:$0xf]
      %v279 = vld [vmem:[%s213 + $0xd0] sm:$0xf]
      %v280 = vld [vmem:[%s213 + $0xd4] sm:$0xf]
      %v281 = vld [vmem:[%s213 + $0xd8] sm:$0xf]
      %v282 = vld [vmem:[%s213 + $0xdc] sm:$0xf]
      %v283 = vld [vmem:[%s213 + $0xe0] sm:$0xf]
      %v284 = vld [vmem:[%s213 + $0xe4] sm:$0xf]
      %v285 = vld [vmem:[%s213 + $0xe8] sm:$0xf]
      %v286 = vld [vmem:[%s213 + $0xec] sm:$0xf]
      %v287 = vld [vmem:[%s213 + $0xf0] sm:$0xf]
      %v288 = vld [vmem:[%s213 + $0xf4] sm:$0xf]
      %v289 = vld [vmem:[%s213 + $0xf8] sm:$0xf]
      %v290 = vld [vmem:[%s213 + $0xfc] sm:$0xf]
      %v293 = vunpack.c.l.b16 %v225
      %v294 = vunpack.c.h.b16 %v225
      %v295 = vunpack.c.l.b16 %v226
      %v296 = vunpack.c.h.b16 %v226
      %v297 = vpack.c.b16 %v293, %v293
      %v298 = vpack.c.b16 %v294, %v294
      %v299 = vpack.c.b16 %v295, %v295
      %v300 = vpack.c.b16 %v296, %v296
      %v369 = vunpack.c.l.b16 %v227
      %v370 = vunpack.c.l.b16 %v228
      %v371 = vunpack.c.l.b16 %v229
      %v372 = vunpack.c.l.b16 %v230
      %v373 = vunpack.c.l.b16 %v231
      %v374 = vunpack.c.l.b16 %v232
      %v375 = vunpack.c.l.b16 %v233
      %v376 = vunpack.c.l.b16 %v234
      %v377 = vunpack.c.l.b16 %v235
      %v378 = vunpack.c.l.b16 %v236
      %v379 = vunpack.c.l.b16 %v237
      %v380 = vunpack.c.l.b16 %v238
      %v381 = vunpack.c.l.b16 %v239
      %v382 = vunpack.c.l.b16 %v240
      %v383 = vunpack.c.l.b16 %v241
      %v384 = vunpack.c.l.b16 %v242
      %v385 = vunpack.c.l.b16 %v243
      %v386 = vunpack.c.l.b16 %v244
      %v387 = vunpack.c.l.b16 %v245
      %v388 = vunpack.c.l.b16 %v246
      %v389 = vunpack.c.l.b16 %v247
      %v390 = vunpack.c.l.b16 %v248
      %v391 = vunpack.c.l.b16 %v249
      %v392 = vunpack.c.l.b16 %v250
      %v393 = vunpack.c.l.b16 %v251
      %v394 = vunpack.c.l.b16 %v252
      %v395 = vunpack.c.l.b16 %v253
      %v396 = vunpack.c.l.b16 %v254
      %v397 = vunpack.c.l.b16 %v255
      %v398 = vunpack.c.l.b16 %v256
      %v399 = vunpack.c.l.b16 %v257
      %v400 = vunpack.c.l.b16 %v258
      %v401 = vunpack.c.l.b16 %v259
      %v402 = vunpack.c.l.b16 %v260
      %v403 = vunpack.c.l.b16 %v261
      %v404 = vunpack.c.l.b16 %v262
      %v405 = vunpack.c.l.b16 %v263
      %v406 = vunpack.c.l.b16 %v264
      %v407 = vunpack.c.l.b16 %v265
      %v408 = vunpack.c.l.b16 %v266
      %v409 = vunpack.c.l.b16 %v267
      %v410 = vunpack.c.l.b16 %v268
      %v411 = vunpack.c.l.b16 %v269
      %v412 = vunpack.c.l.b16 %v270
      %v413 = vunpack.c.l.b16 %v271
      %v414 = vunpack.c.l.b16 %v272
      %v415 = vunpack.c.l.b16 %v273
      %v416 = vunpack.c.l.b16 %v274
      %v417 = vunpack.c.l.b16 %v275
      %v418 = vunpack.c.l.b16 %v276
      %v419 = vunpack.c.l.b16 %v277
      %v420 = vunpack.c.l.b16 %v278
      %v421 = vunpack.c.l.b16 %v279
      %v422 = vunpack.c.l.b16 %v280
      %v423 = vunpack.c.l.b16 %v281
      %v424 = vunpack.c.l.b16 %v282
      %v425 = vunpack.c.l.b16 %v283
      %v426 = vunpack.c.l.b16 %v284
      %v427 = vunpack.c.l.b16 %v285
      %v428 = vunpack.c.l.b16 %v286
      %v429 = vunpack.c.l.b16 %v287
      %v430 = vunpack.c.l.b16 %v288
      %v431 = vunpack.c.l.b16 %v289
      %v432 = vunpack.c.l.b16 %v290
      %v433 = vpack.c.b16 %v370, %v369
      %v434 = vpack.c.b16 %v372, %v371
      %v435 = vpack.c.b16 %v374, %v373
      %v436 = vpack.c.b16 %v376, %v375
      %v437 = vpack.c.b16 %v378, %v377
      %v438 = vpack.c.b16 %v380, %v379
      %v439 = vpack.c.b16 %v382, %v381
      %v440 = vpack.c.b16 %v384, %v383
      %v441 = vpack.c.b16 %v386, %v385
      %v442 = vpack.c.b16 %v388, %v387
      %v443 = vpack.c.b16 %v390, %v389
      %v444 = vpack.c.b16 %v392, %v391
      %v445 = vpack.c.b16 %v394, %v393
      %v446 = vpack.c.b16 %v396, %v395
      %v447 = vpack.c.b16 %v398, %v397
      %v448 = vpack.c.b16 %v400, %v399
      %v449 = vpack.c.b16 %v402, %v401
      %v450 = vpack.c.b16 %v404, %v403
      %v451 = vpack.c.b16 %v406, %v405
      %v452 = vpack.c.b16 %v408, %v407
      %v453 = vpack.c.b16 %v410, %v409
      %v454 = vpack.c.b16 %v412, %v411
      %v455 = vpack.c.b16 %v414, %v413
      %v456 = vpack.c.b16 %v416, %v415
      %v457 = vpack.c.b16 %v418, %v417
      %v458 = vpack.c.b16 %v420, %v419
      %v459 = vpack.c.b16 %v422, %v421
      %v460 = vpack.c.b16 %v424, %v423
      %v461 = vpack.c.b16 %v426, %v425
      %v462 = vpack.c.b16 %v428, %v427
      %v463 = vpack.c.b16 %v430, %v429
      %v464 = vpack.c.b16 %v432, %v431
      %497 = vmatpush.bf16.msra.mxu0 %v440
      %498 = vmatpush.bf16.msra.mxu0 %v439
      %499 = vmatpush.bf16.msra.mxu0 %v438
      %500 = vmatpush.bf16.msra.mxu0 %v437
      %501 = vmatpush.bf16.msra.mxu0 %v436
      %502 = vmatpush.bf16.msra.mxu0 %v435
      %503 = vmatpush.bf16.msra.mxu0 %v434
      %504 = vmatpush.bf16.msra.mxu0 %v433
      %505 = vmatmul.bf16.gmra.mxu0 %v297
      %v506 = vpop.f32.mrf.mxu0
      %v507 = vadd.f32 0.0, %v506
      %v508 = vpop.f32.mrf.mxu0
      %509 = vdwg.mxu0
      %510 = vmatpush.bf16.msra.mxu0 %v448
      %511 = vmatpush.bf16.msra.mxu0 %v447
      %512 = vmatpush.bf16.msra.mxu0 %v446
      %513 = vmatpush.bf16.msra.mxu0 %v445
      %514 = vmatpush.bf16.msra.mxu0 %v444
      %515 = vmatpush.bf16.msra.mxu0 %v443
      %516 = vmatpush.bf16.msra.mxu0 %v442
      %517 = vmatpush.bf16.msra.mxu0 %v441
      %518 = vmatmul.bf16.gmra.mxu0 %v298
      %v519 = vpop.f32.mrf.mxu0
      %v520 = vadd.f32 %v507, %v519
      %v521 = vpop.f32.mrf.mxu0
      %522 = vdwg.mxu0
      %523 = vmatpush.bf16.msra.mxu0 %v456
      %524 = vmatpush.bf16.msra.mxu0 %v455
      %525 = vmatpush.bf16.msra.mxu0 %v454
      %526 = vmatpush.bf16.msra.mxu0 %v453
      %527 = vmatpush.bf16.msra.mxu0 %v452
      %528 = vmatpush.bf16.msra.mxu0 %v451
      %529 = vmatpush.bf16.msra.mxu0 %v450
      %530 = vmatpush.bf16.msra.mxu0 %v449
      %531 = vmatmul.bf16.gmra.mxu0 %v299
      %v532 = vpop.f32.mrf.mxu0
      %v533 = vadd.f32 %v520, %v532
      %v534 = vpop.f32.mrf.mxu0
      %535 = vdwg.mxu0
      %536 = vmatpush.bf16.msra.mxu0 %v464
      %537 = vmatpush.bf16.msra.mxu0 %v463
      %538 = vmatpush.bf16.msra.mxu0 %v462
      %539 = vmatpush.bf16.msra.mxu0 %v461
      %540 = vmatpush.bf16.msra.mxu0 %v460
      %541 = vmatpush.bf16.msra.mxu0 %v459
      %542 = vmatpush.bf16.msra.mxu0 %v458
      %543 = vmatpush.bf16.msra.mxu0 %v457
      %544 = vmatmul.bf16.gmra.mxu0 %v300
      %v545 = vpop.f32.mrf.mxu0
      %v546 = vadd.f32 %v533, %v545
      %v547 = vpop.f32.mrf.mxu0
      %548 = vdwg.mxu0
      %v549 = vadd.f32 %v224, %v546
      %550 = vst [vmem:[#allocation2] sm:$0xff] %v549
      %p551 = scmp.eq.s32.totalorder %s19, 1
      // Predicated region
      $region37: #{featnet_forward.24} parent=31 // pred_check
        %p552 = pneg %p551
      $region38: #{featnet_forward.24} parent=31 // pred_check_branch
        %554 = sbr.rel (%p552) target = $region40
      $region39: #{featnet_forward.24} parent=31 // pred_region
        %v555 = vld [vmem:[#allocation2] sm:$0xff]
        %v556 = vld [vmem:[%s2] sm:$0x1]
        %v558 = vperm.slane %v556, 0
        %v560 = vadd.f32 %v555, %v558
        %vm561 = vcmp.ge.f32.partialorder %v560, 0.0
        %v562 = vmul.f32 %v560, 0.01
        %v563 = vsel %vm561, %v560, %v562
        %v564 = vpack.c.bf16 %v563, %v563
        %565 = vst [vmem:[%s218] sm:$0xf] %v564
      $region40: #{featnet_forward.24} parent=31 // pred_fallthru
        _
      %p566 = scmp.lt.s32.totalorder %s18, 0
      %s567 = scalar_select %p566, %s18, 0
      %s568 = smul.addr %s567, 4
      %s569 = scalar_lea.vmem %s3, %s568
      // Predicated region
      $region41: #{featnet_forward.24} parent=31 // pred_check
        %p570 = pneg %p119
      $region42: #{featnet_forward.24} parent=31 // pred_check_branch
        %572 = sbr.rel (%p570) target = $region44
      $region43: #{featnet_forward.24} parent=31 // pred_region
        _
      $region44: #{featnet_forward.24} parent=31 // pred_fallthru
        _
      // Predicated region
      $region45: #{featnet_forward.24} parent=31 // pred_check
        %p573 = pneg %p119
      $region46: #{featnet_forward.24} parent=31 // pred_check_branch
        %575 = sbr.rel (%p573) target = $region48
      $region47: #{featnet_forward.24} parent=31 // pred_region
        %p576 = scmp.lt.s32.totalorder %s18, 0
        %s577 = scalar_select %p576, %s18, 0
        %s578 = smul.addr %s577, 4
        %s579 = scalar_lea.vmem %s3, %s578
      $region48: #{featnet_forward.24} parent=31 // pred_fallthru
        _
    $region32: #{featnet_forward.24} parent=5 // pred_fallthru
      _
    %p580 = scmp.le.s32.totalorder 2, %s9
    // Predicated region
    $region49: #{featnet_forward.24} parent=5 // pred_check
      %p581 = pneg %p580
    $region50: #{featnet_forward.24} parent=5 // pred_check_branch
      %583 = sbr.rel (%p581) target = $region52
    $region51: #{featnet_forward.24} parent=5 // pred_region
      %s584 = ssub.s32 %s9, 2
    $region52: #{featnet_forward.24} parent=5 // pred_fallthru
      _
  $region6: #{featnet_forward.24} parent=0 // loop_footer
    %s13 = sadd.s32 1, %s9
  $region7: #{featnet_forward.24} parent=0 // loop_footer_branch
    %8 = sbr.rel target = $region3
  $region8: #{featnet_forward.24} parent=0 // loop_exit
    _

// kernel: featnet_forward.32
$region0: #{featnet_forward.32}
  #allocation0 [shape = 'u32[]', space=smem, size = 0x4, offset = 0x4, fixed_abs, tag = 'smem constant byte address 0x4 - core index']
  #allocation1 [shape = 'u32[72,128]{1,0:T(1,128)}', space=vmem, size = 0x9000, scoped, tag = 'internal scratch']
  #allocation2 [shape = 'f32[16,64]{1,0:T(8,128)}', space=vmem, size = 0x2000, scoped, tag = 'scratch operand']
  %s0 = inlined_call_operand.vmem [shape: bf16[16,1536], index: 0, kind: input, shape index: {}]
  %s1 = inlined_call_operand.vmem [shape: bf16[1536,64], index: 1, kind: input, shape index: {}]
  %s2 = inlined_call_operand.vmem [shape: f32[1,64], index: 2, kind: input, shape index: {}]
  %s3 = inlined_call_operand.vmem [shape: bf16[16,64], index: 3, kind: output, shape index: {}]
  %s4 = sld [smem:[#allocation0]]
  $region76: #{featnet_forward.32} parent=0
    _
  %s6 = ssub.s32 1, %s4
  %s7 = scalar_select 0, %s6, %s4
  $region1: #{featnet_forward.32} parent=0
    #allocation3 [shape = 'u8[32768]{0}', space=vmem, size = 0x8000, scoped, tag = 'input window, operand 0']
    loop: start=0, step=1, limit=5
    $region2: #{featnet_forward.32} parent=1 // loop_pre_header
      _
    $region3: #{featnet_forward.32} parent=1 // loop_header
      %s9 = sphi 0, %s13
      %p10 = scmp.ge.s32.totalorder %s9, 5
      %s16 = sphi 0, %s28
      %s17 = sphi 0, %s24
      %s18 = sphi 0, %s16
      %s19 = sphi 0, %s17
      %s20 = sphi 0, %s18
      %s21 = sphi 0, %s19
      %s33 = sphi 0, %s35
      %s36 = sphi 0, %s33
      %s37 = sphi 0, %s36
      %s53 = sphi 0, %s37
      %s59 = sphi 0, %s61
      %s62 = sphi 0, %s59
      %s63 = sphi 0, %s62
      %s79 = sphi 0, %s63
      %s83 = sphi 0, %s83
      %s85 = sphi 0, %s83
      %s86 = sphi 0, %s85
      %s100 = sphi 0, %s86
      %s106 = sphi 0, %s108
      %s109 = sphi 0, %s106
      %s110 = sphi 0, %s109
      %s126 = sphi 0, %s110
    $region4: #{featnet_forward.32} parent=1 // loop_header_branch
      %12 = sbr.rel (%p10) target = $region8
    $region5: #{featnet_forward.32} parent=1 // loop_body
      %s14 = ssub.s32 %s9, 1
      %s15 = ssub.s32 %s9, 2
      %s22 = sadd.s32 1, %s17
      %p23 = scmp.ge.s32.totalorder %s22, 3
      %s24 = scalar_select %p23, 0, %s22
      %s25 = sadd.s32 1, %s16
      %s26 = scalar_select %p23, %s25, %s16
      %p27 = scmp.ge.s32.totalorder %s26, 1
      %s28 = scalar_select %p27, 0, %s26
      %s29 = ssub.s32 %s16, %s28
      %s30 = ssub.s32 %s17, %s24
      %s31 = sor.u32 %s29, %s30
      %p32 = scmp.eq.s32.totalorder %s31, 0
      %s34 = sadd.s32 %s33, 1
      %s35 = scalar_select %p32, %s33, %s34
      %p38 = pneg %p32
      %p39 = scmp.eq.s32.totalorder %s9, 2
      %p40 = por %p38, %p39
      %p41 = scmp.ne.s32.totalorder %s33, %s36
      %p42 = scmp.eq.s32.totalorder %s9, 0
      %p43 = por %p41, %p42
      %p44 = scmp.ne.s32.totalorder %s33, %s36
      %p45 = scmp.eq.s32.totalorder %s14, 2
      %p46 = por %p44, %p45
      %p47 = scmp.ne.s32.totalorder %s36, %s37
      %p48 = scmp.eq.s32.totalorder %s14, 0
      %p49 = por %p47, %p48
      %p50 = scmp.ne.s32.totalorder %s36, %s37
      %p51 = scmp.eq.s32.totalorder %s15, 2
      %p52 = por %p50, %p51
      %p54 = scmp.ne.s32.totalorder %s37, %s53
      %p55 = scmp.eq.s32.totalorder %s15, 0
      %p56 = por %p54, %p55
      %s57 = ssub.s32 %s17, %s24
      %p58 = scmp.eq.s32.totalorder %s57, 0
      %s60 = sadd.s32 %s59, 1
      %s61 = scalar_select %p58, %s59, %s60
      %p64 = pneg %p58
      %p65 = scmp.eq.s32.totalorder %s9, 2
      %p66 = por %p64, %p65
      %p67 = scmp.ne.s32.totalorder %s59, %s62
      %p68 = scmp.eq.s32.totalorder %s9, 0
      %p69 = por %p67, %p68
      %p70 = scmp.ne.s32.totalorder %s59, %s62
      %p71 = scmp.eq.s32.totalorder %s14, 2
      %p72 = por %p70, %p71
      %p73 = scmp.ne.s32.totalorder %s62, %s63
      %p74 = scmp.eq.s32.totalorder %s14, 0
      %p75 = por %p73, %p74
      %p76 = scmp.ne.s32.totalorder %s62, %s63
      %p77 = scmp.eq.s32.totalorder %s15, 2
      %p78 = por %p76, %p77
      %p80 = scmp.ne.s32.totalorder %s63, %s79
      %p81 = scmp.eq.s32.totalorder %s15, 0
      %p82 = por %p80, %p81
      %s84 = sadd.s32 %s83, 1
      %p87 = scmp.eq.s32.totalorder %s9, 2
      %p88 = scmp.ne.s32.totalorder %s83, %s85
      %p89 = scmp.eq.s32.totalorder %s9, 0
      %p90 = por %p88, %p89
      %p91 = scmp.ne.s32.totalorder %s83, %s85
      %p92 = scmp.eq.s32.totalorder %s14, 2
      %p93 = por %p91, %p92
      %p94 = scmp.ne.s32.totalorder %s85, %s86
      %p95 = scmp.eq.s32.totalorder %s14, 0
      %p96 = por %p94, %p95
      %p97 = scmp.ne.s32.totalorder %s85, %s86
      %p98 = scmp.eq.s32.totalorder %s15, 2
      %p99 = por %p97, %p98
      %p101 = scmp.ne.s32.totalorder %s86, %s100
      %p102 = scmp.eq.s32.totalorder %s15, 0
      %p103 = por %p101, %p102
      %s104 = ssub.s32 %s16, %s28
      %p105 = scmp.eq.s32.totalorder %s104, 0
      %s107 = sadd.s32 %s106, 1
      %s108 = scalar_select %p105, %s106, %s107
      %p111 = pneg %p105
      %p112 = scmp.eq.s32.totalorder %s9, 2
      %p113 = por %p111, %p112
      %p114 = scmp.ne.s32.totalorder %s106, %s109
      %p115 = scmp.eq.s32.totalorder %s9, 0
      %p116 = por %p114, %p115
      %p117 = scmp.ne.s32.totalorder %s106, %s109
      %p118 = scmp.eq.s32.totalorder %s14, 2
      %p119 = por %p117, %p118
      %p120 = scmp.ne.s32.totalorder %s109, %s110
      %p121 = scmp.eq.s32.totalorder %s14, 0
      %p122 = por %p120, %p121
      %p123 = scmp.ne.s32.totalorder %s109, %s110
      %p124 = scmp.eq.s32.totalorder %s15, 2
      %p125 = por %p123, %p124
      %p127 = scmp.ne.s32.totalorder %s110, %s126
      %p128 = scmp.eq.s32.totalorder %s15, 0
      %p129 = por %p127, %p128
      %p130 = scmp.le.s32.totalorder 1, %s9
      %p131 = scmp.lt.s32.totalorder %s9, 4
      %p132 = pnand %p130, %p131
      %p133 = pneg %p132
      // Predicated region
      $region9: #{featnet_forward.32} parent=5 // pred_check
        _
      $region10: #{featnet_forward.32} parent=5 // pred_check_branch
        %135 = sbr.rel (%p132) target = $region12
      $region11: #{featnet_forward.32} parent=5 // pred_region
        %s136 = ssub.s32 %s9, 1
        // Predicated region
        $region13: #{featnet_forward.32} parent=11 // pred_check
          %p137 = pneg %p96
        $region14: #{featnet_forward.32} parent=11 // pred_check_branch
          %139 = sbr.rel (%p137) target = $region16
        $region15: #{featnet_forward.32} parent=11 // pred_region
          _
        $region16: #{featnet_forward.32} parent=11 // pred_fallthru
          _
      $region12: #{featnet_forward.32} parent=5 // pred_fallthru
        _
      %p140 = scmp.lt.s32.totalorder %s9, 3
      // Predicated region
      $region17: #{featnet_forward.32} parent=5 // pred_check
        %p141 = pneg %p140
      $region18: #{featnet_forward.32} parent=5 // pred_check_branch
        %143 = sbr.rel (%p141) target = $region20
      $region19: #{featnet_forward.32} parent=5 // pred_region
        // Predicated region
        $region21: #{featnet_forward.32} parent=19 // pred_check
          %p144 = pneg %p43
        $region22: #{featnet_forward.32} parent=19 // pred_check_branch
          %146 = sbr.rel (%p144) target = $region24
        $region23: #{featnet_forward.32} parent=19 // pred_region
          %s147 = sand.u32 %s33, 1
          %s148 = sand.u32 %s33, 1
          %s149 = smul.addr %s148, 32
          %s150 = scalar_lea.vmem [#allocation3], %s149
          %s151 = smul.u32 2, %s16
          %s152 = smul.u32 4, %s17
          %s153 = smul.addr %s151, 12
          %s154 = sadd.s32 %s152, %s153
          %s155 = smul.addr %s154, 4
          %s156 = scalar_lea.vmem %s0, %s155
          // Predicated region
          $region25: #{featnet_forward.32} parent=23 // pred_check
            _
          $region26: #{featnet_forward.32} parent=23 // pred_check_branch
            %158 = sbr.rel (0) target = $region28
          $region27: #{featnet_forward.32} parent=23 // pred_region
            // Predicated region
            $region29: #{featnet_forward.32} parent=27 // pred_check
              _
            $region30: #{featnet_forward.32} parent=27 // pred_check_branch
              %160 = sbr.rel (0) target = $region32
            $region31: #{featnet_forward.32} parent=27 // pred_region
              loop: start=0, step=1, limit=1
              $region33: #{featnet_forward.32} parent=31 // loop_pre_header
                _
              $region34: #{featnet_forward.32} parent=31 // loop_header
                %s162 = sphi 0, %s166
                %p163 = scmp.ge.s32.totalorder %s162, 1
                %s167 = sphi %s156, %s156
                %s168 = sphi %s150, %s150
              $region35: #{featnet_forward.32} parent=31 // loop_header_branch
                %165 = sbr.rel (%p163) target = $region39
              $region36: #{featnet_forward.32} parent=31 // loop_body
                %v169 = vld [vmem:[%s167] sm:$0xff]
                %170 = vst [vmem:[%s168] sm:$0xff] %v169
                %v171 = vld [vmem:[%s167 + $0x8] sm:$0xff]
                %172 = vst [vmem:[%s168 + $0x8] sm:$0xff] %v171
                %v173 = vld [vmem:[%s167 + $0x30] sm:$0xff]
                %174 = vst [vmem:[%s168 + $0x10] sm:$0xff] %v173
                %v175 = vld [vmem:[%s167 + $0x38] sm:$0xff]
                %176 = vst [vmem:[%s168 + $0x18] sm:$0xff] %v175
              $region37: #{featnet_forward.32} parent=31 // loop_footer
                %s166 = sadd.s32 1, %s162
              $region38: #{featnet_forward.32} parent=31 // loop_footer_branch
                %161 = sbr.rel target = $region34
              $region39: #{featnet_forward.32} parent=31 // loop_exit
                _
            $region32: #{featnet_forward.32} parent=27 // pred_fallthru
              _
            // Predicated region
            $region40: #{featnet_forward.32} parent=27 // pred_check
              _
            $region41: #{featnet_forward.32} parent=27 // pred_check_branch
              %178 = sbr.rel target = $region43
            $region42: #{featnet_forward.32} parent=27 // pred_region
              _
            $region43: #{featnet_forward.32} parent=27 // pred_fallthru
              _
          $region28: #{featnet_forward.32} parent=23 // pred_fallthru
            _
          %179 = vnop
        $region24: #{featnet_forward.32} parent=19 // pred_fallthru
          _
        // Predicated region
        $region44: #{featnet_forward.32} parent=19 // pred_check
          %p180 = pneg %p69
        $region45: #{featnet_forward.32} parent=19 // pred_check_branch
          %182 = sbr.rel (%p180) target = $region47
        $region46: #{featnet_forward.32} parent=19 // pred_region
          %s183 = smul.u32 64, %s17
          %p184 = scmp.lt.s32.totalorder %s183, 191
          %s185 = scalar_select %p184, %s183, 191
          %s186 = smul.addr %s185, 4
          %s187 = scalar_lea.vmem %s1, %s186
          %s188 = smul.u32 64, %s17
        $region47: #{featnet_forward.32} parent=19 // pred_fallthru
          _
      $region20: #{featnet_forward.32} parent=5 // pred_fallthru
        _
      %p189 = scmp.le.s32.totalorder 1, %s9
      %p190 = scmp.lt.s32.totalorder %s9, 4
      %p191 = pnand %p189, %p190
      %p192 = pneg %p191
      // Predicated region
      $region48: #{featnet_forward.32} parent=5 // pred_check
        _
      $region49: #{featnet_forward.32} parent=5 // pred_check_branch
        %194 = sbr.rel (%p191) target = $region51
      $region50: #{featnet_forward.32} parent=5 // pred_region
        %s195 = ssub.s32 %s9, 1
        %s196 = sand.u32 %s36, 1
        %s197 = sand.u32 %s36, 1
        %s198 = smul.addr %s197, 32
        %s199 = scalar_lea.vmem [#allocation3], %s198
        // Predicated region
        $region52: #{featnet_forward.32} parent=50 // pred_check
          %p200 = pneg %p49
        $region53: #{featnet_forward.32} parent=50 // pred_check_branch
          %202 = sbr.rel (%p200) target = $region55
        $region54: #{featnet_forward.32} parent=50 // pred_region
          _
        $region55: #{featnet_forward.32} parent=50 // pred_fallthru
          _
        %s203 = sand.u32 %s36, 1
        %s204 = sand.u32 %s36, 1
        %s205 = smul.addr %s204, 32
        %s206 = scalar_lea.vmem [#allocation3], %s205
        %p207 = pneg %p49
        %p208 = pneg %p46
        %s209 = smul.u32 64, %s19
        %p210 = scmp.lt.s32.totalorder %s209, 191
        %s211 = scalar_select %p210, %s209, 191
        %s212 = smul.addr %s211, 4
        %s213 = scalar_lea.vmem %s1, %s212
        %p214 = pneg %p75
        %p215 = pneg %p72
        %p216 = pneg %p96
        %p217 = pneg %p93
        %p218 = pneg %p122
        %p219 = pneg %p119
        %s220 = smul.u32 2, %s18
        %p221 = scmp.lt.s32.totalorder %s220, 1
        %s222 = scalar_select %p221, %s220, 1
        %s223 = smul.addr %s222, 4
        %s224 = scalar_lea.vmem %s3, %s223
        %s225 = smul.u32 2, %s18
        %s226 = smul.u32 4, %s19
        %s227 = smul.u32 64, %s19
        %p228 = scmp.lt.s32.totalorder %s227, 191
        %s229 = scalar_select %p228, %s227, 191
        %s230 = smul.addr %s229, 4
        %s231 = scalar_lea.vmem %s1, %s230
        %s232 = smul.u32 64, %s19
        %s233 = smul.u32 2, %s18
        %p234 = scmp.lt.s32.totalorder %s233, 1
        %s235 = scalar_select %p234, %s233, 1
        %s236 = smul.addr %s235, 4
        %s237 = scalar_lea.vmem %s3, %s236
        %s238 = smul.u32 2, %s18
        %p239 = scmp.eq.s32.totalorder %s19, 0
        // Predicated region
        $region56: #{featnet_forward.32} parent=50 // pred_check
          %p240 = pneg %p239
        $region57: #{featnet_forward.32} parent=50 // pred_check_branch
          %242 = sbr.rel (%p240) target = $region59
        $region58: #{featnet_forward.32} parent=50 // pred_region
          %vm243 = vcmask 523264
          %244 = vst.msk [vmem:[#allocation2] sm:$0xff] %vm243, 0.0
          %245 = vst.msk [vmem:[#allocation2 + $0x8] sm:$0xff] %vm243, 0.0
        $region59: #{featnet_forward.32} parent=50 // pred_fallthru
          _
        %v246 = vld [vmem:[#allocation2] sm:$0xff]
        %v247 = vld [vmem:[#allocation2 + $0x8] sm:$0xff]
        %v248 = vld [vmem:[%s199] sm:$0xff]
        %v249 = vld [vmem:[%s199 + $0x8] sm:$0xff]
        %v250 = vld [vmem:[%s199 + $0x10] sm:$0xff]
        %v251 = vld [vmem:[%s199 + $0x18] sm:$0xff]
        %v252 = vld [vmem:[%s231] sm:$0xf]
        %v253 = vld [vmem:[%s231 + $0x4] sm:$0xf]
        %v254 = vld [vmem:[%s231 + $0x8] sm:$0xf]
        %v255 = vld [vmem:[%s231 + $0xc] sm:$0xf]
        %v256 = vld [vmem:[%s231 + $0x10] sm:$0xf]
        %v257 = vld [vmem:[%s231 + $0x14] sm:$0xf]
        %v258 = vld [vmem:[%s231 + $0x18] sm:$0xf]
        %v259 = vld [vmem:[%s231 + $0x1c] sm:$0xf]
        %v260 = vld [vmem:[%s231 + $0x20] sm:$0xf]
        %v261 = vld [vmem:[%s231 + $0x24] sm:$0xf]
        %v262 = vld [vmem:[%s231 + $0x28] sm:$0xf]
        %v263 = vld [vmem:[%s231 + $0x2c] sm:$0xf]
        %v264 = vld [vmem:[%s231 + $0x30] sm:$0xf]
        %v265 = vld [vmem:[%s231 + $0x34] sm:$0xf]
        %v266 = vld [vmem:[%s231 + $0x38] sm:$0xf]
        %v267 = vld [vmem:[%s231 + $0x3c] sm:$0xf]
        %v268 = vld [vmem:[%s231 + $0x40] sm:$0xf]
        %v269 = vld [vmem:[%s231 + $0x44] sm:$0xf]
        %v270 = vld [vmem:[%s231 + $0x48] sm:$0xf]
        %v271 = vld [vmem:[%s231 + $0x4c] sm:$0xf]
        %v272 = vld [vmem:[%s231 + $0x50] sm:$0xf]
        %v273 = vld [vmem:[%s231 + $0x54] sm:$0xf]
        %v274 = vld [vmem:[%s231 + $0x58] sm:$0xf]
        %v275 = vld [vmem:[%s231 + $0x5c] sm:$0xf]
        %v276 = vld [vmem:[%s231 + $0x60] sm:$0xf]
        %v277 = vld [vmem:[%s231 + $0x64] sm:$0xf]
        %v278 = vld [vmem:[%s231 + $0x68] sm:$0xf]
        %v279 = vld [vmem:[%s231 + $0x6c] sm:$0xf]
        %v280 = vld [vmem:[%s231 + $0x70] sm:$0xf]
        %v281 = vld [vmem:[%s231 + $0x74] sm:$0xf]
        %v282 = vld [vmem:[%s231 + $0x78] sm:$0xf]
        %v283 = vld [vmem:[%s231 + $0x7c] sm:$0xf]
        %v284 = vld [vmem:[%s231 + $0x80] sm:$0xf]
        %v285 = vld [vmem:[%s231 + $0x84] sm:$0xf]
        %v286 = vld [vmem:[%s231 + $0x88] sm:$0xf]
        %v287 = vld [vmem:[%s231 + $0x8c] sm:$0xf]
        %v288 = vld [vmem:[%s231 + $0x90] sm:$0xf]
        %v289 = vld [vmem:[%s231 + $0x94] sm:$0xf]
        %v290 = vld [vmem:[%s231 + $0x98] sm:$0xf]
        %v291 = vld [vmem:[%s231 + $0x9c] sm:$0xf]
        %v292 = vld [vmem:[%s231 + $0xa0] sm:$0xf]
        %v293 = vld [vmem:[%s231 + $0xa4] sm:$0xf]
        %v294 = vld [vmem:[%s231 + $0xa8] sm:$0xf]
        %v295 = vld [vmem:[%s231 + $0xac] sm:$0xf]
        %v296 = vld [vmem:[%s231 + $0xb0] sm:$0xf]
        %v297 = vld [vmem:[%s231 + $0xb4] sm:$0xf]
        %v298 = vld [vmem:[%s231 + $0xb8] sm:$0xf]
        %v299 = vld [vmem:[%s231 + $0xbc] sm:$0xf]
        %v300 = vld [vmem:[%s231 + $0xc0] sm:$0xf]
        %v301 = vld [vmem:[%s231 + $0xc4] sm:$0xf]
        %v302 = vld [vmem:[%s231 + $0xc8] sm:$0xf]
        %v303 = vld [vmem:[%s231 + $0xcc] sm:$0xf]
        %v304 = vld [vmem:[%s231 + $0xd0] sm:$0xf]
        %v305 = vld [vmem:[%s231 + $0xd4] sm:$0xf]
        %v306 = vld [vmem:[%s231 + $0xd8] sm:$0xf]
        %v307 = vld [vmem:[%s231 + $0xdc] sm:$0xf]
        %v308 = vld [vmem:[%s231 + $0xe0] sm:$0xf]
        %v309 = vld [vmem:[%s231 + $0xe4] sm:$0xf]
        %v310 = vld [vmem:[%s231 + $0xe8] sm:$0xf]
        %v311 = vld [vmem:[%s231 + $0xec] sm:$0xf]
        %v312 = vld [vmem:[%s231 + $0xf0] sm:$0xf]
        %v313 = vld [vmem:[%s231 + $0xf4] sm:$0xf]
        %v314 = vld [vmem:[%s231 + $0xf8] sm:$0xf]
        %v315 = vld [vmem:[%s231 + $0xfc] sm:$0xf]
        %v320 = vunpack.c.l.b16 %v248
        %v321 = vunpack.c.h.b16 %v248
        %v322 = vunpack.c.l.b16 %v249
        %v323 = vunpack.c.h.b16 %v249
        %v324 = vunpack.c.l.b16 %v250
        %v325 = vunpack.c.h.b16 %v250
        %v326 = vunpack.c.l.b16 %v251
        %v327 = vunpack.c.h.b16 %v251
        %v328 = vpack.c.b16 %v324, %v320
        %v329 = vpack.c.b16 %v325, %v321
        %v330 = vpack.c.b16 %v326, %v322
        %v331 = vpack.c.b16 %v327, %v323
        %v400 = vunpack.c.l.b16 %v252
        %v401 = vunpack.c.l.b16 %v253
        %v402 = vunpack.c.l.b16 %v254
        %v403 = vunpack.c.l.b16 %v255
        %v404 = vunpack.c.l.b16 %v256
        %v405 = vunpack.c.l.b16 %v257
        %v406 = vunpack.c.l.b16 %v258
        %v407 = vunpack.c.l.b16 %v259
        %v408 = vunpack.c.l.b16 %v260
        %v409 = vunpack.c.l.b16 %v261
        %v410 = vunpack.c.l.b16 %v262
        %v411 = vunpack.c.l.b16 %v263
        %v412 = vunpack.c.l.b16 %v264
        %v413 = vunpack.c.l.b16 %v265
        %v414 = vunpack.c.l.b16 %v266
        %v415 = vunpack.c.l.b16 %v267
        %v416 = vunpack.c.l.b16 %v268
        %v417 = vunpack.c.l.b16 %v269
        %v418 = vunpack.c.l.b16 %v270
        %v419 = vunpack.c.l.b16 %v271
        %v420 = vunpack.c.l.b16 %v272
        %v421 = vunpack.c.l.b16 %v273
        %v422 = vunpack.c.l.b16 %v274
        %v423 = vunpack.c.l.b16 %v275
        %v424 = vunpack.c.l.b16 %v276
        %v425 = vunpack.c.l.b16 %v277
        %v426 = vunpack.c.l.b16 %v278
        %v427 = vunpack.c.l.b16 %v279
        %v428 = vunpack.c.l.b16 %v280
        %v429 = vunpack.c.l.b16 %v281
        %v430 = vunpack.c.l.b16 %v282
        %v431 = vunpack.c.l.b16 %v283
        %v432 = vunpack.c.l.b16 %v284
        %v433 = vunpack.c.l.b16 %v285
        %v434 = vunpack.c.l.b16 %v286
        %v435 = vunpack.c.l.b16 %v287
        %v436 = vunpack.c.l.b16 %v288
        %v437 = vunpack.c.l.b16 %v289
        %v438 = vunpack.c.l.b16 %v290
        %v439 = vunpack.c.l.b16 %v291
        %v440 = vunpack.c.l.b16 %v292
        %v441 = vunpack.c.l.b16 %v293
        %v442 = vunpack.c.l.b16 %v294
        %v443 = vunpack.c.l.b16 %v295
        %v444 = vunpack.c.l.b16 %v296
        %v445 = vunpack.c.l.b16 %v297
        %v446 = vunpack.c.l.b16 %v298
        %v447 = vunpack.c.l.b16 %v299
        %v448 = vunpack.c.l.b16 %v300
        %v449 = vunpack.c.l.b16 %v301
        %v450 = vunpack.c.l.b16 %v302
        %v451 = vunpack.c.l.b16 %v303
        %v452 = vunpack.c.l.b16 %v304
        %v453 = vunpack.c.l.b16 %v305
        %v454 = vunpack.c.l.b16 %v306
        %v455 = vunpack.c.l.b16 %v307
        %v456 = vunpack.c.l.b16 %v308
        %v457 = vunpack.c.l.b16 %v309
        %v458 = vunpack.c.l.b16 %v310
        %v459 = vunpack.c.l.b16 %v311
        %v460 = vunpack.c.l.b16 %v312
        %v461 = vunpack.c.l.b16 %v313
        %v462 = vunpack.c.l.b16 %v314
        %v463 = vunpack.c.l.b16 %v315
        %v464 = vpack.c.b16 %v401, %v400
        %v465 = vpack.c.b16 %v403, %v402
        %v466 = vpack.c.b16 %v405, %v404
        %v467 = vpack.c.b16 %v407, %v406
        %v468 = vpack.c.b16 %v409, %v408
        %v469 = vpack.c.b16 %v411, %v410
        %v470 = vpack.c.b16 %v413, %v412
        %v471 = vpack.c.b16 %v415, %v414
        %v472 = vpack.c.b16 %v417, %v416
        %v473 = vpack.c.b16 %v419, %v418
        %v474 = vpack.c.b16 %v421, %v420
        %v475 = vpack.c.b16 %v423, %v422
        %v476 = vpack.c.b16 %v425, %v424
        %v477 = vpack.c.b16 %v427, %v426
        %v478 = vpack.c.b16 %v429, %v428
        %v479 = vpack.c.b16 %v431, %v430
        %v480 = vpack.c.b16 %v433, %v432
        %v481 = vpack.c.b16 %v435, %v434
        %v482 = vpack.c.b16 %v437, %v436
        %v483 = vpack.c.b16 %v439, %v438
        %v484 = vpack.c.b16 %v441, %v440
        %v485 = vpack.c.b16 %v443, %v442
        %v486 = vpack.c.b16 %v445, %v444
        %v487 = vpack.c.b16 %v447, %v446
        %v488 = vpack.c.b16 %v449, %v448
        %v489 = vpack.c.b16 %v451, %v450
        %v490 = vpack.c.b16 %v453, %v452
        %v491 = vpack.c.b16 %v455, %v454
        %v492 = vpack.c.b16 %v457, %v456
        %v493 = vpack.c.b16 %v459, %v458
        %v494 = vpack.c.b16 %v461, %v460
        %v495 = vpack.c.b16 %v463, %v462
        %528 = vmatpush.bf16.msra.mxu0 %v471
        %529 = vmatpush.bf16.msra.mxu0 %v470
        %530 = vmatpush.bf16.msra.mxu0 %v469
        %531 = vmatpush.bf16.msra.mxu0 %v468
        %532 = vmatpush.bf16.msra.mxu0 %v467
        %533 = vmatpush.bf16.msra.mxu0 %v466
        %534 = vmatpush.bf16.msra.mxu0 %v465
        %535 = vmatpush.bf16.msra.mxu0 %v464
        %536 = vmatmul.bf16.gmra.mxu0 %v328
        %v537 = vpop.f32.mrf.mxu0
        %v538 = vadd.f32 0.0, %v537
        %v539 = vpop.f32.mrf.mxu0
        %v540 = vadd.f32 0.0, %v539
        %541 = vdwg.mxu0
        %542 = vmatpush.bf16.msra.mxu0 %v479
        %543 = vmatpush.bf16.msra.mxu0 %v478
        %544 = vmatpush.bf16.msra.mxu0 %v477
        %545 = vmatpush.bf16.msra.mxu0 %v476
        %546 = vmatpush.bf16.msra.mxu0 %v475
        %547 = vmatpush.bf16.msra.mxu0 %v474
        %548 = vmatpush.bf16.msra.mxu0 %v473
        %549 = vmatpush.bf16.msra.mxu0 %v472
        %550 = vmatmul.bf16.gmra.mxu0 %v329
        %v551 = vpop.f32.mrf.mxu0
        %v552 = vadd.f32 %v538, %v551
        %v553 = vpop.f32.mrf.mxu0
        %v554 = vadd.f32 %v540, %v553
        %555 = vdwg.mxu0
        %556 = vmatpush.bf16.msra.mxu0 %v487
        %557 = vmatpush.bf16.msra.mxu0 %v486
        %558 = vmatpush.bf16.msra.mxu0 %v485
        %559 = vmatpush.bf16.msra.mxu0 %v484
        %560 = vmatpush.bf16.msra.mxu0 %v483
        %561 = vmatpush.bf16.msra.mxu0 %v482
        %562 = vmatpush.bf16.msra.mxu0 %v481
        %563 = vmatpush.bf16.msra.mxu0 %v480
        %564 = vmatmul.bf16.gmra.mxu0 %v330
        %v565 = vpop.f32.mrf.mxu0
        %v566 = vadd.f32 %v552, %v565
        %v567 = vpop.f32.mrf.mxu0
        %v568 = vadd.f32 %v554, %v567
        %569 = vdwg.mxu0
        %570 = vmatpush.bf16.msra.mxu0 %v495
        %571 = vmatpush.bf16.msra.mxu0 %v494
        %572 = vmatpush.bf16.msra.mxu0 %v493
        %573 = vmatpush.bf16.msra.mxu0 %v492
        %574 = vmatpush.bf16.msra.mxu0 %v491
        %575 = vmatpush.bf16.msra.mxu0 %v490
        %576 = vmatpush.bf16.msra.mxu0 %v489
        %577 = vmatpush.bf16.msra.mxu0 %v488
        %578 = vmatmul.bf16.gmra.mxu0 %v331
        %v579 = vpop.f32.mrf.mxu0
        %v580 = vadd.f32 %v566, %v579
        %v581 = vpop.f32.mrf.mxu0
        %v582 = vadd.f32 %v568, %v581
        %583 = vdwg.mxu0
        %v584 = vadd.f32 %v246, %v580
        %v585 = vadd.f32 %v247, %v582
        %vm586 = vcmask 523264
        %587 = vst.msk [vmem:[#allocation2] sm:$0xff] %vm586, %v584
        %588 = vst.msk [vmem:[#allocation2 + $0x8] sm:$0xff] %vm586, %v585
        %p589 = scmp.eq.s32.totalorder %s19, 2
        // Predicated region
        $region60: #{featnet_forward.32} parent=50 // pred_check
          %p590 = pneg %p589
        $region61: #{featnet_forward.32} parent=50 // pred_check_branch
          %592 = sbr.rel (%p590) target = $region63
        $region62: #{featnet_forward.32} parent=50 // pred_region
          %v593 = vld [vmem:[#allocation2] sm:$0xff]
          %v594 = vld [vmem:[#allocation2 + $0x8] sm:$0xff]
          %v595 = vld [vmem:[%s2] sm:$0x1]
          %v597 = vperm.slane %v595, 0
          %v599 = vadd.f32 %v593, %v597
          %v600 = vadd.f32 %v594, %v597
          %vm601 = vcmp.ge.f32.partialorder %v599, 0.0
          %vm602 = vcmp.ge.f32.partialorder %v600, 0.0
          %v603 = vmul.f32 %v599, 0.01
          %v604 = vmul.f32 %v600, 0.01
          %v605 = vsel %vm601, %v599, %v603
          %v606 = vsel %vm602, %v600, %v604
          %v607 = vpack.c.bf16 %v605, %v605
          %v608 = vpack.c.bf16 %v606, %v606
          %vm609 = vcmask 519168
          %610 = vst.msk [vmem:[%s237] sm:$0xf] %vm609, %v607
          %611 = vst.msk [vmem:[%s237 + $0x4] sm:$0xf] %vm609, %v608
        $region63: #{featnet_forward.32} parent=50 // pred_fallthru
          _
        %s612 = smul.u32 2, %s18
        %p613 = scmp.lt.s32.totalorder %s612, 1
        %s614 = scalar_select %p613, %s612, 1
        %s615 = smul.addr %s614, 4
        %s616 = scalar_lea.vmem %s3, %s615
        // Predicated region
        $region64: #{featnet_forward.32} parent=50 // pred_check
          %p617 = pneg %p119
        $region65: #{featnet_forward.32} parent=50 // pred_check_branch
          %619 = sbr.rel (%p617) target = $region67
        $region66: #{featnet_forward.32} parent=50 // pred_region
          %s620 = smul.u32 2, %s18
        $region67: #{featnet_forward.32} parent=50 // pred_fallthru
          _
        // Predicated region
        $region68: #{featnet_forward.32} parent=50 // pred_check
          %p621 = pneg %p119
        $region69: #{featnet_forward.32} parent=50 // pred_check_branch
          %623 = sbr.rel (%p621) target = $region71
        $region70: #{featnet_forward.32} parent=50 // pred_region
          %s624 = smul.u32 2, %s18
          %p625 = scmp.lt.s32.totalorder %s624, 1
          %s626 = scalar_select %p625, %s624, 1
          %s627 = smul.addr %s626, 4
          %s628 = scalar_lea.vmem %s3, %s627
        $region71: #{featnet_forward.32} parent=50 // pred_fallthru
          _
      $region51: #{featnet_forward.32} parent=5 // pred_fallthru
        _
      %p629 = scmp.le.s32.totalorder 2, %s9
      // Predicated region
      $region72: #{featnet_forward.32} parent=5 // pred_check
        %p630 = pneg %p629
      $region73: #{featnet_forward.32} parent=5 // pred_check_branch
        %632 = sbr.rel (%p630) target = $region75
      $region74: #{featnet_forward.32} parent=5 // pred_region
        %s633 = ssub.s32 %s9, 2
      $region75: #{featnet_forward.32} parent=5 // pred_fallthru
        _
    $region6: #{featnet_forward.32} parent=1 // loop_footer
      %s13 = sadd.s32 1, %s9
    $region7: #{featnet_forward.32} parent=1 // loop_footer_branch
      %8 = sbr.rel target = $region3
    $region8: #{featnet_forward.32} parent=1 // loop_exit
      _

// kernel: featnet_forward.40
$region0: #{featnet_forward.40}
  #allocation0 [shape = 'u32[]', space=smem, size = 0x4, offset = 0x4, fixed_abs, tag = 'smem constant byte address 0x4 - core index']
  #allocation1 [shape = 'u32[72,128]{1,0:T(1,128)}', space=vmem, size = 0x9000, scoped, tag = 'internal scratch']
  #allocation2 [shape = 'f32[128,32]{1,0:T(8,128)}', space=vmem, size = 0x10000, scoped, tag = 'scratch operand']
  %s0 = inlined_call_operand.vmem [shape: bf16[128,128], index: 0, kind: input, shape index: {}]
  %s1 = inlined_call_operand.vmem [shape: bf16[128,32], index: 1, kind: input, shape index: {}]
  %s2 = inlined_call_operand.vmem [shape: f32[1,32], index: 2, kind: input, shape index: {}]
  %s3 = inlined_call_operand.vmem [shape: f32[128,32], index: 3, kind: output, shape index: {}]
  %s4 = sld [smem:[#allocation0]]
  $region30: #{featnet_forward.40} parent=0
    _
  %s6 = ssub.s32 1, %s4
  %s7 = scalar_select 0, %s6, %s4
  // Predicated region
  $region2: #{featnet_forward.40} parent=0 // pred_check
    _
  $region3: #{featnet_forward.40} parent=0 // pred_check_branch
    %9 = sbr.rel (0) target = $region5
  $region4: #{featnet_forward.40} parent=0 // pred_region
    _
  $region5: #{featnet_forward.40} parent=0 // pred_fallthru
    _
  // Predicated region
  $region6: #{featnet_forward.40} parent=0 // pred_check
    _
  $region7: #{featnet_forward.40} parent=0 // pred_check_branch
    %11 = sbr.rel (0) target = $region9
  $region8: #{featnet_forward.40} parent=0 // pred_region
    _
  $region9: #{featnet_forward.40} parent=0 // pred_fallthru
    _
  // Predicated region
  $region10: #{featnet_forward.40} parent=0 // pred_check
    _
  $region11: #{featnet_forward.40} parent=0 // pred_check_branch
    %13 = sbr.rel (0) target = $region13
  $region12: #{featnet_forward.40} parent=0 // pred_region
    _
  $region13: #{featnet_forward.40} parent=0 // pred_fallthru
    _
  %p14 = scmp.eq.s32.totalorder 0, 0
  // Predicated region
  $region14: #{featnet_forward.40} parent=0 // pred_check
    %p15 = pneg %p14
  $region15: #{featnet_forward.40} parent=0 // pred_check_branch
    %17 = sbr.rel (%p15) target = $region17
  $region16: #{featnet_forward.40} parent=0 // pred_region
    %vm18 = vcmask 261120
    %19 = vst.msk [vmem:[#allocation2] sm:$0xff] %vm18, 0.0
    %20 = vst.msk [vmem:[#allocation2 + $0x8] sm:$0xff] %vm18, 0.0
    %21 = vst.msk [vmem:[#allocation2 + $0x10] sm:$0xff] %vm18, 0.0
    %22 = vst.msk [vmem:[#allocation2 + $0x18] sm:$0xff] %vm18, 0.0
    %23 = vst.msk [vmem:[#allocation2 + $0x20] sm:$0xff] %vm18, 0.0
    %24 = vst.msk [vmem:[#allocation2 + $0x28] sm:$0xff] %vm18, 0.0
    %25 = vst.msk [vmem:[#allocation2 + $0x30] sm:$0xff] %vm18, 0.0
    %26 = vst.msk [vmem:[#allocation2 + $0x38] sm:$0xff] %vm18, 0.0
    %27 = vst.msk [vmem:[#allocation2 + $0x40] sm:$0xff] %vm18, 0.0
    %28 = vst.msk [vmem:[#allocation2 + $0x48] sm:$0xff] %vm18, 0.0
    %29 = vst.msk [vmem:[#allocation2 + $0x50] sm:$0xff] %vm18, 0.0
    %30 = vst.msk [vmem:[#allocation2 + $0x58] sm:$0xff] %vm18, 0.0
    %31 = vst.msk [vmem:[#allocation2 + $0x60] sm:$0xff] %vm18, 0.0
    %32 = vst.msk [vmem:[#allocation2 + $0x68] sm:$0xff] %vm18, 0.0
    %33 = vst.msk [vmem:[#allocation2 + $0x70] sm:$0xff] %vm18, 0.0
    %34 = vst.msk [vmem:[#allocation2 + $0x78] sm:$0xff] %vm18, 0.0
  $region17: #{featnet_forward.40} parent=0 // pred_fallthru
    _
  %v35 = vld [vmem:[#allocation2] sm:$0xff]
  %v36 = vld [vmem:[#allocation2 + $0x8] sm:$0xff]
  %v37 = vld [vmem:[#allocation2 + $0x10] sm:$0xff]
  %v38 = vld [vmem:[#allocation2 + $0x18] sm:$0xff]
  %v39 = vld [vmem:[#allocation2 + $0x20] sm:$0xff]
  %v40 = vld [vmem:[#allocation2 + $0x28] sm:$0xff]
  %v41 = vld [vmem:[#allocation2 + $0x30] sm:$0xff]
  %v42 = vld [vmem:[#allocation2 + $0x38] sm:$0xff]
  %v43 = vld [vmem:[#allocation2 + $0x40] sm:$0xff]
  %v44 = vld [vmem:[#allocation2 + $0x48] sm:$0xff]
  %v45 = vld [vmem:[#allocation2 + $0x50] sm:$0xff]
  %v46 = vld [vmem:[#allocation2 + $0x58] sm:$0xff]
  %v47 = vld [vmem:[#allocation2 + $0x60] sm:$0xff]
  %v48 = vld [vmem:[#allocation2 + $0x68] sm:$0xff]
  %v49 = vld [vmem:[#allocation2 + $0x70] sm:$0xff]
  %v50 = vld [vmem:[#allocation2 + $0x78] sm:$0xff]
  %v51 = vld [vmem:[%s0] sm:$0xf]
  %v52 = vld [vmem:[%s0 + $0x4] sm:$0xf]
  %v53 = vld [vmem:[%s0 + $0x8] sm:$0xf]
  %v54 = vld [vmem:[%s0 + $0xc] sm:$0xf]
  %v55 = vld [vmem:[%s0 + $0x10] sm:$0xf]
  %v56 = vld [vmem:[%s0 + $0x14] sm:$0xf]
  %v57 = vld [vmem:[%s0 + $0x18] sm:$0xf]
  %v58 = vld [vmem:[%s0 + $0x1c] sm:$0xf]
  %v59 = vld [vmem:[%s0 + $0x20] sm:$0xf]
  %v60 = vld [vmem:[%s0 + $0x24] sm:$0xf]
  %v61 = vld [vmem:[%s0 + $0x28] sm:$0xf]
  %v62 = vld [vmem:[%s0 + $0x2c] sm:$0xf]
  %v63 = vld [vmem:[%s0 + $0x30] sm:$0xf]
  %v64 = vld [vmem:[%s0 + $0x34] sm:$0xf]
  %v65 = vld [vmem:[%s0 + $0x38] sm:$0xf]
  %v66 = vld [vmem:[%s0 + $0x3c] sm:$0xf]
  %v67 = vld [vmem:[%s1] sm:$0xf]
  %v68 = vld [vmem:[%s1 + $0x4] sm:$0xf]
  %v69 = vld [vmem:[%s1 + $0x8] sm:$0xf]
  %v70 = vld [vmem:[%s1 + $0xc] sm:$0xf]
  %v71 = vld [vmem:[%s1 + $0x10] sm:$0xf]
  %v72 = vld [vmem:[%s1 + $0x14] sm:$0xf]
  %v73 = vld [vmem:[%s1 + $0x18] sm:$0xf]
  %v74 = vld [vmem:[%s1 + $0x1c] sm:$0xf]
  %v75 = vld [vmem:[%s1 + $0x20] sm:$0xf]
  %v76 = vld [vmem:[%s1 + $0x24] sm:$0xf]
  %v77 = vld [vmem:[%s1 + $0x28] sm:$0xf]
  %v78 = vld [vmem:[%s1 + $0x2c] sm:$0xf]
  %v79 = vld [vmem:[%s1 + $0x30] sm:$0xf]
  %v80 = vld [vmem:[%s1 + $0x34] sm:$0xf]
  %v81 = vld [vmem:[%s1 + $0x38] sm:$0xf]
  %v82 = vld [vmem:[%s1 + $0x3c] sm:$0xf]
  %v99 = vunpack.c.l.b16 %v51
  %v100 = vunpack.c.l.b16 %v52
  %v101 = vunpack.c.l.b16 %v53
  %v102 = vunpack.c.l.b16 %v54
  %v103 = vunpack.c.l.b16 %v55
  %v104 = vunpack.c.l.b16 %v56
  %v105 = vunpack.c.l.b16 %v57
  %v106 = vunpack.c.l.b16 %v58
  %v107 = vunpack.c.l.b16 %v59
  %v108 = vunpack.c.l.b16 %v60
  %v109 = vunpack.c.l.b16 %v61
  %v110 = vunpack.c.l.b16 %v62
  %v111 = vunpack.c.l.b16 %v63
  %v112 = vunpack.c.l.b16 %v64
  %v113 = vunpack.c.l.b16 %v65
  %v114 = vunpack.c.l.b16 %v66
  %v115 = vpack.c.b16 %v100, %v99
  %v116 = vpack.c.b16 %v102, %v101
  %v117 = vpack.c.b16 %v104, %v103
  %v118 = vpack.c.b16 %v106, %v105
  %v119 = vpack.c.b16 %v108, %v107
  %v120 = vpack.c.b16 %v110, %v109
  %v121 = vpack.c.b16 %v112, %v111
  %v122 = vpack.c.b16 %v114, %v113
  %v147 = vunpack.c.l.b16 %v67
  %v148 = vunpack.c.l.b16 %v68
  %v149 = vunpack.c.l.b16 %v69
  %v150 = vunpack.c.l.b16 %v70
  %v151 = vunpack.c.l.b16 %v71
  %v152 = vunpack.c.l.b16 %v72
  %v153 = vunpack.c.l.b16 %v73
  %v154 = vunpack.c.l.b16 %v74
  %v155 = vunpack.c.l.b16 %v75
  %v156 = vunpack.c.l.b16 %v76
  %v157 = vunpack.c.l.b16 %v77
  %v158 = vunpack.c.l.b16 %v78
  %v159 = vunpack.c.l.b16 %v79
  %v160 = vunpack.c.l.b16 %v80
  %v161 = vunpack.c.l.b16 %v81
  %v162 = vunpack.c.l.b16 %v82
  %v163 = vpack.c.b16 %v148, %v147
  %v164 = vpack.c.b16 %v150, %v149
  %v165 = vpack.c.b16 %v152, %v151
  %v166 = vpack.c.b16 %v154, %v153
  %v167 = vpack.c.b16 %v156, %v155
  %v168 = vpack.c.b16 %v158, %v157
  %v169 = vpack.c.b16 %v160, %v159
  %v170 = vpack.c.b16 %v162, %v161
  %179 = vmatpush.bf16.msra.mxu0 %v170
  %180 = vmatpush.bf16.msra.mxu0 %v169
  %181 = vmatpush.bf16.msra.mxu0 %v168
  %182 = vmatpush.bf16.msra.mxu0 %v167
  %183 = vmatpush.bf16.msra.mxu0 %v166
  %184 = vmatpush.bf16.msra.mxu0 %v165
  %185 = vmatpush.bf16.msra.mxu0 %v164
  %186 = vmatpush.bf16.msra.mxu0 %v163
  %187 = vmatmul.bf16.gmra.mxu0 %v115
  %v188 = vpop.f32.mrf.mxu0
  %v189 = vadd.f32 0.0, %v188
  %v190 = vpop.f32.mrf.mxu0
  %v191 = vadd.f32 0.0, %v190
  %192 = vmatmul.bf16.gmra.mxu0 %v116
  %v193 = vpop.f32.mrf.mxu0
  %v194 = vadd.f32 0.0, %v193
  %v195 = vpop.f32.mrf.mxu0
  %v196 = vadd.f32 0.0, %v195
  %197 = vmatmul.bf16.gmra.mxu0 %v117
  %v198 = vpop.f32.mrf.mxu0
  %v199 = vadd.f32 0.0, %v198
  %v200 = vpop.f32.mrf.mxu0
  %v201 = vadd.f32 0.0, %v200
  %202 = vmatmul.bf16.gmra.mxu0 %v118
  %v203 = vpop.f32.mrf.mxu0
  %v204 = vadd.f32 0.0, %v203
  %v205 = vpop.f32.mrf.mxu0
  %v206 = vadd.f32 0.0, %v205
  %207 = vmatmul.bf16.gmra.mxu0 %v119
  %v208 = vpop.f32.mrf.mxu0
  %v209 = vadd.f32 0.0, %v208
  %v210 = vpop.f32.mrf.mxu0
  %v211 = vadd.f32 0.0, %v210
  %212 = vmatmul.bf16.gmra.mxu0 %v120
  %v213 = vpop.f32.mrf.mxu0
  %v214 = vadd.f32 0.0, %v213
  %v215 = vpop.f32.mrf.mxu0
  %v216 = vadd.f32 0.0, %v215
  %217 = vmatmul.bf16.gmra.mxu0 %v121
  %v218 = vpop.f32.mrf.mxu0
  %v219 = vadd.f32 0.0, %v218
  %v220 = vpop.f32.mrf.mxu0
  %v221 = vadd.f32 0.0, %v220
  %222 = vmatmul.bf16.gmra.mxu0 %v122
  %v223 = vpop.f32.mrf.mxu0
  %v224 = vadd.f32 0.0, %v223
  %v225 = vpop.f32.mrf.mxu0
  %v226 = vadd.f32 0.0, %v225
  %227 = vdwg.mxu0
  %v228 = vadd.f32 %v35, %v189
  %v229 = vadd.f32 %v36, %v191
  %v230 = vadd.f32 %v37, %v194
  %v231 = vadd.f32 %v38, %v196
  %v232 = vadd.f32 %v39, %v199
  %v233 = vadd.f32 %v40, %v201
  %v234 = vadd.f32 %v41, %v204
  %v235 = vadd.f32 %v42, %v206
  %v236 = vadd.f32 %v43, %v209
  %v237 = vadd.f32 %v44, %v211
  %v238 = vadd.f32 %v45, %v214
  %v239 = vadd.f32 %v46, %v216
  %v240 = vadd.f32 %v47, %v219
  %v241 = vadd.f32 %v48, %v221
  %v242 = vadd.f32 %v49, %v224
  %v243 = vadd.f32 %v50, %v226
  %vm244 = vcmask 261120
  %245 = vst.msk [vmem:[#allocation2] sm:$0xff] %vm244, %v228
  %246 = vst.msk [vmem:[#allocation2 + $0x8] sm:$0xff] %vm244, %v229
  %247 = vst.msk [vmem:[#allocation2 + $0x10] sm:$0xff] %vm244, %v230
  %248 = vst.msk [vmem:[#allocation2 + $0x18] sm:$0xff] %vm244, %v231
  %249 = vst.msk [vmem:[#allocation2 + $0x20] sm:$0xff] %vm244, %v232
  %250 = vst.msk [vmem:[#allocation2 + $0x28] sm:$0xff] %vm244, %v233
  %251 = vst.msk [vmem:[#allocation2 + $0x30] sm:$0xff] %vm244, %v234
  %252 = vst.msk [vmem:[#allocation2 + $0x38] sm:$0xff] %vm244, %v235
  %253 = vst.msk [vmem:[#allocation2 + $0x40] sm:$0xff] %vm244, %v236
  %254 = vst.msk [vmem:[#allocation2 + $0x48] sm:$0xff] %vm244, %v237
  %255 = vst.msk [vmem:[#allocation2 + $0x50] sm:$0xff] %vm244, %v238
  %256 = vst.msk [vmem:[#allocation2 + $0x58] sm:$0xff] %vm244, %v239
  %257 = vst.msk [vmem:[#allocation2 + $0x60] sm:$0xff] %vm244, %v240
  %258 = vst.msk [vmem:[#allocation2 + $0x68] sm:$0xff] %vm244, %v241
  %259 = vst.msk [vmem:[#allocation2 + $0x70] sm:$0xff] %vm244, %v242
  %260 = vst.msk [vmem:[#allocation2 + $0x78] sm:$0xff] %vm244, %v243
  // Predicated region
  $region18: #{featnet_forward.40} parent=0 // pred_check
    %p261 = pneg %p14
  $region19: #{featnet_forward.40} parent=0 // pred_check_branch
    %263 = sbr.rel (%p261) target = $region21
  $region20: #{featnet_forward.40} parent=0 // pred_region
    %v264 = vld [vmem:[#allocation2] sm:$0xff]
    %v265 = vld [vmem:[#allocation2 + $0x8] sm:$0xff]
    %v266 = vld [vmem:[#allocation2 + $0x10] sm:$0xff]
    %v267 = vld [vmem:[#allocation2 + $0x18] sm:$0xff]
    %v268 = vld [vmem:[#allocation2 + $0x20] sm:$0xff]
    %v269 = vld [vmem:[#allocation2 + $0x28] sm:$0xff]
    %v270 = vld [vmem:[#allocation2 + $0x30] sm:$0xff]
    %v271 = vld [vmem:[#allocation2 + $0x38] sm:$0xff]
    %v272 = vld [vmem:[#allocation2 + $0x40] sm:$0xff]
    %v273 = vld [vmem:[#allocation2 + $0x48] sm:$0xff]
    %v274 = vld [vmem:[#allocation2 + $0x50] sm:$0xff]
    %v275 = vld [vmem:[#allocation2 + $0x58] sm:$0xff]
    %v276 = vld [vmem:[#allocation2 + $0x60] sm:$0xff]
    %v277 = vld [vmem:[#allocation2 + $0x68] sm:$0xff]
    %v278 = vld [vmem:[#allocation2 + $0x70] sm:$0xff]
    %v279 = vld [vmem:[#allocation2 + $0x78] sm:$0xff]
    %v280 = vld [vmem:[%s2] sm:$0x1]
    %v282 = vperm.slane %v280, 0
    %v284 = vadd.f32 %v264, %v282
    %v285 = vadd.f32 %v265, %v282
    %v286 = vadd.f32 %v266, %v282
    %v287 = vadd.f32 %v267, %v282
    %v288 = vadd.f32 %v268, %v282
    %v289 = vadd.f32 %v269, %v282
    %v290 = vadd.f32 %v270, %v282
    %v291 = vadd.f32 %v271, %v282
    %v292 = vadd.f32 %v272, %v282
    %v293 = vadd.f32 %v273, %v282
    %v294 = vadd.f32 %v274, %v282
    %v295 = vadd.f32 %v275, %v282
    %v296 = vadd.f32 %v276, %v282
    %v297 = vadd.f32 %v277, %v282
    %v298 = vadd.f32 %v278, %v282
    %v299 = vadd.f32 %v279, %v282
    %300 = vst.msk [vmem:[%s3] sm:$0xff] %vm244, %v284
    %301 = vst.msk [vmem:[%s3 + $0x8] sm:$0xff] %vm244, %v285
    %302 = vst.msk [vmem:[%s3 + $0x10] sm:$0xff] %vm244, %v286
    %303 = vst.msk [vmem:[%s3 + $0x18] sm:$0xff] %vm244, %v287
    %304 = vst.msk [vmem:[%s3 + $0x20] sm:$0xff] %vm244, %v288
    %305 = vst.msk [vmem:[%s3 + $0x28] sm:$0xff] %vm244, %v289
    %306 = vst.msk [vmem:[%s3 + $0x30] sm:$0xff] %vm244, %v290
    %307 = vst.msk [vmem:[%s3 + $0x38] sm:$0xff] %vm244, %v291
    %308 = vst.msk [vmem:[%s3 + $0x40] sm:$0xff] %vm244, %v292
    %309 = vst.msk [vmem:[%s3 + $0x48] sm:$0xff] %vm244, %v293
    %310 = vst.msk [vmem:[%s3 + $0x50] sm:$0xff] %vm244, %v294
    %311 = vst.msk [vmem:[%s3 + $0x58] sm:$0xff] %vm244, %v295
    %312 = vst.msk [vmem:[%s3 + $0x60] sm:$0xff] %vm244, %v296
    %313 = vst.msk [vmem:[%s3 + $0x68] sm:$0xff] %vm244, %v297
    %314 = vst.msk [vmem:[%s3 + $0x70] sm:$0xff] %vm244, %v298
    %315 = vst.msk [vmem:[%s3 + $0x78] sm:$0xff] %vm244, %v299
  $region21: #{featnet_forward.40} parent=0 // pred_fallthru
    _
  // Predicated region
  $region22: #{featnet_forward.40} parent=0 // pred_check
    _
  $region23: #{featnet_forward.40} parent=0 // pred_check_branch
    %317 = sbr.rel (0) target = $region25
  $region24: #{featnet_forward.40} parent=0 // pred_region
    _
  $region25: #{featnet_forward.40} parent=0 // pred_fallthru
    _
  // Predicated region
  $region26: #{featnet_forward.40} parent=0 // pred_check
    _
  $region27: #{featnet_forward.40} parent=0 // pred_check_branch
    %319 = sbr.rel (0) target = $region29
  $region28: #{featnet_forward.40} parent=0 // pred_region
    _
  $region29: #{featnet_forward.40} parent=0 // pred_fallthru
    _

// kernel: featnet_forward.41
$region0: #{featnet_forward.41}
  #allocation0 [shape = 'u32[]', space=smem, size = 0x4, offset = 0x4, fixed_abs, tag = 'smem constant byte address 0x4 - core index']
  #allocation1 [shape = 'u32[72,128]{1,0:T(1,128)}', space=vmem, size = 0x9000, scoped, tag = 'internal scratch']
  %s0 = inlined_call_operand.vmem [shape: f32[2,4,4,4,32], index: 0, kind: input, shape index: {}, may-alias: {0,1}]
  %s1 = inlined_call_operand.vmem [shape: f32[2,4,4,4,32], index: 1, kind: input, shape index: {}, may-alias: {0,1}]
  %s2 = inlined_call_operand.hbm [shape: f32[2,4,4,4,32], index: 2, kind: output, shape index: {0}]
  %s3 = inlined_call_operand.hbm [shape: f32[1,1], index: 3, kind: output, shape index: {1}]
  %4 = xla_tuple %s2, %s3
  %s5 = sld [smem:[#allocation0]]
  $region53: #{featnet_forward.41} parent=0
    _
  %s7 = ssub.s32 1, %s5
  %s8 = scalar_select 0, %s7, %s5
  $region1: #{featnet_forward.41} parent=0
    #allocation2 [shape = 'u8[65536]{0}', space=vmem, size = 0x10000, scoped, tag = 'output window, operand 0']
    #allocation3 [shape = 's32[2]{0}', space=sflag, size = 0x8, scoped, tag = 'scoped memory for featnet_forward.41']
    #allocation4 [shape = 's32[2]{0}', space=sflag, size = 0x8, scoped, tag = 'scoped memory for featnet_forward.41']
    #allocation5 [shape = 'u8[512]{0}', space=smem, size = 0x200, scoped, tag = 'output window, operand 1, single buffered']
    %9 = vsyncpa [#allocation3], 0
    %s10 = scalar_lea.sflag [#allocation3], 1
    %11 = vsyncpa %s10, 0
    %12 = vsyncpa [#allocation4], 0
    loop: start=0, step=1, limit=4
    $region2: #{featnet_forward.41} parent=1 // loop_pre_header
      _
    $region3: #{featnet_forward.41} parent=1 // loop_header
      %s14 = sphi 0, %s18
      %p15 = scmp.ge.s32.totalorder %s14, 4
      %s21 = sphi 0, %s33
      %s22 = sphi 0, %s29
      %s23 = sphi 0, %s21
      %s24 = sphi 0, %s22
      %s25 = sphi 0, %s23
      %s26 = sphi 0, %s24
      %s38 = sphi 0, %s40
      %s41 = sphi 0, %s38
      %s42 = sphi 0, %s41
      %s58 = sphi 0, %s42
      %s74 = sphi 0, %s76
      %s77 = sphi 0, %s74
      %s78 = sphi 0, %s77
      %s94 = sphi 0, %s78
      %s102 = sphi 0, %s104
      %s105 = sphi 0, %s102
      %s106 = sphi 0, %s105
      %s122 = sphi 0, %s106
      %s126 = sphi 0, %s126
      %s128 = sphi 0, %s126
      %s129 = sphi 0, %s128
      %s143 = sphi 0, %s129
    $region4: #{featnet_forward.41} parent=1 // loop_header_branch
      %17 = sbr.rel (%p15) target = $region8
    $region5: #{featnet_forward.41} parent=1 // loop_body
      %s19 = ssub.s32 %s14, 1
      %s20 = ssub.s32 %s14, 2
      %s27 = sadd.s32 1, %s22
      %p28 = scmp.ge.s32.totalorder %s27, 1
      %s29 = scalar_select %p28, 0, %s27
      %s30 = sadd.s32 1, %s21
      %s31 = scalar_select %p28, %s30, %s21
      %p32 = scmp.ge.s32.totalorder %s31, 2
      %s33 = scalar_select %p32, 0, %s31
      %s34 = ssub.s32 %s21, %s33
      %s35 = ssub.s32 %s22, %s29
      %s36 = sor.u32 %s34, %s35
      %p37 = scmp.eq.s32.totalorder %s36, 0
      %s39 = sadd.s32 %s38, 1
      %s40 = scalar_select %p37, %s38, %s39
      %p43 = pneg %p37
      %p44 = scmp.eq.s32.totalorder %s14, 1
      %p45 = por %p43, %p44
      %p46 = scmp.ne.s32.totalorder %s38, %s41
      %p47 = scmp.eq.s32.totalorder %s14, 0
      %p48 = por %p46, %p47
      %p49 = scmp.ne.s32.totalorder %s38, %s41
      %p50 = scmp.eq.s32.totalorder %s19, 1
      %p51 = por %p49, %p50
      %p52 = scmp.ne.s32.totalorder %s41, %s42
      %p53 = scmp.eq.s32.totalorder %s19, 0
      %p54 = por %p52, %p53
      %p55 = scmp.ne.s32.totalorder %s41, %s42
      %p56 = scmp.eq.s32.totalorder %s20, 1
      %p57 = por %p55, %p56
      %p59 = scmp.ne.s32.totalorder %s42, %s58
      %p60 = scmp.eq.s32.totalorder %s20, 0
      %p61 = por %p59, %p60
      %s62 = sadd.s32 %s22, 1
      %s63 = smul.u32 %s62, 4
      %p64 = scmp.lt.s32.totalorder %s63, 3
      %s65 = scalar_select %p64, %s63, 3
      %s66 = sadd.s32 %s29, 1
      %s67 = smul.u32 %s66, 4
      %p68 = scmp.lt.s32.totalorder %s67, 3
      %s69 = scalar_select %p68, %s67, 3
      %s70 = ssub.s32 %s21, %s33
      %s71 = ssub.s32 %s65, %s69
      %s72 = sor.u32 %s70, %s71
      %p73 = scmp.eq.s32.totalorder %s72, 0
      %s75 = sadd.s32 %s74, 1
      %s76 = scalar_select %p73, %s74, %s75
      %p79 = pneg %p73
      %p80 = scmp.eq.s32.totalorder %s14, 1
      %p81 = por %p79, %p80
      %p82 = scmp.ne.s32.totalorder %s74, %s77
      %p83 = scmp.eq.s32.totalorder %s14, 0
      %p84 = por %p82, %p83
      %p85 = scmp.ne.s32.totalorder %s74, %s77
      %p86 = scmp.eq.s32.totalorder %s19, 1
      %p87 = por %p85, %p86
      %p88 = scmp.ne.s32.totalorder %s77, %s78
      %p89 = scmp.eq.s32.totalorder %s19, 0
      %p90 = por %p88, %p89
      %p91 = scmp.ne.s32.totalorder %s77, %s78
      %p92 = scmp.eq.s32.totalorder %s20, 1
      %p93 = por %p91, %p92
      %p95 = scmp.ne.s32.totalorder %s78, %s94
      %p96 = scmp.eq.s32.totalorder %s20, 0
      %p97 = por %p95, %p96
      %s98 = ssub.s32 %s21, %s33
      %s99 = ssub.s32 %s22, %s29
      %s100 = sor.u32 %s98, %s99
      %p101 = scmp.eq.s32.totalorder %s100, 0
      %s103 = sadd.s32 %s102, 1
      %s104 = scalar_select %p101, %s102, %s103
      %p107 = pneg %p101
      %p108 = scmp.eq.s32.totalorder %s14, 1
      %p109 = por %p107, %p108
      %p110 = scmp.ne.s32.totalorder %s102, %s105
      %p111 = scmp.eq.s32.totalorder %s14, 0
      %p112 = por %p110, %p111
      %p113 = scmp.ne.s32.totalorder %s102, %s105
      %p114 = scmp.eq.s32.totalorder %s19, 1
      %p115 = por %p113, %p114
      %p116 = scmp.ne.s32.totalorder %s105, %s106
      %p117 = scmp.eq.s32.totalorder %s19, 0
      %p118 = por %p116, %p117
      %p119 = scmp.ne.s32.totalorder %s105, %s106
      %p120 = scmp.eq.s32.totalorder %s20, 1
      %p121 = por %p119, %p120
      %p123 = scmp.ne.s32.totalorder %s106, %s122
      %p124 = scmp.eq.s32.totalorder %s20, 0
      %p125 = por %p123, %p124
      %s127 = sadd.s32 %s126, 1
      %p130 = scmp.eq.s32.totalorder %s14, 1
      %p131 = scmp.ne.s32.totalorder %s126, %s128
      %p132 = scmp.eq.s32.totalorder %s14, 0
      %p133 = por %p131, %p132
      %p134 = scmp.ne.s32.totalorder %s126, %s128
      %p135 = scmp.eq.s32.totalorder %s19, 1
      %p136 = por %p134, %p135
      %p137 = scmp.ne.s32.totalorder %s128, %s129
      %p138 = scmp.eq.s32.totalorder %s19, 0
      %p139 = por %p137, %p138
      %p140 = scmp.ne.s32.totalorder %s128, %s129
      %p141 = scmp.eq.s32.totalorder %s20, 1
      %p142 = por %p140, %p141
      %p144 = scmp.ne.s32.totalorder %s129, %s143
      %p145 = scmp.eq.s32.totalorder %s20, 0
      %p146 = por %p144, %p145
      %p147 = scmp.le.s32.totalorder 1, %s14
      %p148 = scmp.lt.s32.totalorder %s14, 3
      %p149 = pnand %p147, %p148
      %p150 = pneg %p149
      // Predicated region
      $region9: #{featnet_forward.41} parent=5 // pred_check
        _
      $region10: #{featnet_forward.41} parent=5 // pred_check_branch
        %152 = sbr.rel (%p149) target = $region12
      $region11: #{featnet_forward.41} parent=5 // pred_region
        %s153 = ssub.s32 %s14, 1
      $region12: #{featnet_forward.41} parent=5 // pred_fallthru
        _
      %p154 = scmp.lt.s32.totalorder %s14, 2
      // Predicated region
      $region13: #{featnet_forward.41} parent=5 // pred_check
        %p155 = pneg %p154
      $region14: #{featnet_forward.41} parent=5 // pred_check_branch
        %157 = sbr.rel (%p155) target = $region16
      $region15: #{featnet_forward.41} parent=5 // pred_region
        // Predicated region
        $region17: #{featnet_forward.41} parent=15 // pred_check
          %p158 = pneg %p48
        $region18: #{featnet_forward.41} parent=15 // pred_check_branch
          %160 = sbr.rel (%p158) target = $region20
        $region19: #{featnet_forward.41} parent=15 // pred_region
          %s161 = smul.u32 4, %s22
          %p162 = scmp.lt.s32.totalorder %s21, 1
          %s163 = scalar_select %p162, %s21, 1
          %p164 = scmp.lt.s32.totalorder %s161, 3
          %s165 = scalar_select %p164, %s161, 3
          %s166 = smul.addr %s165, 4
          %s167 = smul.addr %s163, 16
          %s168 = sadd.s32 %s166, %s167
          %s169 = smul.addr %s168, 4
          %s170 = scalar_lea.vmem %s0, %s169
          %s171 = smul.u32 4, %s22
        $region20: #{featnet_forward.41} parent=15 // pred_fallthru
          _
        // Predicated region
        $region21: #{featnet_forward.41} parent=15 // pred_check
          %p172 = pneg %p84
        $region22: #{featnet_forward.41} parent=15 // pred_check_branch
          %174 = sbr.rel (%p172) target = $region24
        $region23: #{featnet_forward.41} parent=15 // pred_region
          %s175 = sadd.s32 %s22, 1
          %s176 = smul.u32 %s175, 4
          %p177 = scmp.lt.s32.totalorder %s176, 3
          %s178 = scalar_select %p177, %s176, 3
          %p179 = scmp.lt.s32.totalorder %s21, 1
          %s180 = scalar_select %p179, %s21, 1
          %p181 = scmp.lt.s32.totalorder %s178, 3
          %s182 = scalar_select %p181, %s178, 3
          %s183 = smul.addr %s182, 4
          %s184 = smul.addr %s180, 16
          %s185 = sadd.s32 %s183, %s184
          %s186 = smul.addr %s185, 4
          %s187 = scalar_lea.vmem %s1, %s186
          %s188 = sadd.s32 %s22, 1
          %s189 = smul.u32 %s188, 4
          %p190 = scmp.lt.s32.totalorder %s189, 3
          %s191 = scalar_select %p190, %s189, 3
        $region24: #{featnet_forward.41} parent=15 // pred_fallthru
          _
      $region16: #{featnet_forward.41} parent=5 // pred_fallthru
        _
      %p192 = scmp.le.s32.totalorder 1, %s14
      %p193 = scmp.lt.s32.totalorder %s14, 3
      %p194 = pnand %p192, %p193
      %p195 = pneg %p194
      // Predicated region
      $region25: #{featnet_forward.41} parent=5 // pred_check
        _
      $region26: #{featnet_forward.41} parent=5 // pred_check_branch
        %197 = sbr.rel (%p194) target = $region28
      $region27: #{featnet_forward.41} parent=5 // pred_region
        %s198 = ssub.s32 %s14, 1
        %s199 = smul.u32 4, %s24
        %p200 = scmp.lt.s32.totalorder %s23, 1
        %s201 = scalar_select %p200, %s23, 1
        %p202 = scmp.lt.s32.totalorder %s199, 3
        %s203 = scalar_select %p202, %s199, 3
        %s204 = smul.addr %s203, 4
        %s205 = smul.addr %s201, 16
        %s206 = sadd.s32 %s204, %s205
        %s207 = smul.addr %s206, 4
        %s208 = scalar_lea.vmem %s0, %s207
        %p209 = pneg %p54
        %p210 = pneg %p51
        %s211 = sadd.s32 %s24, 1
        %s212 = smul.u32 %s211, 4
        %p213 = scmp.lt.s32.totalorder %s212, 3
        %s214 = scalar_select %p213, %s212, 3
        %p215 = scmp.lt.s32.totalorder %s23, 1
        %s216 = scalar_select %p215, %s23, 1
        %p217 = scmp.lt.s32.totalorder %s214, 3
        %s218 = scalar_select %p217, %s214, 3
        %s219 = smul.addr %s218, 4
        %s220 = smul.addr %s216, 16
        %s221 = sadd.s32 %s219, %s220
        %s222 = smul.addr %s221, 4
        %s223 = scalar_lea.vmem %s1, %s222
        %p224 = pneg %p90
        %p225 = pneg %p87
        %p226 = pneg %p118
        %p227 = pneg %p115
        %s228 = sand.u32 %s105, 1
        %s229 = scalar_lea.sflag [#allocation3], %s228
        %s230 = sand.u32 %s105, 1
        %s231 = smul.addr %s230, 64
        %s232 = scalar_lea.vmem [#allocation2], %s231
        %p233 = pneg %p139
        %p234 = pneg %p136
        %s235 = smul.u32 4, %s24
        %p236 = scmp.lt.s32.totalorder %s23, 1
        %s237 = scalar_select %p236, %s23, 1
        %p238 = scmp.lt.s32.totalorder %s235, 3
        %s239 = scalar_select %p238, %s235, 3
        %s240 = smul.addr %s239, 4
        %s241 = smul.addr %s237, 16
        %s242 = sadd.s32 %s240, %s241
        %s243 = smul.addr %s242, 4
        %s244 = scalar_lea.vmem %s0, %s243
        %s245 = smul.u32 4, %s24
        %s246 = sadd.s32 %s24, 1
        %s247 = smul.u32 %s246, 4
        %p248 = scmp.lt.s32.totalorder %s247, 3
        %s249 = scalar_select %p248, %s247, 3
        %p250 = scmp.lt.s32.totalorder %s23, 1
        %s251 = scalar_select %p250, %s23, 1
        %p252 = scmp.lt.s32.totalorder %s249, 3
        %s253 = scalar_select %p252, %s249, 3
        %s254 = smul.addr %s253, 4
        %s255 = smul.addr %s251, 16
        %s256 = sadd.s32 %s254, %s255
        %s257 = smul.addr %s256, 4
        %s258 = scalar_lea.vmem %s1, %s257
        %s259 = sadd.s32 %s24, 1
        %s260 = smul.u32 %s259, 4
        %p261 = scmp.lt.s32.totalorder %s260, 3
        %s262 = scalar_select %p261, %s260, 3
        %s263 = smul.u32 4, %s24
        %v264 = vld [vmem:[%s244] sm:$0xf]
        %v265 = vld [vmem:[%s244 + $0x4] sm:$0xf]
        %v266 = vld [vmem:[%s244 + $0x8] sm:$0xf]
        %v267 = vld [vmem:[%s244 + $0xc] sm:$0xf]
        %v268 = vld [vmem:[%s244 + $0x10] sm:$0xf]
        %v269 = vld [vmem:[%s244 + $0x14] sm:$0xf]
        %v270 = vld [vmem:[%s244 + $0x18] sm:$0xf]
        %v271 = vld [vmem:[%s244 + $0x1c] sm:$0xf]
        %v272 = vld [vmem:[%s244 + $0x20] sm:$0xf]
        %v273 = vld [vmem:[%s244 + $0x24] sm:$0xf]
        %v274 = vld [vmem:[%s244 + $0x28] sm:$0xf]
        %v275 = vld [vmem:[%s244 + $0x2c] sm:$0xf]
        %v276 = vld [vmem:[%s244 + $0x30] sm:$0xf]
        %v277 = vld [vmem:[%s244 + $0x34] sm:$0xf]
        %v278 = vld [vmem:[%s244 + $0x38] sm:$0xf]
        %v279 = vld [vmem:[%s244 + $0x3c] sm:$0xf]
        %v280 = vld [vmem:[%s258] sm:$0xf]
        %v281 = vld [vmem:[%s258 + $0x4] sm:$0xf]
        %v282 = vld [vmem:[%s258 + $0x8] sm:$0xf]
        %v283 = vld [vmem:[%s258 + $0xc] sm:$0xf]
        %v284 = vsub.f32 %v268, %v264
        %v285 = vsub.f32 %v269, %v265
        %v286 = vsub.f32 %v270, %v266
        %v287 = vsub.f32 %v271, %v267
        %v288 = vsub.f32 %v272, %v268
        %v289 = vsub.f32 %v273, %v269
        %v290 = vsub.f32 %v274, %v270
        %v291 = vsub.f32 %v275, %v271
        %v292 = vsub.f32 %v276, %v272
        %v293 = vsub.f32 %v277, %v273
        %v294 = vsub.f32 %v278, %v274
        %v295 = vsub.f32 %v279, %v275
        %v296 = vand.u32 2147483647, %v284
        %v297 = vand.u32 2147483647, %v285
        %v298 = vand.u32 2147483647, %v286
        %v299 = vand.u32 2147483647, %v287
        %v300 = vand.u32 2147483647, %v288
        %v301 = vand.u32 2147483647, %v289
        %v302 = vand.u32 2147483647, %v290
        %v303 = vand.u32 2147483647, %v291
        %v304 = vand.u32 2147483647, %v292
        %v305 = vand.u32 2147483647, %v293
        %v306 = vand.u32 2147483647, %v294
        %v307 = vand.u32 2147483647, %v295
        %vm308 = vcmask 257024
        %v309 = vsel %vm308, %v296, 0.0
        %v310 = vsel %vm308, %v297, 0.0
        %v311 = vadd.f32 %v309, %v310
        %v312 = vsel %vm308, %v298, 0.0
        %v313 = vadd.f32 %v311, %v312
        %v314 = vsel %vm308, %v299, 0.0
        %v315 = vadd.f32 %v313, %v314
        %v316 = vsel %vm308, %v300, 0.0
        %v317 = vadd.f32 %v315, %v316
        %v318 = vsel %vm308, %v301, 0.0
        %v319 = vadd.f32 %v317, %v318
        %v320 = vsel %vm308, %v302, 0.0
        %v321 = vadd.f32 %v319, %v320
        %v322 = vsel %vm308, %v303, 0.0
        %v323 = vadd.f32 %v321, %v322
        %v324 = vsel %vm308, %v304, 0.0
        %v325 = vadd.f32 %v323, %v324
        %v326 = vsel %vm308, %v305, 0.0
        %v327 = vadd.f32 %v325, %v326
        %v328 = vsel %vm308, %v306, 0.0
        %v329 = vadd.f32 %v327, %v328
        %v330 = vsel %vm308, %v307, 0.0
        %v331 = vadd.f32 %v329, %v330
        %332 = vadd.xlane.f32.xlu0 %v331
        %v333 = vpop.xlane.xlu0 %332
        %v334 = vrot.slane %v333, 4
        %v335 = vadd.f32 %v333, %v334
        %v336 = vrot.slane %v335, 2
        %v337 = vadd.f32 %v335, %v336
        %v338 = vrot.slane %v337, 1
        %v339 = vadd.f32 %v337, %v338
        %s340 = vtos %v339
        %s341 = sadd.f32 %s340, 0.0
        %v342 = vsub.f32 %v265, %v264
        %v343 = vsub.f32 %v266, %v265
        %v344 = vsub.f32 %v267, %v266
        %v345 = vsub.f32 %v269, %v268
        %v346 = vsub.f32 %v270, %v269
        %v347 = vsub.f32 %v271, %v270
        %v348 = vsub.f32 %v273, %v272
        %v349 = vsub.f32 %v274, %v273
        %v350 = vsub.f32 %v275, %v274
        %v351 = vsub.f32 %v277, %v276
        %v352 = vsub.f32 %v278, %v277
        %v353 = vsub.f32 %v279, %v278
        %v354 = vand.u32 2147483647, %v342
        %v355 = vand.u32 2147483647, %v343
        %v356 = vand.u32 2147483647, %v344
        %v357 = vand.u32 2147483647, %v345
        %v358 = vand.u32 2147483647, %v346
        %v359 = vand.u32 2147483647, %v347
        %v360 = vand.u32 2147483647, %v348
        %v361 = vand.u32 2147483647, %v349
        %v362 = vand.u32 2147483647, %v350
        %v363 = vand.u32 2147483647, %v351
        %v364 = vand.u32 2147483647, %v352
        %v365 = vand.u32 2147483647, %v353
        %v366 = vsel %vm308, %v354, 0.0
        %v367 = vsel %vm308, %v355, 0.0
        %v368 = vadd.f32 %v366, %v367
        %v369 = vsel %vm308, %v356, 0.0
        %v370 = vadd.f32 %v368, %v369
        %v371 = vsel %vm308, %v357, 0.0
        %v372 = vadd.f32 %v370, %v371
        %v373 = vsel %vm308, %v358, 0.0
        %v374 = vadd.f32 %v372, %v373
        %v375 = vsel %vm308, %v359, 0.0
        %v376 = vadd.f32 %v374, %v375
        %v377 = vsel %vm308, %v360, 0.0
        %v378 = vadd.f32 %v376, %v377
        %v379 = vsel %vm308, %v361, 0.0
        %v380 = vadd.f32 %v378, %v379
        %v381 = vsel %vm308, %v362, 0.0
        %v382 = vadd.f32 %v380, %v381
        %v383 = vsel %vm308, %v363, 0.0
        %v384 = vadd.f32 %v382, %v383
        %v385 = vsel %vm308, %v364, 0.0
        %v386 = vadd.f32 %v384, %v385
        %v387 = vsel %vm308, %v365, 0.0
        %v388 = vadd.f32 %v386, %v387
        %389 = vadd.xlane.f32.xlu0 %v388
        %v390 = vpop.xlane.xlu0 %389
        %v391 = vrot.slane %v390, 4
        %v392 = vadd.f32 %v390, %v391
        %v393 = vrot.slane %v392, 2
        %v394 = vadd.f32 %v392, %v393
        %v395 = vrot.slane %v394, 1
        %v396 = vadd.f32 %v394, %v395
        %s397 = vtos %v396
        %s398 = sadd.f32 %s341, %s397
        %v415 = vrot.slane %v264, 7
        %v416 = vrot.slane %v265, 7
        %v417 = vrot.slane %v266, 7
        %v418 = vrot.slane %v267, 7
        %v419 = vrot.slane %v268, 7
        %v420 = vrot.slane %v269, 7
        %v421 = vrot.slane %v270, 7
        %v422 = vrot.slane %v271, 7
        %v423 = vrot.slane %v272, 7
        %v424 = vrot.slane %v273, 7
        %v425 = vrot.slane %v274, 7
        %v426 = vrot.slane %v275, 7
        %v427 = vrot.slane %v276, 7
        %v428 = vrot.slane %v277, 7
        %v429 = vrot.slane %v278, 7
        %v430 = vrot.slane %v279, 7
        %v447 = vsub.f32 %v264, %v415
        %v448 = vsub.f32 %v265, %v416
        %v449 = vsub.f32 %v266, %v417
        %v450 = vsub.f32 %v267, %v418
        %v451 = vsub.f32 %v268, %v419
        %v452 = vsub.f32 %v269, %v420
        %v453 = vsub.f32 %v270, %v421
        %v454 = vsub.f32 %v271, %v422
        %v455 = vsub.f32 %v272, %v423
        %v456 = vsub.f32 %v273, %v424
        %v457 = vsub.f32 %v274, %v425
        %v458 = vsub.f32 %v275, %v426
        %v459 = vsub.f32 %v276, %v427
        %v460 = vsub.f32 %v277, %v428
        %v461 = vsub.f32 %v278, %v429
        %v462 = vsub.f32 %v279, %v430
        %v463 = vand.u32 2147483647, %v447
        %v464 = vand.u32 2147483647, %v448
        %v465 = vand.u32 2147483647, %v449
        %v466 = vand.u32 2147483647, %v450
        %v467 = vand.u32 2147483647, %v451
        %v468 = vand.u32 2147483647, %v452
        %v469 = vand.u32 2147483647, %v453
        %v470 = vand.u32 2147483647, %v454
        %v471 = vand.u32 2147483647, %v455
        %v472 = vand.u32 2147483647, %v456
        %v473 = vand.u32 2147483647, %v457
        %v474 = vand.u32 2147483647, %v458
        %v475 = vand.u32 2147483647, %v459
        %v476 = vand.u32 2147483647, %v460
        %v477 = vand.u32 2147483647, %v461
        %v478 = vand.u32 2147483647, %v462
        %v495 = vrot.slane %v463, 1
        %v496 = vrot.slane %v464, 1
        %v497 = vrot.slane %v465, 1
        %v498 = vrot.slane %v466, 1
        %v499 = vrot.slane %v467, 1
        %v500 = vrot.slane %v468, 1
        %v501 = vrot.slane %v469, 1
        %v502 = vrot.slane %v470, 1
        %v503 = vrot.slane %v471, 1
        %v504 = vrot.slane %v472, 1
        %v505 = vrot.slane %v473, 1
        %v506 = vrot.slane %v474, 1
        %v507 = vrot.slane %v475, 1
        %v508 = vrot.slane %v476, 1
        %v509 = vrot.slane %v477, 1
        %v510 = vrot.slane %v478, 1
        %vm527 = vcmask 256000
        %v528 = vsel %vm527, %v495, 0.0
        %v529 = vsel %vm527, %v496, 0.0
        %v530 = vadd.f32 %v528, %v529
        %v531 = vsel %vm527, %v497, 0.0
        %v532 = vadd.f32 %v530, %v531
        %v533 = vsel %vm527, %v498, 0.0
        %v534 = vadd.f32 %v532, %v533
        %v535 = vsel %vm527, %v499, 0.0
        %v536 = vadd.f32 %v534, %v535
        %v537 = vsel %vm527, %v500, 0.0
        %v538 = vadd.f32 %v536, %v537
        %v539 = vsel %vm527, %v501, 0.0
        %v540 = vadd.f32 %v538, %v539
        %v541 = vsel %vm527, %v502, 0.0
        %v542 = vadd.f32 %v540, %v541
        %v543 = vsel %vm527, %v503, 0.0
        %v544 = vadd.f32 %v542, %v543
        %v545 = vsel %vm527, %v504, 0.0
        %v546 = vadd.f32 %v544, %v545
        %v547 = vsel %vm527, %v505, 0.0
        %v548 = vadd.f32 %v546, %v547
        %v549 = vsel %vm527, %v506, 0.0
        %v550 = vadd.f32 %v548, %v549
        %v551 = vsel %vm527, %v507, 0.0
        %v552 = vadd.f32 %v550, %v551
        %v553 = vsel %vm527, %v508, 0.0
        %v554 = vadd.f32 %v552, %v553
        %v555 = vsel %vm527, %v509, 0.0
        %v556 = vadd.f32 %v554, %v555
        %v557 = vsel %vm527, %v510, 0.0
        %v558 = vadd.f32 %v556, %v557
        %559 = vadd.xlane.f32.xlu0 %v558
        %v560 = vpop.xlane.xlu0 %559
        %v561 = vrot.slane %v560, 4
        %v562 = vadd.f32 %v560, %v561
        %v563 = vrot.slane %v562, 2
        %v564 = vadd.f32 %v562, %v563
        %v565 = vrot.slane %v564, 1
        %v566 = vadd.f32 %v564, %v565
        %s567 = vtos %v566
        %s568 = sadd.f32 %s398, %s567
        %p569 = scmp.ne.s32.totalorder %s24, 0
        %s570 = scalar_select %p569, 1, 0
        %s571 = scvt.s32.f32 %s570
        %v572 = vsub.f32 %v280, %v276
        %v573 = vsub.f32 %v281, %v277
        %v574 = vsub.f32 %v282, %v278
        %v575 = vsub.f32 %v283, %v279
        %v576 = vand.u32 2147483647, %v572
        %v577 = vand.u32 2147483647, %v573
        %v578 = vand.u32 2147483647, %v574
        %v579 = vand.u32 2147483647, %v575
        %v580 = vsel %vm308, %v576, 0.0
        %v581 = vsel %vm308, %v577, 0.0
        %v582 = vadd.f32 %v580, %v581
        %v583 = vsel %vm308, %v578, 0.0
        %v584 = vadd.f32 %v582, %v583
        %v585 = vsel %vm308, %v579, 0.0
        %v586 = vadd.f32 %v584, %v585
        %587 = vadd.xlane.f32.xlu0 %v586
        %v588 = vpop.xlane.xlu0 %587
        %v589 = vrot.slane %v588, 4
        %v590 = vadd.f32 %v588, %v589
        %v591 = vrot.slane %v590, 2
        %v592 = vadd.f32 %v590, %v591
        %v593 = vrot.slane %v592, 1
        %v594 = vadd.f32 %v592, %v593
        %s595 = vtos %v594
        %s596 = smul.f32 %s571, %s595
        %s597 = sadd.f32 %s568, %s596
        %p598 = scmp.eq.s32.totalorder %s23, 0
        %p599 = scmp.eq.s32.totalorder %s24, 0
        %p600 = pnand %p598, %p599
        %p601 = pneg %p600
        // Predicated region
        $region29: #{featnet_forward.41} parent=27 // pred_check
          _
        $region30: #{featnet_forward.41} parent=27 // pred_check_branch
          %603 = sbr.rel (%p600) target = $region32
        $region31: #{featnet_forward.41} parent=27 // pred_region
          %s604 = scalar_lea.smem [#allocation5], 0
          %605 = sst [smem:[%s604]] 0.0
        $region32: #{featnet_forward.41} parent=27 // pred_fallthru
          _
        %s606 = sld [smem:[#allocation5]]
        %s607 = sadd.f32 %s606, %s597
        %s608 = scalar_lea.smem [#allocation5], 0
        %609 = sst [smem:[%s608]] %s607
        %v610 = vmul.f32 %v264, %v264
        %v611 = vmul.f32 %v265, %v265
        %v612 = vmul.f32 %v266, %v266
        %v613 = vmul.f32 %v267, %v267
        %v614 = vmul.f32 %v268, %v268
        %v615 = vmul.f32 %v269, %v269
        %v616 = vmul.f32 %v270, %v270
        %v617 = vmul.f32 %v271, %v271
        %v618 = vmul.f32 %v272, %v272
        %v619 = vmul.f32 %v273, %v273
        %v620 = vmul.f32 %v274, %v274
        %v621 = vmul.f32 %v275, %v275
        %v622 = vmul.f32 %v276, %v276
        %v623 = vmul.f32 %v277, %v277
        %v624 = vmul.f32 %v278, %v278
        %v625 = vmul.f32 %v279, %v279
        %v626 = vsel %vm308, %v610, 0.0
        %627 = vadd.xlane.f32.xlu0 %v626
        %v628 = vpop.xlane.xlu0 %627
        %v629 = vsel %vm308, %v611, 0.0
        %630 = vadd.xlane.f32.xlu0 %v629
        %v631 = vpop.xlane.xlu0 %630
        %v632 = vsel %vm308, %v612, 0.0
        %633 = vadd.xlane.f32.xlu0 %v632
        %v634 = vpop.xlane.xlu0 %633
        %v635 = vsel %vm308, %v613, 0.0
        %636 = vadd.xlane.f32.xlu0 %v635
        %v637 = vpop.xlane.xlu0 %636
        %v638 = vsel %vm308, %v614, 0.0
        %639 = vadd.xlane.f32.xlu0 %v638
        %v640 = vpop.xlane.xlu0 %639
        %v641 = vsel %vm308, %v615, 0.0
        %642 = vadd.xlane.f32.xlu0 %v641
        %v643 = vpop.xlane.xlu0 %642
        %v644 = vsel %vm308, %v616, 0.0
        %645 = vadd.xlane.f32.xlu0 %v644
        %v646 = vpop.xlane.xlu0 %645
        %v647 = vsel %vm308, %v617, 0.0
        %648 = vadd.xlane.f32.xlu0 %v647
        %v649 = vpop.xlane.xlu0 %648
        %v650 = vsel %vm308, %v618, 0.0
        %651 = vadd.xlane.f32.xlu0 %v650
        %v652 = vpop.xlane.xlu0 %651
        %v653 = vsel %vm308, %v619, 0.0
        %654 = vadd.xlane.f32.xlu0 %v653
        %v655 = vpop.xlane.xlu0 %654
        %v656 = vsel %vm308, %v620, 0.0
        %657 = vadd.xlane.f32.xlu0 %v656
        %v658 = vpop.xlane.xlu0 %657
        %v659 = vsel %vm308, %v621, 0.0
        %660 = vadd.xlane.f32.xlu0 %v659
        %v661 = vpop.xlane.xlu0 %660
        %v662 = vsel %vm308, %v622, 0.0
        %663 = vadd.xlane.f32.xlu0 %v662
        %v664 = vpop.xlane.xlu0 %663
        %v665 = vsel %vm308, %v623, 0.0
        %666 = vadd.xlane.f32.xlu0 %v665
        %v667 = vpop.xlane.xlu0 %666
        %v668 = vsel %vm308, %v624, 0.0
        %669 = vadd.xlane.f32.xlu0 %v668
        %v670 = vpop.xlane.xlu0 %669
        %v671 = vsel %vm308, %v625, 0.0
        %672 = vadd.xlane.f32.xlu0 %v671
        %v673 = vpop.xlane.xlu0 %672
        %v674 = vrsqrt.pop %v628
        %v675 = vmul.f32 %v674, %v628
        %v676 = vmul.f32 %v675, %v674
        %v677 = vmul.f32 0.5, %v676
        %v678 = vsub.f32 1.5, %v677
        %v679 = vmul.f32 %v674, %v678
        %v680 = vmul.f32 %v628, %v679
        %vm681 = vcmp.eq.f32.partialorder %v628, inf
        %v682 = vsel %vm681, %v628, %v680
        %vm683 = vcmp.eq.f32.partialorder %v628, 0.0
        %v684 = vand.u32 %v628, 2147483648
        %v685 = vsel %vm683, %v684, %v682
        %v686 = vrsqrt.pop %v631
        %v687 = vmul.f32 %v686, %v631
        %v688 = vmul.f32 %v687, %v686
        %v689 = vmul.f32 0.5, %v688
        %v690 = vsub.f32 1.5, %v689
        %v691 = vmul.f32 %v686, %v690
        %v692 = vmul.f32 %v631, %v691
        %vm693 = vcmp.eq.f32.partialorder %v631, inf
        %v694 = vsel %vm693, %v631, %v692
        %vm695 = vcmp.eq.f32.partialorder %v631, 0.0
        %v696 = vand.u32 %v631, 2147483648
        %v697 = vsel %vm695, %v696, %v694
        %v698 = vrsqrt.pop %v634
        %v699 = vmul.f32 %v698, %v634
        %v700 = vmul.f32 %v699, %v698
        %v701 = vmul.f32 0.5, %v700
        %v702 = vsub.f32 1.5, %v701
        %v703 = vmul.f32 %v698, %v702
        %v704 = vmul.f32 %v634, %v703
        %vm705 = vcmp.eq.f32.partialorder %v634, inf
        %v706 = vsel %vm705, %v634, %v704
        %vm707 = vcmp.eq.f32.partialorder %v634, 0.0
        %v708 = vand.u32 %v634, 2147483648
        %v709 = vsel %vm707, %v708, %v706
        %v710 = vrsqrt.pop %v637
        %v711 = vmul.f32 %v710, %v637
        %v712 = vmul.f32 %v711, %v710
        %v713 = vmul.f32 0.5, %v712
        %v714 = vsub.f32 1.5, %v713
        %v715 = vmul.f32 %v710, %v714
        %v716 = vmul.f32 %v637, %v715
        %vm717 = vcmp.eq.f32.partialorder %v637, inf
        %v718 = vsel %vm717, %v637, %v716
        %vm719 = vcmp.eq.f32.partialorder %v637, 0.0
        %v720 = vand.u32 %v637, 2147483648
        %v721 = vsel %vm719, %v720, %v718
        %v722 = vrsqrt.pop %v640
        %v723 = vmul.f32 %v722, %v640
        %v724 = vmul.f32 %v723, %v722
        %v725 = vmul.f32 0.5, %v724
        %v726 = vsub.f32 1.5, %v725
        %v727 = vmul.f32 %v722, %v726
        %v728 = vmul.f32 %v640, %v727
        %vm729 = vcmp.eq.f32.partialorder %v640, inf
        %v730 = vsel %vm729, %v640, %v728
        %vm731 = vcmp.eq.f32.partialorder %v640, 0.0
        %v732 = vand.u32 %v640, 2147483648
        %v733 = vsel %vm731, %v732, %v730
        %v734 = vrsqrt.pop %v643
        %v735 = vmul.f32 %v734, %v643
        %v736 = vmul.f32 %v735, %v734
        %v737 = vmul.f32 0.5, %v736
        %v738 = vsub.f32 1.5, %v737
        %v739 = vmul.f32 %v734, %v738
        %v740 = vmul.f32 %v643, %v739
        %vm741 = vcmp.eq.f32.partialorder %v643, inf
        %v742 = vsel %vm741, %v643, %v740
        %vm743 = vcmp.eq.f32.partialorder %v643, 0.0
        %v744 = vand.u32 %v643, 2147483648
        %v745 = vsel %vm743, %v744, %v742
        %v746 = vrsqrt.pop %v646
        %v747 = vmul.f32 %v746, %v646
        %v748 = vmul.f32 %v747, %v746
        %v749 = vmul.f32 0.5, %v748
        %v750 = vsub.f32 1.5, %v749
        %v751 = vmul.f32 %v746, %v750
        %v752 = vmul.f32 %v646, %v751
        %vm753 = vcmp.eq.f32.partialorder %v646, inf
        %v754 = vsel %vm753, %v646, %v752
        %vm755 = vcmp.eq.f32.partialorder %v646, 0.0
        %v756 = vand.u32 %v646, 2147483648
        %v757 = vsel %vm755, %v756, %v754
        %v758 = vrsqrt.pop %v649
        %v759 = vmul.f32 %v758, %v649
        %v760 = vmul.f32 %v759, %v758
        %v761 = vmul.f32 0.5, %v760
        %v762 = vsub.f32 1.5, %v761
        %v763 = vmul.f32 %v758, %v762
        %v764 = vmul.f32 %v649, %v763
        %vm765 = vcmp.eq.f32.partialorder %v649, inf
        %v766 = vsel %vm765, %v649, %v764
        %vm767 = vcmp.eq.f32.partialorder %v649, 0.0
        %v768 = vand.u32 %v649, 2147483648
        %v769 = vsel %vm767, %v768, %v766
        %v770 = vrsqrt.pop %v652
        %v771 = vmul.f32 %v770, %v652
        %v772 = vmul.f32 %v771, %v770
        %v773 = vmul.f32 0.5, %v772
        %v774 = vsub.f32 1.5, %v773
        %v775 = vmul.f32 %v770, %v774
        %v776 = vmul.f32 %v652, %v775
        %vm777 = vcmp.eq.f32.partialorder %v652, inf
        %v778 = vsel %vm777, %v652, %v776
        %vm779 = vcmp.eq.f32.partialorder %v652, 0.0
        %v780 = vand.u32 %v652, 2147483648
        %v781 = vsel %vm779, %v780, %v778
        %v782 = vrsqrt.pop %v655
        %v783 = vmul.f32 %v782, %v655
        %v784 = vmul.f32 %v783, %v782
        %v785 = vmul.f32 0.5, %v784
        %v786 = vsub.f32 1.5, %v785
        %v787 = vmul.f32 %v782, %v786
        %v788 = vmul.f32 %v655, %v787
        %vm789 = vcmp.eq.f32.partialorder %v655, inf
        %v790 = vsel %vm789, %v655, %v788
        %vm791 = vcmp.eq.f32.partialorder %v655, 0.0
        %v792 = vand.u32 %v655, 2147483648
        %v793 = vsel %vm791, %v792, %v790
        %v794 = vrsqrt.pop %v658
        %v795 = vmul.f32 %v794, %v658
        %v796 = vmul.f32 %v795, %v794
        %v797 = vmul.f32 0.5, %v796
        %v798 = vsub.f32 1.5, %v797
        %v799 = vmul.f32 %v794, %v798
        %v800 = vmul.f32 %v658, %v799
        %vm801 = vcmp.eq.f32.partialorder %v658, inf
        %v802 = vsel %vm801, %v658, %v800
        %vm803 = vcmp.eq.f32.partialorder %v658, 0.0
        %v804 = vand.u32 %v658, 2147483648
        %v805 = vsel %vm803, %v804, %v802
        %v806 = vrsqrt.pop %v661
        %v807 = vmul.f32 %v806, %v661
        %v808 = vmul.f32 %v807, %v806
        %v809 = vmul.f32 0.5, %v808
        %v810 = vsub.f32 1.5, %v809
        %v811 = vmul.f32 %v806, %v810
        %v812 = vmul.f32 %v661, %v811
        %vm813 = vcmp.eq.f32.partialorder %v661, inf
        %v814 = vsel %vm813, %v661, %v812
        %vm815 = vcmp.eq.f32.partialorder %v661, 0.0
        %v816 = vand.u32 %v661, 2147483648
        %v817 = vsel %vm815, %v816, %v814
        %v818 = vrsqrt.pop %v664
        %v819 = vmul.f32 %v818, %v664
        %v820 = vmul.f32 %v819, %v818
        %v821 = vmul.f32 0.5, %v820
        %v822 = vsub.f32 1.5, %v821
        %v823 = vmul.f32 %v818, %v822
        %v824 = vmul.f32 %v664, %v823
        %vm825 = vcmp.eq.f32.partialorder %v664, inf
        %v826 = vsel %vm825, %v664, %v824
        %vm827 = vcmp.eq.f32.partialorder %v664, 0.0
        %v828 = vand.u32 %v664, 2147483648
        %v829 = vsel %vm827, %v828, %v826
        %v830 = vrsqrt.pop %v667
        %v831 = vmul.f32 %v830, %v667
        %v832 = vmul.f32 %v831, %v830
        %v833 = vmul.f32 0.5, %v832
        %v834 = vsub.f32 1.5, %v833
        %v835 = vmul.f32 %v830, %v834
        %v836 = vmul.f32 %v667, %v835
        %vm837 = vcmp.eq.f32.partialorder %v667, inf
        %v838 = vsel %vm837, %v667, %v836
        %vm839 = vcmp.eq.f32.partialorder %v667, 0.0
        %v840 = vand.u32 %v667, 2147483648
        %v841 = vsel %vm839, %v840, %v838
        %v842 = vrsqrt.pop %v670
        %v843 = vmul.f32 %v842, %v670
        %v844 = vmul.f32 %v843, %v842
        %v845 = vmul.f32 0.5, %v844
        %v846 = vsub.f32 1.5, %v845
        %v847 = vmul.f32 %v842, %v846
        %v848 = vmul.f32 %v670, %v847
        %vm849 = vcmp.eq.f32.partialorder %v670, inf
        %v850 = vsel %vm849, %v670, %v848
        %vm851 = vcmp.eq.f32.partialorder %v670, 0.0
        %v852 = vand.u32 %v670, 2147483648
        %v853 = vsel %vm851, %v852, %v850
        %v854 = vrsqrt.pop %v673
        %v855 = vmul.f32 %v854, %v673
        %v856 = vmul.f32 %v855, %v854
        %v857 = vmul.f32 0.5, %v856
        %v858 = vsub.f32 1.5, %v857
        %v859 = vmul.f32 %v854, %v858
        %v860 = vmul.f32 %v673, %v859
        %vm861 = vcmp.eq.f32.partialorder %v673, inf
        %v862 = vsel %vm861, %v673, %v860
        %vm863 = vcmp.eq.f32.partialorder %v673, 0.0
        %v864 = vand.u32 %v673, 2147483648
        %v865 = vsel %vm863, %v864, %v862
        %v866 = vmax.f32 %v685, 1e-12
        %v867 = vmax.f32 %v697, 1e-12
        %v868 = vmax.f32 %v709, 1e-12
        %v869 = vmax.f32 %v721, 1e-12
        %v870 = vmax.f32 %v733, 1e-12
        %v871 = vmax.f32 %v745, 1e-12
        %v872 = vmax.f32 %v757, 1e-12
        %v873 = vmax.f32 %v769, 1e-12
        %v874 = vmax.f32 %v781, 1e-12
        %v875 = vmax.f32 %v793, 1e-12
        %v876 = vmax.f32 %v805, 1e-12
        %v877 = vmax.f32 %v817, 1e-12
        %v878 = vmax.f32 %v829, 1e-12
        %v879 = vmax.f32 %v841, 1e-12
        %v880 = vmax.f32 %v853, 1e-12
        %v881 = vmax.f32 %v865, 1e-12
        %v882 = vrcp.pop %v866
        %v883 = vmul.f32 %v866, %v882
        %v884 = vsub.f32 1.0, %v883
        %v885 = vmul.f32 %v882, %v884
        %v886 = vadd.f32 %v882, %v885
        %vm887 = vweird.f32 %v866
        %vm888 = vweird.f32 %v882
        %vm889 = vmor %vm887, %vm888
        %v890 = vsel %vm889, %v882, %v886
        %v891 = vand.u32 2147483647, %v866
        %vm892 = vcmp.eq.f32.partialorder %v891, 8.507059e+37
        %v893 = vand.u32 %v866, 2147483648
        %v894 = vor.u32 1.1754944e-38, %v893
        %v895 = vsel %vm892, %v894, %v890
        %v896 = vmul.f32 %v264, %v895
        %v897 = vrcp.pop %v867
        %v898 = vmul.f32 %v867, %v897
        %v899 = vsub.f32 1.0, %v898
        %v900 = vmul.f32 %v897, %v899
        %v901 = vadd.f32 %v897, %v900
        %vm902 = vweird.f32 %v867
        %vm903 = vweird.f32 %v897
        %vm904 = vmor %vm902, %vm903
        %v905 = vsel %vm904, %v897, %v901
        %v906 = vand.u32 2147483647, %v867
        %vm907 = vcmp.eq.f32.partialorder %v906, 8.507059e+37
        %v908 = vand.u32 %v867, 2147483648
        %v909 = vor.u32 1.1754944e-38, %v908
        %v910 = vsel %vm907, %v909, %v905
        %v911 = vmul.f32 %v265, %v910
        %v912 = vrcp.pop %v868
        %v913 = vmul.f32 %v868, %v912
        %v914 = vsub.f32 1.0, %v913
        %v915 = vmul.f32 %v912, %v914
        %v916 = vadd.f32 %v912, %v915
        %vm917 = vweird.f32 %v868
        %vm918 = vweird.f32 %v912
        %vm919 = vmor %vm917, %vm918
        %v920 = vsel %vm919, %v912, %v916
        %v921 = vand.u32 2147483647, %v868
        %vm922 = vcmp.eq.f32.partialorder %v921, 8.507059e+37
        %v923 = vand.u32 %v868, 2147483648
        %v924 = vor.u32 1.1754944e-38, %v923
        %v925 = vsel %vm922, %v924, %v920
        %v926 = vmul.f32 %v266, %v925
        %v927 = vrcp.pop %v869
        %v928 = vmul.f32 %v869, %v927
        %v929 = vsub.f32 1.0, %v928
        %v930 = vmul.f32 %v927, %v929
        %v931 = vadd.f32 %v927, %v930
        %vm932 = vweird.f32 %v869
        %vm933 = vweird.f32 %v927
        %vm934 = vmor %vm932, %vm933
        %v935 = vsel %vm934, %v927, %v931
        %v936 = vand.u32 2147483647, %v869
        %vm937 = vcmp.eq.f32.partialorder %v936, 8.507059e+37
        %v938 = vand.u32 %v869, 2147483648
        %v939 = vor.u32 1.1754944e-38, %v938
        %v940 = vsel %vm937, %v939, %v935
        %v941 = vmul.f32 %v267, %v940
        %v942 = vrcp.pop %v870
        %v943 = vmul.f32 %v870, %v942
        %v944 = vsub.f32 1.0, %v943
        %v945 = vmul.f32 %v942, %v944
        %v946 = vadd.f32 %v942, %v945
        %vm947 = vweird.f32 %v870
        %vm948 = vweird.f32 %v942
        %vm949 = vmor %vm947, %vm948
        %v950 = vsel %vm949, %v942, %v946
        %v951 = vand.u32 2147483647, %v870
        %vm952 = vcmp.eq.f32.partialorder %v951, 8.507059e+37
        %v953 = vand.u32 %v870, 2147483648
        %v954 = vor.u32 1.1754944e-38, %v953
        %v955 = vsel %vm952, %v954, %v950
        %v956 = vmul.f32 %v268, %v955
        %v957 = vrcp.pop %v871
        %v958 = vmul.f32 %v871, %v957
        %v959 = vsub.f32 1.0, %v958
        %v960 = vmul.f32 %v957, %v959
        %v961 = vadd.f32 %v957, %v960
        %vm962 = vweird.f32 %v871
        %vm963 = vweird.f32 %v957
        %vm964 = vmor %vm962, %vm963
        %v965 = vsel %vm964, %v957, %v961
        %v966 = vand.u32 2147483647, %v871
        %vm967 = vcmp.eq.f32.partialorder %v966, 8.507059e+37
        %v968 = vand.u32 %v871, 2147483648
        %v969 = vor.u32 1.1754944e-38, %v968
        %v970 = vsel %vm967, %v969, %v965
        %v971 = vmul.f32 %v269, %v970
        %v972 = vrcp.pop %v872
        %v973 = vmul.f32 %v872, %v972
        %v974 = vsub.f32 1.0, %v973
        %v975 = vmul.f32 %v972, %v974
        %v976 = vadd.f32 %v972, %v975
        %vm977 = vweird.f32 %v872
        %vm978 = vweird.f32 %v972
        %vm979 = vmor %vm977, %vm978
        %v980 = vsel %vm979, %v972, %v976
        %v981 = vand.u32 2147483647, %v872
        %vm982 = vcmp.eq.f32.partialorder %v981, 8.507059e+37
        %v983 = vand.u32 %v872, 2147483648
        %v984 = vor.u32 1.1754944e-38, %v983
        %v985 = vsel %vm982, %v984, %v980
        %v986 = vmul.f32 %v270, %v985
        %v987 = vrcp.pop %v873
        %v988 = vmul.f32 %v873, %v987
        %v989 = vsub.f32 1.0, %v988
        %v990 = vmul.f32 %v987, %v989
        %v991 = vadd.f32 %v987, %v990
        %vm992 = vweird.f32 %v873
        %vm993 = vweird.f32 %v987
        %vm994 = vmor %vm992, %vm993
        %v995 = vsel %vm994, %v987, %v991
        %v996 = vand.u32 2147483647, %v873
        %vm997 = vcmp.eq.f32.partialorder %v996, 8.507059e+37
        %v998 = vand.u32 %v873, 2147483648
        %v999 = vor.u32 1.1754944e-38, %v998
        %v1000 = vsel %vm997, %v999, %v995
        %v1001 = vmul.f32 %v271, %v1000
        %v1002 = vrcp.pop %v874
        %v1003 = vmul.f32 %v874, %v1002
        %v1004 = vsub.f32 1.0, %v1003
        %v1005 = vmul.f32 %v1002, %v1004
        %v1006 = vadd.f32 %v1002, %v1005
        %vm1007 = vweird.f32 %v874
        %vm1008 = vweird.f32 %v1002
        %vm1009 = vmor %vm1007, %vm1008
        %v1010 = vsel %vm1009, %v1002, %v1006
        %v1011 = vand.u32 2147483647, %v874
        %vm1012 = vcmp.eq.f32.partialorder %v1011, 8.507059e+37
        %v1013 = vand.u32 %v874, 2147483648
        %v1014 = vor.u32 1.1754944e-38, %v1013
        %v1015 = vsel %vm1012, %v1014, %v1010
        %v1016 = vmul.f32 %v272, %v1015
        %v1017 = vrcp.pop %v875
        %v1018 = vmul.f32 %v875, %v1017
        %v1019 = vsub.f32 1.0, %v1018
        %v1020 = vmul.f32 %v1017, %v1019
        %v1021 = vadd.f32 %v1017, %v1020
        %vm1022 = vweird.f32 %v875
        %vm1023 = vweird.f32 %v1017
        %vm1024 = vmor %vm1022, %vm1023
        %v1025 = vsel %vm1024, %v1017, %v1021
        %v1026 = vand.u32 2147483647, %v875
        %vm1027 = vcmp.eq.f32.partialorder %v1026, 8.507059e+37
        %v1028 = vand.u32 %v875, 2147483648
        %v1029 = vor.u32 1.1754944e-38, %v1028
        %v1030 = vsel %vm1027, %v1029, %v1025
        %v1031 = vmul.f32 %v273, %v1030
        %v1032 = vrcp.pop %v876
        %v1033 = vmul.f32 %v876, %v1032
        %v1034 = vsub.f32 1.0, %v1033
        %v1035 = vmul.f32 %v1032, %v1034
        %v1036 = vadd.f32 %v1032, %v1035
        %vm1037 = vweird.f32 %v876
        %vm1038 = vweird.f32 %v1032
        %vm1039 = vmor %vm1037, %vm1038
        %v1040 = vsel %vm1039, %v1032, %v1036
        %v1041 = vand.u32 2147483647, %v876
        %vm1042 = vcmp.eq.f32.partialorder %v1041, 8.507059e+37
        %v1043 = vand.u32 %v876, 2147483648
        %v1044 = vor.u32 1.1754944e-38, %v1043
        %v1045 = vsel %vm1042, %v1044, %v1040
        %v1046 = vmul.f32 %v274, %v1045
        %v1047 = vrcp.pop %v877
        %v1048 = vmul.f32 %v877, %v1047
        %v1049 = vsub.f32 1.0, %v1048
        %v1050 = vmul.f32 %v1047, %v1049
        %v1051 = vadd.f32 %v1047, %v1050
        %vm1052 = vweird.f32 %v877
        %vm1053 = vweird.f32 %v1047
        %vm1054 = vmor %vm1052, %vm1053
        %v1055 = vsel %vm1054, %v1047, %v1051
        %v1056 = vand.u32 2147483647, %v877
        %vm1057 = vcmp.eq.f32.partialorder %v1056, 8.507059e+37
        %v1058 = vand.u32 %v877, 2147483648
        %v1059 = vor.u32 1.1754944e-38, %v1058
        %v1060 = vsel %vm1057, %v1059, %v1055
        %v1061 = vmul.f32 %v275, %v1060
        %v1062 = vrcp.pop %v878
        %v1063 = vmul.f32 %v878, %v1062
        %v1064 = vsub.f32 1.0, %v1063
        %v1065 = vmul.f32 %v1062, %v1064
        %v1066 = vadd.f32 %v1062, %v1065
        %vm1067 = vweird.f32 %v878
        %vm1068 = vweird.f32 %v1062
        %vm1069 = vmor %vm1067, %vm1068
        %v1070 = vsel %vm1069, %v1062, %v1066
        %v1071 = vand.u32 2147483647, %v878
        %vm1072 = vcmp.eq.f32.partialorder %v1071, 8.507059e+37
        %v1073 = vand.u32 %v878, 2147483648
        %v1074 = vor.u32 1.1754944e-38, %v1073
        %v1075 = vsel %vm1072, %v1074, %v1070
        %v1076 = vmul.f32 %v276, %v1075
        %v1077 = vrcp.pop %v879
        %v1078 = vmul.f32 %v879, %v1077
        %v1079 = vsub.f32 1.0, %v1078
        %v1080 = vmul.f32 %v1077, %v1079
        %v1081 = vadd.f32 %v1077, %v1080
        %vm1082 = vweird.f32 %v879
        %vm1083 = vweird.f32 %v1077
        %vm1084 = vmor %vm1082, %vm1083
        %v1085 = vsel %vm1084, %v1077, %v1081
        %v1086 = vand.u32 2147483647, %v879
        %vm1087 = vcmp.eq.f32.partialorder %v1086, 8.507059e+37
        %v1088 = vand.u32 %v879, 2147483648
        %v1089 = vor.u32 1.1754944e-38, %v1088
        %v1090 = vsel %vm1087, %v1089, %v1085
        %v1091 = vmul.f32 %v277, %v1090
        %v1092 = vrcp.pop %v880
        %v1093 = vmul.f32 %v880, %v1092
        %v1094 = vsub.f32 1.0, %v1093
        %v1095 = vmul.f32 %v1092, %v1094
        %v1096 = vadd.f32 %v1092, %v1095
        %vm1097 = vweird.f32 %v880
        %vm1098 = vweird.f32 %v1092
        %vm1099 = vmor %vm1097, %vm1098
        %v1100 = vsel %vm1099, %v1092, %v1096
        %v1101 = vand.u32 2147483647, %v880
        %vm1102 = vcmp.eq.f32.partialorder %v1101, 8.507059e+37
        %v1103 = vand.u32 %v880, 2147483648
        %v1104 = vor.u32 1.1754944e-38, %v1103
        %v1105 = vsel %vm1102, %v1104, %v1100
        %v1106 = vmul.f32 %v278, %v1105
        %v1107 = vrcp.pop %v881
        %v1108 = vmul.f32 %v881, %v1107
        %v1109 = vsub.f32 1.0, %v1108
        %v1110 = vmul.f32 %v1107, %v1109
        %v1111 = vadd.f32 %v1107, %v1110
        %vm1112 = vweird.f32 %v881
        %vm1113 = vweird.f32 %v1107
        %vm1114 = vmor %vm1112, %vm1113
        %v1115 = vsel %vm1114, %v1107, %v1111
        %v1116 = vand.u32 2147483647, %v881
        %vm1117 = vcmp.eq.f32.partialorder %v1116, 8.507059e+37
        %v1118 = vand.u32 %v881, 2147483648
        %v1119 = vor.u32 1.1754944e-38, %v1118
        %v1120 = vsel %vm1117, %v1119, %v1115
        %v1121 = vmul.f32 %v279, %v1120
        %1122 = vst.msk [vmem:[%s232] sm:$0xf] %vm308, %v896
        %1123 = vst.msk [vmem:[%s232 + $0x4] sm:$0xf] %vm308, %v911
        %1124 = vst.msk [vmem:[%s232 + $0x8] sm:$0xf] %vm308, %v926
        %1125 = vst.msk [vmem:[%s232 + $0xc] sm:$0xf] %vm308, %v941
        %1126 = vst.msk [vmem:[%s232 + $0x10] sm:$0xf] %vm308, %v956
        %1127 = vst.msk [vmem:[%s232 + $0x14] sm:$0xf] %vm308, %v971
        %1128 = vst.msk [vmem:[%s232 + $0x18] sm:$0xf] %vm308, %v986
        %1129 = vst.msk [vmem:[%s232 + $0x1c] sm:$0xf] %vm308, %v1001
        %1130 = vst.msk [vmem:[%s232 + $0x20] sm:$0xf] %vm308, %v1016
        %1131 = vst.msk [vmem:[%s232 + $0x24] sm:$0xf] %vm308, %v1031
        %1132 = vst.msk [vmem:[%s232 + $0x28] sm:$0xf] %vm308, %v1046
        %1133 = vst.msk [vmem:[%s232 + $0x2c] sm:$0xf] %vm308, %v1061
        %1134 = vst.msk [vmem:[%s232 + $0x30] sm:$0xf] %vm308, %v1076
        %1135 = vst.msk [vmem:[%s232 + $0x34] sm:$0xf] %vm308, %v1091
        %1136 = vst.msk [vmem:[%s232 + $0x38] sm:$0xf] %vm308, %v1106
        %1137 = vst.msk [vmem:[%s232 + $0x3c] sm:$0xf] %vm308, %v1121
        %s1138 = sand.u32 %s105, 1
        %s1139 = scalar_lea.sflag [#allocation3], %s1138
        %s1140 = sand.u32 %s105, 1
        %s1141 = smul.addr %s1140, 64
        %s1142 = scalar_lea.vmem [#allocation2], %s1141
        // Predicated region
        $region33: #{featnet_forward.41} parent=27 // pred_check
          %p1143 = pneg %p115
        $region34: #{featnet_forward.41} parent=27 // pred_check_branch
          %1145 = sbr.rel (%p1143) target = $region36
        $region35: #{featnet_forward.41} parent=27 // pred_region
          %s1146 = smul.u32 4, %s24
          %1148 = vsyncadd %s1139, 0
          %s1149 = smul.addr %s1146, 4
          %s1150 = smul.addr %s23, 16
          %s1151 = sadd.s32 %s1149, %s1150
          %s1152 = smul.addr %s1151, 4
          %s1153 = scalar_lea.hbm %s2, %s1152
          %s1154 = sshll.u32 %s1142, 4
          %s1155 = int_to_ptr.vmem [resolvable:$true] %s1154
          %s1156 = sshll.u32 %s1153, 4
          %s1157 = int_to_ptr.hbm [resolvable:$true] %s1156
          %1162 = dma.vmem_to_hbm [thread:$0]  %s1155, 1024, %s1157, %s1139, 64, 64, 4
        $region36: #{featnet_forward.41} parent=27 // pred_fallthru
          _
        // Predicated region
        $region37: #{featnet_forward.41} parent=27 // pred_check
          %p1163 = pneg %p136
        $region38: #{featnet_forward.41} parent=27 // pred_check_branch
          %1165 = sbr.rel (%p1163) target = $region40
        $region39: #{featnet_forward.41} parent=27 // pred_region
          %1167 = vsyncadd [#allocation4], 0
          %s1169 = sshll.u32 %s3, 4
          %s1170 = int_to_ptr.hbm [resolvable:$true] %s1169
          %1172 = dma.smem_to_hbm [#allocation5], 16, %s1170, [#allocation4]
        $region40: #{featnet_forward.41} parent=27 // pred_fallthru
          _
        // Predicated region
        $region41: #{featnet_forward.41} parent=27 // pred_check
          %p1173 = pneg %p136
        $region42: #{featnet_forward.41} parent=27 // pred_check_branch
          %1175 = sbr.rel (%p1173) target = $region44
        $region43: #{featnet_forward.41} parent=27 // pred_region
          %1177 = dma.done [#allocation4], 16
        $region44: #{featnet_forward.41} parent=27 // pred_fallthru
          _
        %1178 = sfence
      $region28: #{featnet_forward.41} parent=5 // pred_fallthru
        _
      %p1179 = scmp.le.s32.totalorder 2, %s14
      // Predicated region
      $region45: #{featnet_forward.41} parent=5 // pred_check
        %p1180 = pneg %p1179
      $region46: #{featnet_forward.41} parent=5 // pred_check_branch
        %1182 = sbr.rel (%p1180) target = $region48
      $region47: #{featnet_forward.41} parent=5 // pred_region
        %s1183 = ssub.s32 %s14, 2
        // Predicated region
        $region49: #{featnet_forward.41} parent=47 // pred_check
          %p1184 = pneg %p121
        $region50: #{featnet_forward.41} parent=47 // pred_check_branch
          %1186 = sbr.rel (%p1184) target = $region52
        $region51: #{featnet_forward.41} parent=47 // pred_region
          %s1187 = sand.u32 %s106, 1
          %s1188 = scalar_lea.sflag [#allocation3], %s1187
          %s1189 = sand.u32 %s106, 1
          %s1190 = smul.addr %s1189, 64
          %s1191 = scalar_lea.vmem [#allocation2], %s1190
          %1193 = dma.done %s1188, 1024
        $region52: #{featnet_forward.41} parent=47 // pred_fallthru
          _
      $region48: #{featnet_forward.41} parent=5 // pred_fallthru
        _
    $region6: #{featnet_forward.41} parent=1 // loop_footer
      %s18 = sadd.s32 1, %s14
    $region7: #{featnet_forward.41} parent=1 // loop_footer_branch
      %13 = sbr.rel target = $region3
    $region8: #{featnet_forward.41} parent=1 // loop_exit
      _
    %1194 = vsyncpa [#allocation3], 1
    %s1195 = scalar_lea.sflag [#allocation3], 1
    %1196 = vsyncpa %s1195, 1
    %1197 = vsyncpa [#allocation4], 1
    %s1198 = scalar_lea.sflag [#allocation4], 1
    %1199 = vsyncpa %s1198, 1

</llo_original>
